<compile_context>
chip_gen: v6e
topology: v6e:2x2x1
jax: 0.10.0
libtpu: 0.0.40
codegen_flags: <defaults>
</compile_context>

<pallas_src>
import jax
import jax.numpy as jnp
from jax.experimental import pallas as pl
from jax.experimental.pallas import tpu as pltpu

HIDDEN = 128            # nn default hidden_size
NOISE_DIM = 64
OBS_DIM = 8 * 2 * 2     # 32
N1, N2, N3, N4 = 512, 1024, 1024, 1

# Shared kernel-input feature layout: wrapper column order MUST equal fold row order.
# Defined once so the two sides cannot silently diverge.
FEATURE_LAYOUT = (
    ("noise", NOISE_DIM),
    ("obs", OBS_DIM),
    ("params", 1),
    ("scale", 1),
    ("bias", 1),          # constant 1.0 column -> layer-1 bias folded into w1
)
FEAT_TOTAL = sum(n for _, n in FEATURE_LAYOUT)   # 99
K_IN = 128                                       # zero-padded MXU K dimension
assert FEAT_TOTAL <= K_IN


def _round_up(x, m):
    return (x + m - 1) // m * m


def _mish_ref(x):
    # Reference mish: x * tanh(softplus(x)), stable softplus. Pure JAX / f32.
    sp = jnp.maximum(x, 0.0) + jnp.log(1.0 + jnp.exp(-jnp.abs(x)))
    return x * jnp.tanh(sp)


def _mish_kernel(x):
    # In-kernel mish: tanh(softplus(x)) == 1 - 2/((1+e^x)^2 + 1).
    # One EUP exp + one approx reciprocal (separate EUP slot), no log/tanh pushes.
    # Overflow-safe: e^x -> inf gives d -> inf, recip -> 0, mish -> x.
    n = 1.0 + jnp.exp(x)
    d = n * n + 1.0
    return x * (1.0 - 2.0 * pl.reciprocal(d, approx=True))


def generator_kernel(xin_ref, w1_ref, w2_ref, w3_ref, smalls_ref, out_ref):
    # Small-operand pack: row0=b2, row1=b3, row2=w4^T, row3[0]=b4.
    b2 = smalls_ref[0:1, :]
    b3 = smalls_ref[1:2, :]
    w4_row = smalls_ref[2:3, :]
    b4 = smalls_ref[3:4, 0:1]

    # Layer 1: embeddings + concat + Linear(4H->512) + its bias all pre-folded into w1.
    x = jnp.dot(xin_ref[...], w1_ref[...], preferred_element_type=jnp.float32)
    x = _mish_kernel(x)
    x = jnp.dot(x.astype(jnp.bfloat16), w2_ref[...],
                preferred_element_type=jnp.float32) + b2
    x = _mish_kernel(x)
    x = jnp.dot(x.astype(jnp.bfloat16), w3_ref[...],
                preferred_element_type=jnp.float32) + b3
    x = _mish_kernel(x)
    # Final Linear(1024 -> 1): VPU multiply + lane reduction, kept in f32.
    out_ref[...] = jnp.sum(x * w4_row, axis=-1, keepdims=True) + b4


def init_params(key, hidden=HIDDEN):
    """Synthetic torch-layout-equivalent params; weights stored (in, out), biases (1, out)."""
    dims = [
        ("wn", (NOISE_DIM, hidden)), ("bn", (1, hidden)),
        ("wp", (1, hidden)),         ("bp", (1, hidden)),
        ("wo", (OBS_DIM, hidden)),   ("bo", (1, hidden)),
        ("ws", (1, hidden)),         ("bsc", (1, hidden)),
        ("w1", (4 * hidden, N1)),    ("b1", (1, N1)),
        ("w2", (N1, N2)),            ("b2", (1, N2)),
        ("w3", (N2, N3)),            ("b3", (1, N3)),
        ("w4", (N3, N4)),            ("b4", (1, N4)),
    ]
    params = {}
    for name, shape in dims:
        key, sub = jax.random.split(key)
        params[name] = (0.05 * jax.random.normal(sub, shape)).astype(jnp.float32)
    return params


def fold_weights_for_kernel(w, hidden=HIDDEN):
    """One-time offline transform:
       * fold the 4 embedding Linears + concat + layer-1 bias into one (128,512) bf16 matrix,
       * cast the two big matrices to bf16,
       * pack b2/b3/w4^T/b4 into a single (4,1024) f32 array."""
    H = hidden
    w1 = w["w1"]                               # (4H, 512); torch concat order: noise|param|obs|scale
    eff = {
        "noise":  w["wn"] @ w1[0 * H:1 * H],   # (64, 512)
        "params": w["wp"] @ w1[1 * H:2 * H],   # (1, 512)
        "obs":    w["wo"] @ w1[2 * H:3 * H],   # (32, 512)
        "scale":  w["ws"] @ w1[3 * H:4 * H],   # (1, 512)
        "bias": (w["bn"] @ w1[0 * H:1 * H] + w["bp"] @ w1[1 * H:2 * H]
                 + w["bo"] @ w1[2 * H:3 * H] + w["bsc"] @ w1[3 * H:4 * H]
                 + w["b1"]),                   # (1, 512) -> multiplied by the constant-1 column
    }
    # Row order taken from the shared FEATURE_LAYOUT so it cannot drift from the wrapper.
    w_in = jnp.concatenate([eff[name] for name, _ in FEATURE_LAYOUT], axis=0)   # (99, 512)
    assert w_in.shape[0] == FEAT_TOTAL
    w_in = jnp.pad(w_in, ((0, K_IN - FEAT_TOTAL), (0, 0)))                      # (128, 512)

    smalls = jnp.zeros((4, N2), jnp.float32)
    smalls = smalls.at[0, :].set(w["b2"][0])          # b2 (1024,)
    smalls = smalls.at[1, :].set(w["b3"][0])          # b3 (1024,)
    smalls = smalls.at[2, :].set(w["w4"][:, 0])       # w4 transposed to a row (1024,)
    smalls = smalls.at[3, 0].set(w["b4"][0, 0])       # b4 scalar

    return {
        "w1": w_in.astype(jnp.bfloat16),
        "w2": w["w2"].astype(jnp.bfloat16),
        "w3": w["w3"].astype(jnp.bfloat16),
        "smalls": smalls,
    }


def generator_forward(noise, params_in, obs, pos, scale, folded, *, block_bs=128):
    """Pallas-backed forward. `pos` accepted for signature parity but unused (as in torch)."""
    del pos
    bs = noise.shape[0]
    # glue (matches torch.cat((obs.real, obs.imag), -1).flatten(1)): (bs,4,4) cfloat -> (bs,32)
    obs_flat = jnp.concatenate([jnp.real(obs), jnp.imag(obs)], axis=-1).reshape(bs, -1)
    feats = {
        "noise": noise.astype(jnp.float32),
        "obs": obs_flat.astype(jnp.float32),
        "params": params_in.astype(jnp.float32),
        "scale": scale.astype(jnp.float32),
        "bias": jnp.ones((bs, 1), jnp.float32),        # carries the folded layer-1 bias
    }
    xin = jnp.concatenate([feats[name] for name, _ in FEATURE_LAYOUT], axis=1)   # (bs, 99)
    xin = jnp.pad(xin, ((0, 0), (0, K_IN - FEAT_TOTAL)))                         # (bs, 128)

    # Batch-chunk grid: pad the batch to a multiple of the tile (tile itself multiple of 8).
    tm = min(block_bs, max(8, _round_up(bs, 8)))
    bs_pad = _round_up(bs, tm)
    if bs_pad != bs:
        xin = jnp.pad(xin, ((0, bs_pad - bs), (0, 0)))
    xin = xin.astype(jnp.bfloat16)
    grid = (bs_pad // tm,)

    w1, w2, w3, smalls = folded["w1"], folded["w2"], folded["w3"], folded["smalls"]

    out = pl.pallas_call(
        generator_kernel,
        out_shape=jax.ShapeDtypeStruct((bs_pad, N4), jnp.float32),
        grid=grid,
        in_specs=[
            # Activations: march over batch chunks.
            pl.BlockSpec((tm, K_IN), lambda i: (i, 0)),
            # Weights: constant block index -> fetched once, resident in VMEM across all chunks.
            pl.BlockSpec(w1.shape, lambda i: (0, 0)),
            pl.BlockSpec(w2.shape, lambda i: (0, 0)),
            pl.BlockSpec(w3.shape, lambda i: (0, 0)),
            pl.BlockSpec(smalls.shape, lambda i: (0, 0)),
        ],
        out_specs=pl.BlockSpec((tm, N4), lambda i: (i, 0)),
        compiler_params=pltpu.CompilerParams(
            dimension_semantics=("parallel",),   # chunks are independent -> shard across TCs on v7x
            vmem_limit_bytes=32 << 20,           # ~3.2 MiB bf16 weights (+double-buffer) ; v7x-safe
        ),
    )(xin, w1, w2, w3, smalls)
    return out[:bs]


def _reference_forward(noise, params_in, obs, scale, w):
    """Pure-JAX f32 reference matching the PyTorch forward exactly (unfused)."""
    bs = noise.shape[0]
    obs_flat = jnp.concatenate([jnp.real(obs), jnp.imag(obs)], axis=-1).reshape(bs, -1)
    h_noise = noise @ w["wn"] + w["bn"]
    h_param = params_in @ w["wp"] + w["bp"]
    h_obs = obs_flat @ w["wo"] + w["bo"]
    h_scale = scale @ w["ws"] + w["bsc"]
    x = jnp.concatenate([h_noise, h_param, h_obs, h_scale], axis=1)   # torch concat order
    x = _mish_ref(x @ w["w1"] + w["b1"])
    x = _mish_ref(x @ w["w2"] + w["b2"])
    x = _mish_ref(x @ w["w3"] + w["b3"])
    return x @ w["w4"] + w["b4"]


if __name__ == "__main__":
    key = jax.random.PRNGKey(0)
    k_w, k_n, k_p, k_o1, k_o2, k_s, k_pos = jax.random.split(key, 7)

    bs = 64                      # small demo batch; block_bs=32 -> 2 grid chunks sharing weights
    weights = init_params(k_w)
    folded = fold_weights_for_kernel(weights)

    noise = jax.random.normal(k_n, (bs, NOISE_DIM), dtype=jnp.float32)
    params_in = jax.random.normal(k_p, (bs, 1), dtype=jnp.float32)
    # observables are (bs, 4, 4) complex matrices -> 32 real features after cat+flatten
    obs_real = jax.random.normal(k_o1, (bs, 4, 4), dtype=jnp.float32)
    obs_imag = jax.random.normal(k_o2, (bs, 4, 4), dtype=jnp.float32)
    obs = (obs_real + 1j * obs_imag).astype(jnp.complex64)
    scale = jax.random.normal(k_s, (bs, 1), dtype=jnp.float32)
    pos = jax.random.randint(k_pos, (bs, 2), 0, 3)   # unused by forward(), kept for parity

    out = generator_forward(noise, params_in, obs, pos, scale, folded, block_bs=32)
    out = jax.block_until_ready(out)

    ref = _reference_forward(noise, params_in, obs, scale, weights)
    assert out.shape == (bs, N4), out.shape
    # bf16 weights/activations + approx-reciprocal mish vs full-f32 reference -> loosened tolerance
    assert jnp.allclose(out, ref, atol=4e-2, rtol=4e-2), (out, ref)

    print("KERNEL_OK")
</pallas_src>

<mosaic_0001>
module attributes {stable_mosaic.version = 11 : i64} {
  func.func @generator_kernel(%arg0: i32, %arg1: memref<32x128xbf16, #tpu.memory_space<vmem>>, %arg2: memref<128x512xbf16, #tpu.memory_space<vmem>>, %arg3: memref<512x1024xbf16, #tpu.memory_space<vmem>>, %arg4: memref<1024x1024xbf16, #tpu.memory_space<vmem>>, %arg5: memref<4x1024xf32, #tpu.memory_space<vmem>>, %arg6: memref<32x1xf32, #tpu.memory_space<vmem>>) attributes {dimension_semantics = [#tpu.dimension_semantics<parallel>], iteration_bounds = array<i64: 2>, scalar_prefetch = 0 : i64, scratch_operands = 0 : i64, tpu.core_type = #tpu.core_type<tc>, window_params = [{transform_indices = @transform_0, window_bounds = array<i64: 32, 128>}, {pipeline_mode = #tpu.pipeline_mode<synchronous>, transform_indices = @transform_1, window_bounds = array<i64: 128, 512>}, {pipeline_mode = #tpu.pipeline_mode<synchronous>, transform_indices = @transform_2, window_bounds = array<i64: 512, 1024>}, {pipeline_mode = #tpu.pipeline_mode<synchronous>, transform_indices = @transform_3, window_bounds = array<i64: 1024, 1024>}, {pipeline_mode = #tpu.pipeline_mode<synchronous>, transform_indices = @transform_4, window_bounds = array<i64: 4, 1024>}, {transform_indices = @transform_5, window_bounds = array<i64: 32, 1>}]} {
    %c0 = arith.constant 0 : index
    %c0_0 = arith.constant 0 : index
    %0 = vector.load %arg5[%c0, %c0_0] : memref<4x1024xf32, #tpu.memory_space<vmem>>, vector<1x1024xf32>
    %c1 = arith.constant 1 : index
    %c0_1 = arith.constant 0 : index
    %1 = vector.load %arg5[%c1, %c0_1] : memref<4x1024xf32, #tpu.memory_space<vmem>>, vector<1x1024xf32>
    %c2 = arith.constant 2 : index
    %c0_2 = arith.constant 0 : index
    %2 = vector.load %arg5[%c2, %c0_2] : memref<4x1024xf32, #tpu.memory_space<vmem>>, vector<1x1024xf32>
    %c3 = arith.constant 3 : index
    %c0_3 = arith.constant 0 : index
    %3 = vector.load %arg5[%c3, %c0_3] : memref<4x1024xf32, #tpu.memory_space<vmem>>, vector<1x1xf32>
    %c0_4 = arith.constant 0 : index
    %c0_5 = arith.constant 0 : index
    %4 = vector.load %arg1[%c0_4, %c0_5] : memref<32x128xbf16, #tpu.memory_space<vmem>>, vector<32x128xbf16>
    %c0_6 = arith.constant 0 : index
    %c0_7 = arith.constant 0 : index
    %5 = vector.load %arg2[%c0_6, %c0_7] : memref<128x512xbf16, #tpu.memory_space<vmem>>, vector<128x512xbf16>
    %cst = arith.constant dense<0.000000e+00> : vector<32x512xf32>
    %6 = tpu.matmul %4, %5, %cst {dimension_numbers = #tpu.dot_dimension_numbers<[1], [0], [0], [1], [0, 0, 1, 1], [], []>} : vector<32x128xbf16>, vector<128x512xbf16>, vector<32x512xf32> -> vector<32x512xf32>
    %7 = math.exp %6 : vector<32x512xf32>
    %cst_8 = arith.constant 1.000000e+00 : f32
    %8 = vector.broadcast %cst_8 : f32 to vector<32x512xf32>
    %9 = arith.addf %8, %7 : vector<32x512xf32>
    %10 = arith.mulf %9, %9 : vector<32x512xf32>
    %cst_9 = arith.constant 1.000000e+00 : f32
    %11 = vector.broadcast %cst_9 : f32 to vector<32x512xf32>
    %12 = arith.addf %10, %11 : vector<32x512xf32>
    %13 = tpu.reciprocal %12 {approx = true} : vector<32x512xf32> -> vector<32x512xf32>
    %cst_10 = arith.constant 2.000000e+00 : f32
    %14 = vector.broadcast %cst_10 : f32 to vector<32x512xf32>
    %15 = arith.mulf %14, %13 : vector<32x512xf32>
    %cst_11 = arith.constant 1.000000e+00 : f32
    %16 = vector.broadcast %cst_11 : f32 to vector<32x512xf32>
    %17 = arith.subf %16, %15 : vector<32x512xf32>
    %18 = arith.mulf %6, %17 : vector<32x512xf32>
    %19 = arith.truncf %18 : vector<32x512xf32> to vector<32x512xbf16>
    %c0_12 = arith.constant 0 : index
    %c0_13 = arith.constant 0 : index
    %20 = vector.load %arg3[%c0_12, %c0_13] : memref<512x1024xbf16, #tpu.memory_space<vmem>>, vector<512x1024xbf16>
    %cst_14 = arith.constant dense<0.000000e+00> : vector<32x1024xf32>
    %21 = tpu.matmul %19, %20, %cst_14 {dimension_numbers = #tpu.dot_dimension_numbers<[1], [0], [0], [1], [0, 0, 1, 1], [], []>} : vector<32x512xbf16>, vector<512x1024xbf16>, vector<32x1024xf32> -> vector<32x1024xf32>
    %22 = vector.broadcast %0 : vector<1x1024xf32> to vector<32x1024xf32>
    %23 = arith.addf %21, %22 : vector<32x1024xf32>
    %24 = math.exp %23 : vector<32x1024xf32>
    %cst_15 = arith.constant 1.000000e+00 : f32
    %25 = vector.broadcast %cst_15 : f32 to vector<32x1024xf32>
    %26 = arith.addf %25, %24 : vector<32x1024xf32>
    %27 = arith.mulf %26, %26 : vector<32x1024xf32>
    %cst_16 = arith.constant 1.000000e+00 : f32
    %28 = vector.broadcast %cst_16 : f32 to vector<32x1024xf32>
    %29 = arith.addf %27, %28 : vector<32x1024xf32>
    %30 = tpu.reciprocal %29 {approx = true} : vector<32x1024xf32> -> vector<32x1024xf32>
    %cst_17 = arith.constant 2.000000e+00 : f32
    %31 = vector.broadcast %cst_17 : f32 to vector<32x1024xf32>
    %32 = arith.mulf %31, %30 : vector<32x1024xf32>
    %cst_18 = arith.constant 1.000000e+00 : f32
    %33 = vector.broadcast %cst_18 : f32 to vector<32x1024xf32>
    %34 = arith.subf %33, %32 : vector<32x1024xf32>
    %35 = arith.mulf %23, %34 : vector<32x1024xf32>
    %36 = arith.truncf %35 : vector<32x1024xf32> to vector<32x1024xbf16>
    %c0_19 = arith.constant 0 : index
    %c0_20 = arith.constant 0 : index
    %37 = vector.load %arg4[%c0_19, %c0_20] : memref<1024x1024xbf16, #tpu.memory_space<vmem>>, vector<1024x1024xbf16>
    %cst_21 = arith.constant dense<0.000000e+00> : vector<32x1024xf32>
    %38 = tpu.matmul %36, %37, %cst_21 {dimension_numbers = #tpu.dot_dimension_numbers<[1], [0], [0], [1], [0, 0, 1, 1], [], []>} : vector<32x1024xbf16>, vector<1024x1024xbf16>, vector<32x1024xf32> -> vector<32x1024xf32>
    %39 = vector.broadcast %1 : vector<1x1024xf32> to vector<32x1024xf32>
    %40 = arith.addf %38, %39 : vector<32x1024xf32>
    %41 = math.exp %40 : vector<32x1024xf32>
    %cst_22 = arith.constant 1.000000e+00 : f32
    %42 = vector.broadcast %cst_22 : f32 to vector<32x1024xf32>
    %43 = arith.addf %42, %41 : vector<32x1024xf32>
    %44 = arith.mulf %43, %43 : vector<32x1024xf32>
    %cst_23 = arith.constant 1.000000e+00 : f32
    %45 = vector.broadcast %cst_23 : f32 to vector<32x1024xf32>
    %46 = arith.addf %44, %45 : vector<32x1024xf32>
    %47 = tpu.reciprocal %46 {approx = true} : vector<32x1024xf32> -> vector<32x1024xf32>
    %cst_24 = arith.constant 2.000000e+00 : f32
    %48 = vector.broadcast %cst_24 : f32 to vector<32x1024xf32>
    %49 = arith.mulf %48, %47 : vector<32x1024xf32>
    %cst_25 = arith.constant 1.000000e+00 : f32
    %50 = vector.broadcast %cst_25 : f32 to vector<32x1024xf32>
    %51 = arith.subf %50, %49 : vector<32x1024xf32>
    %52 = arith.mulf %40, %51 : vector<32x1024xf32>
    %53 = vector.broadcast %2 : vector<1x1024xf32> to vector<32x1024xf32>
    %54 = arith.mulf %52, %53 : vector<32x1024xf32>
    %cst_26 = arith.constant dense<0.000000e+00> : vector<32xf32>
    %55 = vector.multi_reduction <add>, %54, %cst_26 [1] : vector<32x1024xf32> to vector<32xf32>
    %56 = vector.shape_cast %55 : vector<32xf32> to vector<32x1xf32>
    %57 = vector.broadcast %3 : vector<1x1xf32> to vector<32x1xf32>
    %58 = arith.addf %56, %57 : vector<32x1xf32>
    %c0_27 = arith.constant 0 : index
    %c0_28 = arith.constant 0 : index
    %59 = vector.load %arg6[%c0_27, %c0_28] : memref<32x1xf32, #tpu.memory_space<vmem>>, vector<32x1xf32>
    tpu.vector_store %arg6[%c0_27, %c0_28], %58 {strides = array<i32>} : memref<32x1xf32, #tpu.memory_space<vmem>>, vector<32x1xf32>,
    return
  }
  func.func @transform_0(%arg0: i32) -> (i32, i32) {
    %c0_i32 = arith.constant 0 : i32
    %c0_i32_0 = arith.constant 0 : i32
    return %arg0, %c0_i32 : i32, i32
  }
  func.func @transform_1(%arg0: i32) -> (i32, i32) {
    %c0_i32 = arith.constant 0 : i32
    %c0_i32_0 = arith.constant 0 : i32
    %c0_i32_1 = arith.constant 0 : i32
    return %c0_i32, %c0_i32_0 : i32, i32
  }
  func.func @transform_2(%arg0: i32) -> (i32, i32) {
    %c0_i32 = arith.constant 0 : i32
    %c0_i32_0 = arith.constant 0 : i32
    %c0_i32_1 = arith.constant 0 : i32
    return %c0_i32, %c0_i32_0 : i32, i32
  }
  func.func @transform_3(%arg0: i32) -> (i32, i32) {
    %c0_i32 = arith.constant 0 : i32
    %c0_i32_0 = arith.constant 0 : i32
    %c0_i32_1 = arith.constant 0 : i32
    return %c0_i32, %c0_i32_0 : i32, i32
  }
  func.func @transform_4(%arg0: i32) -> (i32, i32) {
    %c0_i32 = arith.constant 0 : i32
    %c0_i32_0 = arith.constant 0 : i32
    %c0_i32_1 = arith.constant 0 : i32
    return %c0_i32, %c0_i32_0 : i32, i32
  }
  func.func @transform_5(%arg0: i32) -> (i32, i32) {
    %c0_i32 = arith.constant 0 : i32
    %c0_i32_0 = arith.constant 0 : i32
    return %arg0, %c0_i32 : i32, i32
  }
}

</mosaic_0001>

<llo_original>
// kernel: tpu_custom_call.1
$region0: #{tpu_custom_call.1}
  #allocation0 [shape = 'u32[]', space=smem, size = 0x4, offset = 0x4, fixed_abs, tag = 'smem constant byte address 0x4 - core index']
  #allocation1 [shape = 'u32[144,128]{1,0:T(1,128)}', space=vmem, size = 0x12000, scoped, tag = 'internal scratch']
  %s0 = inlined_call_operand.hbm [shape: bf16[64,128], index: 0, kind: input, shape index: {}]
  %s1 = inlined_call_operand.hbm [shape: bf16[128,512], index: 1, kind: input, shape index: {}]
  %s2 = inlined_call_operand.hbm [shape: bf16[512,1024], index: 2, kind: input, shape index: {}]
  %s3 = inlined_call_operand.hbm [shape: bf16[1024,1024], index: 3, kind: input, shape index: {}]
  %s4 = inlined_call_operand.hbm [shape: f32[4,1024], index: 4, kind: input, shape index: {}]
  %s5 = inlined_call_operand.vmem [shape: f32[64,1], index: 5, kind: output, shape index: {}]
  %s6 = sld [smem:[#allocation0]]
  $region73: #{tpu_custom_call.1} parent=0
    _
  %s8 = ssub.s32 1, %s6
  %s9 = scalar_select 0, %s8, %s6
  $region1: #{tpu_custom_call.1} parent=0
    #allocation2 [shape = 'u8[16384]{0}', space=vmem, size = 0x4000, scoped, tag = 'input window, operand 0']
    #allocation3 [shape = 's32[2]{0}', space=sflag, size = 0x8, scoped, tag = 'scoped memory for tpu_custom_call.1']
    #allocation4 [shape = 'u8[131072]{0}', space=vmem, size = 0x20000, scoped, tag = 'input window, operand 1, single buffered']
    #allocation5 [shape = 's32[1]{0}', space=sflag, size = 0x4, scoped, tag = 'scoped memory for tpu_custom_call.1']
    #allocation6 [shape = 'u8[1048576]{0}', space=vmem, size = 0x100000, scoped, tag = 'input window, operand 2, single buffered']
    #allocation7 [shape = 'u8[2097152]{0}', space=vmem, size = 0x200000, scoped, tag = 'input window, operand 3, single buffered']
    #allocation8 [shape = 's32[1]{0}', space=sflag, size = 0x4, scoped, tag = 'scoped memory for tpu_custom_call.1']
    #allocation9 [shape = 'u8[16384]{0}', space=vmem, size = 0x4000, scoped, tag = 'input window, operand 4, single buffered']
    %10 = vsyncpa [#allocation3], 0
    %s11 = scalar_lea.sflag [#allocation3], 1
    %12 = vsyncpa %s11, 0
    %13 = vsyncpa [#allocation5], 0
    %14 = vsyncpa [#allocation8], 0
    loop: start=0, step=1, limit=4
    $region2: #{tpu_custom_call.1} parent=1 // loop_pre_header
      _
    $region3: #{tpu_custom_call.1} parent=1 // loop_header
      %s16 = sphi 0, %s20
      %p17 = scmp.ge.s32.totalorder %s16, 4
      %s26 = sphi 0, %s28
      %s29 = sphi 0, %s26
      %s30 = sphi 0, %s29
      %s46 = sphi 0, %s30
      %s50 = sphi 0, %s50
      %s52 = sphi 0, %s50
      %s53 = sphi 0, %s52
      %s67 = sphi 0, %s53
      %s71 = sphi 0, %s71
      %s73 = sphi 0, %s71
      %s74 = sphi 0, %s73
      %s88 = sphi 0, %s74
      %s92 = sphi 0, %s92
      %s94 = sphi 0, %s92
      %s95 = sphi 0, %s94
      %s109 = sphi 0, %s95
      %s113 = sphi 0, %s113
      %s115 = sphi 0, %s113
      %s116 = sphi 0, %s115
      %s130 = sphi 0, %s116
      %s136 = sphi 0, %s138
      %s139 = sphi 0, %s136
      %s140 = sphi 0, %s139
      %s156 = sphi 0, %s140
    $region4: #{tpu_custom_call.1} parent=1 // loop_header_branch
      %19 = sbr.rel (%p17) target = $region8
    $region5: #{tpu_custom_call.1} parent=1 // loop_body
      %s21 = ssub.s32 %s16, 1
      %s22 = ssub.s32 %s16, 2
      %s23 = sadd.s32 %s16, 1
      %s24 = ssub.s32 %s16, %s23
      %p25 = scmp.eq.s32.totalorder %s24, 0
      %s27 = sadd.s32 %s26, 1
      %s28 = scalar_select %p25, %s26, %s27
      %p31 = pneg %p25
      %p32 = scmp.eq.s32.totalorder %s16, 1
      %p33 = por %p31, %p32
      %p34 = scmp.ne.s32.totalorder %s26, %s29
      %p35 = scmp.eq.s32.totalorder %s16, 0
      %p36 = por %p34, %p35
      %p37 = scmp.ne.s32.totalorder %s26, %s29
      %p38 = scmp.eq.s32.totalorder %s21, 1
      %p39 = por %p37, %p38
      %p40 = scmp.ne.s32.totalorder %s29, %s30
      %p41 = scmp.eq.s32.totalorder %s21, 0
      %p42 = por %p40, %p41
      %p43 = scmp.ne.s32.totalorder %s29, %s30
      %p44 = scmp.eq.s32.totalorder %s22, 1
      %p45 = por %p43, %p44
      %p47 = scmp.ne.s32.totalorder %s30, %s46
      %p48 = scmp.eq.s32.totalorder %s22, 0
      %p49 = por %p47, %p48
      %s51 = sadd.s32 %s50, 1
      %p54 = scmp.eq.s32.totalorder %s16, 1
      %p55 = scmp.ne.s32.totalorder %s50, %s52
      %p56 = scmp.eq.s32.totalorder %s16, 0
      %p57 = por %p55, %p56
      %p58 = scmp.ne.s32.totalorder %s50, %s52
      %p59 = scmp.eq.s32.totalorder %s21, 1
      %p60 = por %p58, %p59
      %p61 = scmp.ne.s32.totalorder %s52, %s53
      %p62 = scmp.eq.s32.totalorder %s21, 0
      %p63 = por %p61, %p62
      %p64 = scmp.ne.s32.totalorder %s52, %s53
      %p65 = scmp.eq.s32.totalorder %s22, 1
      %p66 = por %p64, %p65
      %p68 = scmp.ne.s32.totalorder %s53, %s67
      %p69 = scmp.eq.s32.totalorder %s22, 0
      %p70 = por %p68, %p69
      %s72 = sadd.s32 %s71, 1
      %p75 = scmp.eq.s32.totalorder %s16, 1
      %p76 = scmp.ne.s32.totalorder %s71, %s73
      %p77 = scmp.eq.s32.totalorder %s16, 0
      %p78 = por %p76, %p77
      %p79 = scmp.ne.s32.totalorder %s71, %s73
      %p80 = scmp.eq.s32.totalorder %s21, 1
      %p81 = por %p79, %p80
      %p82 = scmp.ne.s32.totalorder %s73, %s74
      %p83 = scmp.eq.s32.totalorder %s21, 0
      %p84 = por %p82, %p83
      %p85 = scmp.ne.s32.totalorder %s73, %s74
      %p86 = scmp.eq.s32.totalorder %s22, 1
      %p87 = por %p85, %p86
      %p89 = scmp.ne.s32.totalorder %s74, %s88
      %p90 = scmp.eq.s32.totalorder %s22, 0
      %p91 = por %p89, %p90
      %s93 = sadd.s32 %s92, 1
      %p96 = scmp.eq.s32.totalorder %s16, 1
      %p97 = scmp.ne.s32.totalorder %s92, %s94
      %p98 = scmp.eq.s32.totalorder %s16, 0
      %p99 = por %p97, %p98
      %p100 = scmp.ne.s32.totalorder %s92, %s94
      %p101 = scmp.eq.s32.totalorder %s21, 1
      %p102 = por %p100, %p101
      %p103 = scmp.ne.s32.totalorder %s94, %s95
      %p104 = scmp.eq.s32.totalorder %s21, 0
      %p105 = por %p103, %p104
      %p106 = scmp.ne.s32.totalorder %s94, %s95
      %p107 = scmp.eq.s32.totalorder %s22, 1
      %p108 = por %p106, %p107
      %p110 = scmp.ne.s32.totalorder %s95, %s109
      %p111 = scmp.eq.s32.totalorder %s22, 0
      %p112 = por %p110, %p111
      %s114 = sadd.s32 %s113, 1
      %p117 = scmp.eq.s32.totalorder %s16, 1
      %p118 = scmp.ne.s32.totalorder %s113, %s115
      %p119 = scmp.eq.s32.totalorder %s16, 0
      %p120 = por %p118, %p119
      %p121 = scmp.ne.s32.totalorder %s113, %s115
      %p122 = scmp.eq.s32.totalorder %s21, 1
      %p123 = por %p121, %p122
      %p124 = scmp.ne.s32.totalorder %s115, %s116
      %p125 = scmp.eq.s32.totalorder %s21, 0
      %p126 = por %p124, %p125
      %p127 = scmp.ne.s32.totalorder %s115, %s116
      %p128 = scmp.eq.s32.totalorder %s22, 1
      %p129 = por %p127, %p128
      %p131 = scmp.ne.s32.totalorder %s116, %s130
      %p132 = scmp.eq.s32.totalorder %s22, 0
      %p133 = por %p131, %p132
      %s134 = ssub.s32 %s16, %s23
      %p135 = scmp.eq.s32.totalorder %s134, 0
      %s137 = sadd.s32 %s136, 1
      %s138 = scalar_select %p135, %s136, %s137
      %p141 = pneg %p135
      %p142 = scmp.eq.s32.totalorder %s16, 1
      %p143 = por %p141, %p142
      %p144 = scmp.ne.s32.totalorder %s136, %s139
      %p145 = scmp.eq.s32.totalorder %s16, 0
      %p146 = por %p144, %p145
      %p147 = scmp.ne.s32.totalorder %s136, %s139
      %p148 = scmp.eq.s32.totalorder %s21, 1
      %p149 = por %p147, %p148
      %p150 = scmp.ne.s32.totalorder %s139, %s140
      %p151 = scmp.eq.s32.totalorder %s21, 0
      %p152 = por %p150, %p151
      %p153 = scmp.ne.s32.totalorder %s139, %s140
      %p154 = scmp.eq.s32.totalorder %s22, 1
      %p155 = por %p153, %p154
      %p157 = scmp.ne.s32.totalorder %s140, %s156
      %p158 = scmp.eq.s32.totalorder %s22, 0
      %p159 = por %p157, %p158
      %p160 = scmp.le.s32.totalorder 1, %s16
      %p161 = scmp.lt.s32.totalorder %s16, 3
      %p162 = pnand %p160, %p161
      %p163 = pneg %p162
      // Predicated region
      $region9: #{tpu_custom_call.1} parent=5 // pred_check
        _
      $region10: #{tpu_custom_call.1} parent=5 // pred_check_branch
        %165 = sbr.rel (%p162) target = $region12
      $region11: #{tpu_custom_call.1} parent=5 // pred_region
        %s166 = ssub.s32 %s16, 1
        // Predicated region
        $region13: #{tpu_custom_call.1} parent=11 // pred_check
          %p167 = pneg %p63
        $region14: #{tpu_custom_call.1} parent=11 // pred_check_branch
          %169 = sbr.rel (%p167) target = $region16
        $region15: #{tpu_custom_call.1} parent=11 // pred_region
          %s171 = ssub.s32 4096, 4096
          %172 = vsyncadd [#allocation5], %s171
          %s173 = sshll.u32 [#allocation4], 4
          %s174 = int_to_ptr.vmem [resolvable:$true] %s173
          %179 = dma.hbm_to_vmem [thread:$0]  %s1, 4096, %s174, [#allocation5], 256, 256, 16
        $region16: #{tpu_custom_call.1} parent=11 // pred_fallthru
          _
        // Predicated region
        $region17: #{tpu_custom_call.1} parent=11 // pred_check
          %p180 = pneg %p84
        $region18: #{tpu_custom_call.1} parent=11 // pred_check_branch
          %182 = sbr.rel (%p180) target = $region20
        $region19: #{tpu_custom_call.1} parent=11 // pred_region
          %s184 = ssub.s32 32768, 32768
          %185 = vsyncadd [#allocation5], %s184
          %s186 = sshll.u32 [#allocation6], 4
          %s187 = int_to_ptr.vmem [resolvable:$true] %s186
          %192 = dma.hbm_to_vmem [thread:$0]  %s2, 32768, %s187, [#allocation5], 512, 512, 32
        $region20: #{tpu_custom_call.1} parent=11 // pred_fallthru
          _
        // Predicated region
        $region21: #{tpu_custom_call.1} parent=11 // pred_check
          %p193 = pneg %p105
        $region22: #{tpu_custom_call.1} parent=11 // pred_check_branch
          %195 = sbr.rel (%p193) target = $region24
        $region23: #{tpu_custom_call.1} parent=11 // pred_region
          %s197 = ssub.s32 65536, 65536
          %198 = vsyncadd [#allocation8], %s197
          %s199 = sshll.u32 [#allocation7], 4
          %s200 = int_to_ptr.vmem [resolvable:$true] %s199
          %205 = dma.hbm_to_vmem [thread:$0]  %s3, 65536, %s200, [#allocation8], 512, 512, 32
        $region24: #{tpu_custom_call.1} parent=11 // pred_fallthru
          _
        // Predicated region
        $region25: #{tpu_custom_call.1} parent=11 // pred_check
          %p206 = pneg %p126
        $region26: #{tpu_custom_call.1} parent=11 // pred_check_branch
          %208 = sbr.rel (%p206) target = $region28
        $region27: #{tpu_custom_call.1} parent=11 // pred_region
          %s210 = ssub.s32 512, 512
          %211 = vsyncadd [#allocation8], %s210
          %s213 = sshll.u32 [#allocation9], 4
          %s214 = int_to_ptr.vmem [resolvable:$true] %s213
          %216 = dma.hbm_to_vmem [thread:$0]  %s4, 512, %s214, [#allocation8]
        $region28: #{tpu_custom_call.1} parent=11 // pred_fallthru
          _
      $region12: #{tpu_custom_call.1} parent=5 // pred_fallthru
        _
      %p217 = scmp.lt.s32.totalorder %s16, 2
      // Predicated region
      $region29: #{tpu_custom_call.1} parent=5 // pred_check
        %p218 = pneg %p217
      $region30: #{tpu_custom_call.1} parent=5 // pred_check_branch
        %220 = sbr.rel (%p218) target = $region32
      $region31: #{tpu_custom_call.1} parent=5 // pred_region
        // Predicated region
        $region33: #{tpu_custom_call.1} parent=31 // pred_check
          %p221 = pneg %p36
        $region34: #{tpu_custom_call.1} parent=31 // pred_check_branch
          %223 = sbr.rel (%p221) target = $region36
        $region35: #{tpu_custom_call.1} parent=31 // pred_region
          %s224 = sand.u32 %s26, 1
          %s225 = scalar_lea.sflag [#allocation3], %s224
          %s226 = sand.u32 %s26, 1
          %s227 = smul.addr %s226, 16
          %s228 = scalar_lea.vmem [#allocation2], %s227
          %s229 = smul.u32 4, %s16
          %s231 = ssub.s32 256, 256
          %232 = vsyncadd %s225, %s231
          %s233 = smul.addr %s229, 64
          %s234 = scalar_lea.hbm %s0, %s233
          %s235 = sshll.u32 %s228, 4
          %s236 = int_to_ptr.vmem [resolvable:$true] %s235
          %241 = dma.hbm_to_vmem [thread:$0]  %s234, 256, %s236, %s225, 64, 64, 4
        $region36: #{tpu_custom_call.1} parent=31 // pred_fallthru
          _
      $region32: #{tpu_custom_call.1} parent=5 // pred_fallthru
        _
      %p242 = scmp.le.s32.totalorder 1, %s16
      %p243 = scmp.lt.s32.totalorder %s16, 3
      %p244 = pnand %p242, %p243
      %p245 = pneg %p244
      // Predicated region
      $region37: #{tpu_custom_call.1} parent=5 // pred_check
        _
      $region38: #{tpu_custom_call.1} parent=5 // pred_check_branch
        %247 = sbr.rel (%p244) target = $region40
      $region39: #{tpu_custom_call.1} parent=5 // pred_region
        %s248 = ssub.s32 %s16, 1
        %s249 = sand.u32 %s29, 1
        %s250 = scalar_lea.sflag [#allocation3], %s249
        %s251 = sand.u32 %s29, 1
        %s252 = smul.addr %s251, 16
        %s253 = scalar_lea.vmem [#allocation2], %s252
        // Predicated region
        $region41: #{tpu_custom_call.1} parent=39 // pred_check
          %p254 = pneg %p42
        $region42: #{tpu_custom_call.1} parent=39 // pred_check_branch
          %256 = sbr.rel (%p254) target = $region44
        $region43: #{tpu_custom_call.1} parent=39 // pred_region
          %257 = dma.done %s250, 256
        $region44: #{tpu_custom_call.1} parent=39 // pred_fallthru
          _
        // Predicated region
        $region45: #{tpu_custom_call.1} parent=39 // pred_check
          %p258 = pneg %p63
        $region46: #{tpu_custom_call.1} parent=39 // pred_check_branch
          %260 = sbr.rel (%p258) target = $region48
        $region47: #{tpu_custom_call.1} parent=39 // pred_region
          %261 = dma.done [#allocation5], 4096
        $region48: #{tpu_custom_call.1} parent=39 // pred_fallthru
          _
        // Predicated region
        $region49: #{tpu_custom_call.1} parent=39 // pred_check
          %p262 = pneg %p84
        $region50: #{tpu_custom_call.1} parent=39 // pred_check_branch
          %264 = sbr.rel (%p262) target = $region52
        $region51: #{tpu_custom_call.1} parent=39 // pred_region
          %265 = dma.done [#allocation5], 32768
        $region52: #{tpu_custom_call.1} parent=39 // pred_fallthru
          _
        // Predicated region
        $region53: #{tpu_custom_call.1} parent=39 // pred_check
          %p266 = pneg %p105
        $region54: #{tpu_custom_call.1} parent=39 // pred_check_branch
          %268 = sbr.rel (%p266) target = $region56
        $region55: #{tpu_custom_call.1} parent=39 // pred_region
          %269 = dma.done [#allocation8], 65536
        $region56: #{tpu_custom_call.1} parent=39 // pred_fallthru
          _
        // Predicated region
        $region57: #{tpu_custom_call.1} parent=39 // pred_check
          %p270 = pneg %p126
        $region58: #{tpu_custom_call.1} parent=39 // pred_check_branch
          %272 = sbr.rel (%p270) target = $region60
        $region59: #{tpu_custom_call.1} parent=39 // pred_region
          %273 = dma.done [#allocation8], 512
        $region60: #{tpu_custom_call.1} parent=39 // pred_fallthru
          _
        %s274 = sand.u32 %s29, 1
        %s275 = scalar_lea.sflag [#allocation3], %s274
        %s276 = sand.u32 %s29, 1
        %s277 = smul.addr %s276, 16
        %s278 = scalar_lea.vmem [#allocation2], %s277
        %p279 = pneg %p42
        %p280 = pneg %p39
        %p281 = pneg %p63
        %p282 = pneg %p60
        %p283 = pneg %p84
        %p284 = pneg %p81
        %p285 = pneg %p105
        %p286 = pneg %p102
        %p287 = pneg %p126
        %p288 = pneg %p123
        %p289 = pneg %p152
        %p290 = pneg %p149
        %s291 = smul.u32 4, %s21
        %p292 = scmp.lt.s32.totalorder %s291, 7
        %s293 = scalar_select %p292, %s291, 7
        %s294 = smul.addr %s293, 8
        %s295 = scalar_lea.vmem %s5, %s294
        %s296 = smul.u32 4, %s21
        %s297 = smul.u32 4, %s21
        %p298 = scmp.lt.s32.totalorder %s297, 7
        %s299 = scalar_select %p298, %s297, 7
        %s300 = smul.addr %s299, 8
        %s301 = scalar_lea.vmem %s5, %s300
        %s302 = smul.u32 4, %s21
        %v304 = vld [vmem:[#allocation9] ss:$4 sm:$0xff]
        %s305 = scalar_lea.vmem [#allocation9], 1
        %v306 = vld [vmem:[%s305] ss:$4 sm:$0xff]
        %s307 = scalar_lea.vmem [#allocation9], 2
        %v308 = vld [vmem:[%s307] ss:$4 sm:$0xff]
        %v309 = vld [vmem:[#allocation9 + $0x3] sm:$0x1]
        %v310 = vld [vmem:[%s253] sm:$0xf]
        %v311 = vld [vmem:[%s253 + $0x4] sm:$0xf]
        %v312 = vld [vmem:[%s253 + $0x8] sm:$0xf]
        %v313 = vld [vmem:[%s253 + $0xc] sm:$0xf]
        %v314 = vld [vmem:[#allocation4] sm:$0xff]
        %v315 = vld [vmem:[#allocation4 + $0x8] sm:$0xff]
        %v316 = vld [vmem:[#allocation4 + $0x10] sm:$0xff]
        %v317 = vld [vmem:[#allocation4 + $0x18] sm:$0xff]
        %v318 = vld [vmem:[#allocation4 + $0x20] sm:$0xff]
        %v319 = vld [vmem:[#allocation4 + $0x28] sm:$0xff]
        %v320 = vld [vmem:[#allocation4 + $0x30] sm:$0xff]
        %v321 = vld [vmem:[#allocation4 + $0x38] sm:$0xff]
        %v322 = vld [vmem:[#allocation4 + $0x40] sm:$0xff]
        %v323 = vld [vmem:[#allocation4 + $0x48] sm:$0xff]
        %v324 = vld [vmem:[#allocation4 + $0x50] sm:$0xff]
        %v325 = vld [vmem:[#allocation4 + $0x58] sm:$0xff]
        %v326 = vld [vmem:[#allocation4 + $0x60] sm:$0xff]
        %v327 = vld [vmem:[#allocation4 + $0x68] sm:$0xff]
        %v328 = vld [vmem:[#allocation4 + $0x70] sm:$0xff]
        %v329 = vld [vmem:[#allocation4 + $0x78] sm:$0xff]
        %v330 = vld [vmem:[#allocation4 + $0x80] sm:$0xff]
        %v331 = vld [vmem:[#allocation4 + $0x88] sm:$0xff]
        %v332 = vld [vmem:[#allocation4 + $0x90] sm:$0xff]
        %v333 = vld [vmem:[#allocation4 + $0x98] sm:$0xff]
        %v334 = vld [vmem:[#allocation4 + $0xa0] sm:$0xff]
        %v335 = vld [vmem:[#allocation4 + $0xa8] sm:$0xff]
        %v336 = vld [vmem:[#allocation4 + $0xb0] sm:$0xff]
        %v337 = vld [vmem:[#allocation4 + $0xb8] sm:$0xff]
        %v338 = vld [vmem:[#allocation4 + $0xc0] sm:$0xff]
        %v339 = vld [vmem:[#allocation4 + $0xc8] sm:$0xff]
        %v340 = vld [vmem:[#allocation4 + $0xd0] sm:$0xff]
        %v341 = vld [vmem:[#allocation4 + $0xd8] sm:$0xff]
        %v342 = vld [vmem:[#allocation4 + $0xe0] sm:$0xff]
        %v343 = vld [vmem:[#allocation4 + $0xe8] sm:$0xff]
        %v344 = vld [vmem:[#allocation4 + $0xf0] sm:$0xff]
        %v345 = vld [vmem:[#allocation4 + $0xf8] sm:$0xff]
        %v350 = vunpack.c.l.b16 %v310
        %v351 = vunpack.c.l.b16 %v311
        %v352 = vunpack.c.l.b16 %v312
        %v353 = vunpack.c.l.b16 %v313
        %v354 = vpack.c.b16 %v351, %v350
        %v355 = vpack.c.b16 %v353, %v352
        %v390 = vunpack.c.l.b16 %v314
        %v391 = vunpack.c.h.b16 %v314
        %v392 = vunpack.c.l.b16 %v315
        %v393 = vunpack.c.h.b16 %v315
        %v394 = vunpack.c.l.b16 %v316
        %v395 = vunpack.c.h.b16 %v316
        %v396 = vunpack.c.l.b16 %v317
        %v397 = vunpack.c.h.b16 %v317
        %v398 = vunpack.c.l.b16 %v318
        %v399 = vunpack.c.h.b16 %v318
        %v400 = vunpack.c.l.b16 %v319
        %v401 = vunpack.c.h.b16 %v319
        %v402 = vunpack.c.l.b16 %v320
        %v403 = vunpack.c.h.b16 %v320
        %v404 = vunpack.c.l.b16 %v321
        %v405 = vunpack.c.h.b16 %v321
        %v406 = vunpack.c.l.b16 %v322
        %v407 = vunpack.c.h.b16 %v322
        %v408 = vunpack.c.l.b16 %v323
        %v409 = vunpack.c.h.b16 %v323
        %v410 = vunpack.c.l.b16 %v324
        %v411 = vunpack.c.h.b16 %v324
        %v412 = vunpack.c.l.b16 %v325
        %v413 = vunpack.c.h.b16 %v325
        %v414 = vunpack.c.l.b16 %v326
        %v415 = vunpack.c.h.b16 %v326
        %v416 = vunpack.c.l.b16 %v327
        %v417 = vunpack.c.h.b16 %v327
        %v418 = vunpack.c.l.b16 %v328
        %v419 = vunpack.c.h.b16 %v328
        %v420 = vunpack.c.l.b16 %v329
        %v421 = vunpack.c.h.b16 %v329
        %v422 = vunpack.c.l.b16 %v330
        %v423 = vunpack.c.h.b16 %v330
        %v424 = vunpack.c.l.b16 %v331
        %v425 = vunpack.c.h.b16 %v331
        %v426 = vunpack.c.l.b16 %v332
        %v427 = vunpack.c.h.b16 %v332
        %v428 = vunpack.c.l.b16 %v333
        %v429 = vunpack.c.h.b16 %v333
        %v430 = vunpack.c.l.b16 %v334
        %v431 = vunpack.c.h.b16 %v334
        %v432 = vunpack.c.l.b16 %v335
        %v433 = vunpack.c.h.b16 %v335
        %v434 = vunpack.c.l.b16 %v336
        %v435 = vunpack.c.h.b16 %v336
        %v436 = vunpack.c.l.b16 %v337
        %v437 = vunpack.c.h.b16 %v337
        %v438 = vunpack.c.l.b16 %v338
        %v439 = vunpack.c.h.b16 %v338
        %v440 = vunpack.c.l.b16 %v339
        %v441 = vunpack.c.h.b16 %v339
        %v442 = vunpack.c.l.b16 %v340
        %v443 = vunpack.c.h.b16 %v340
        %v444 = vunpack.c.l.b16 %v341
        %v445 = vunpack.c.h.b16 %v341
        %v446 = vunpack.c.l.b16 %v342
        %v447 = vunpack.c.h.b16 %v342
        %v448 = vunpack.c.l.b16 %v343
        %v449 = vunpack.c.h.b16 %v343
        %v450 = vunpack.c.l.b16 %v344
        %v451 = vunpack.c.h.b16 %v344
        %v452 = vunpack.c.l.b16 %v345
        %v453 = vunpack.c.h.b16 %v345
        %v454 = vpack.c.b16 %v394, %v390
        %v455 = vpack.c.b16 %v395, %v391
        %v456 = vpack.c.b16 %v396, %v392
        %v457 = vpack.c.b16 %v397, %v393
        %v458 = vpack.c.b16 %v402, %v398
        %v459 = vpack.c.b16 %v403, %v399
        %v460 = vpack.c.b16 %v404, %v400
        %v461 = vpack.c.b16 %v405, %v401
        %v462 = vpack.c.b16 %v410, %v406
        %v463 = vpack.c.b16 %v411, %v407
        %v464 = vpack.c.b16 %v412, %v408
        %v465 = vpack.c.b16 %v413, %v409
        %v466 = vpack.c.b16 %v418, %v414
        %v467 = vpack.c.b16 %v419, %v415
        %v468 = vpack.c.b16 %v420, %v416
        %v469 = vpack.c.b16 %v421, %v417
        %v470 = vpack.c.b16 %v426, %v422
        %v471 = vpack.c.b16 %v427, %v423
        %v472 = vpack.c.b16 %v428, %v424
        %v473 = vpack.c.b16 %v429, %v425
        %v474 = vpack.c.b16 %v434, %v430
        %v475 = vpack.c.b16 %v435, %v431
        %v476 = vpack.c.b16 %v436, %v432
        %v477 = vpack.c.b16 %v437, %v433
        %v478 = vpack.c.b16 %v442, %v438
        %v479 = vpack.c.b16 %v443, %v439
        %v480 = vpack.c.b16 %v444, %v440
        %v481 = vpack.c.b16 %v445, %v441
        %v482 = vpack.c.b16 %v450, %v446
        %v483 = vpack.c.b16 %v451, %v447
        %v484 = vpack.c.b16 %v452, %v448
        %v485 = vpack.c.b16 %v453, %v449
        %518 = vmatprep.subr.bf16.mxu0 %v483
        %519 = vmatpush1.bf16.msra.mxu0 %v482
        %520 = vmatprep.subr.bf16.mxu0 %v479
        %521 = vmatpush1.bf16.msra.mxu0 %v478
        %522 = vmatprep.subr.bf16.mxu0 %v475
        %523 = vmatpush1.bf16.msra.mxu0 %v474
        %524 = vmatprep.subr.bf16.mxu0 %v471
        %525 = vmatpush1.bf16.msra.mxu0 %v470
        %526 = vmatprep.subr.bf16.mxu0 %v467
        %527 = vmatpush1.bf16.msra.mxu0 %v466
        %528 = vmatprep.subr.bf16.mxu0 %v463
        %529 = vmatpush1.bf16.msra.mxu0 %v462
        %530 = vmatprep.subr.bf16.mxu0 %v459
        %531 = vmatpush1.bf16.msra.mxu0 %v458
        %532 = vmatprep.subr.bf16.mxu0 %v455
        %533 = vmatpush1.bf16.msra.mxu0 %v454
        %534 = vmatprep.subr.bf16.mxu0 0
        %535 = vmatpush2.bf16.msra.mxu0 0
        %536 = vmatprep.subr.bf16.mxu0 0
        %537 = vmatpush2.bf16.msra.mxu0 0
        %538 = vmatprep.subr.bf16.mxu0 0
        %539 = vmatpush2.bf16.msra.mxu0 0
        %540 = vmatprep.subr.bf16.mxu0 0
        %541 = vmatpush2.bf16.msra.mxu0 0
        %542 = vmatprep.subr.bf16.mxu0 0
        %543 = vmatpush2.bf16.msra.mxu0 0
        %544 = vmatprep.subr.bf16.mxu0 0
        %545 = vmatpush2.bf16.msra.mxu0 0
        %546 = vmatprep.subr.bf16.mxu0 0
        %547 = vmatpush2.bf16.msra.mxu0 0
        %548 = vmatprep.subr.bf16.mxu0 0
        %549 = vmatpush2.bf16.msra.mxu0 0
        %550 = vmatprep.mubr.bf16.mxu0 0
        %551 = vmatmul.mubr.bf16.gmra.mxu0 %v354
        %v552 = vpop.f32.mrf.mxu0
        %v553 = vadd.f32 0.0, %v552
        %v554 = vpop.f32.mrf.mxu0
        %v555 = vadd.f32 0.0, %v554
        %v556 = vpop.f32.mrf.mxu0
        %v557 = vadd.f32 0.0, %v556
        %v558 = vpop.f32.mrf.mxu0
        %v559 = vadd.f32 0.0, %v558
        %560 = vmatprep.mubr.bf16.mxu0 0
        %561 = vmatmul.mubr.bf16.gmra.mxu0 %v355
        %v562 = vpop.f32.mrf.mxu0
        %v563 = vadd.f32 0.0, %v562
        %v564 = vpop.f32.mrf.mxu0
        %v565 = vadd.f32 0.0, %v564
        %v566 = vpop.f32.mrf.mxu0
        %v567 = vadd.f32 0.0, %v566
        %v568 = vpop.f32.mrf.mxu0
        %v569 = vadd.f32 0.0, %v568
        %570 = vdwg.mxu0
        %571 = vmatprep.subr.bf16.mxu0 %v485
        %572 = vmatpush1.bf16.msra.mxu0 %v484
        %573 = vmatprep.subr.bf16.mxu0 %v481
        %574 = vmatpush1.bf16.msra.mxu0 %v480
        %575 = vmatprep.subr.bf16.mxu0 %v477
        %576 = vmatpush1.bf16.msra.mxu0 %v476
        %577 = vmatprep.subr.bf16.mxu0 %v473
        %578 = vmatpush1.bf16.msra.mxu0 %v472
        %579 = vmatprep.subr.bf16.mxu0 %v469
        %580 = vmatpush1.bf16.msra.mxu0 %v468
        %581 = vmatprep.subr.bf16.mxu0 %v465
        %582 = vmatpush1.bf16.msra.mxu0 %v464
        %583 = vmatprep.subr.bf16.mxu0 %v461
        %584 = vmatpush1.bf16.msra.mxu0 %v460
        %585 = vmatprep.subr.bf16.mxu0 %v457
        %586 = vmatpush1.bf16.msra.mxu0 %v456
        %587 = vmatprep.subr.bf16.mxu0 0
        %588 = vmatpush2.bf16.msra.mxu0 0
        %589 = vmatprep.subr.bf16.mxu0 0
        %590 = vmatpush2.bf16.msra.mxu0 0
        %591 = vmatprep.subr.bf16.mxu0 0
        %592 = vmatpush2.bf16.msra.mxu0 0
        %593 = vmatprep.subr.bf16.mxu0 0
        %594 = vmatpush2.bf16.msra.mxu0 0
        %595 = vmatprep.subr.bf16.mxu0 0
        %596 = vmatpush2.bf16.msra.mxu0 0
        %597 = vmatprep.subr.bf16.mxu0 0
        %598 = vmatpush2.bf16.msra.mxu0 0
        %599 = vmatprep.subr.bf16.mxu0 0
        %600 = vmatpush2.bf16.msra.mxu0 0
        %601 = vmatprep.subr.bf16.mxu0 0
        %602 = vmatpush2.bf16.msra.mxu0 0
        %603 = vmatprep.mubr.bf16.mxu0 0
        %604 = vmatmul.mubr.bf16.gmra.mxu0 %v354
        %v605 = vpop.f32.mrf.mxu0
        %v606 = vadd.f32 0.0, %v605
        %v607 = vpop.f32.mrf.mxu0
        %v608 = vadd.f32 0.0, %v607
        %v609 = vpop.f32.mrf.mxu0
        %v610 = vadd.f32 0.0, %v609
        %v611 = vpop.f32.mrf.mxu0
        %v612 = vadd.f32 0.0, %v611
        %613 = vmatprep.mubr.bf16.mxu0 0
        %614 = vmatmul.mubr.bf16.gmra.mxu0 %v355
        %v615 = vpop.f32.mrf.mxu0
        %v616 = vadd.f32 0.0, %v615
        %v617 = vpop.f32.mrf.mxu0
        %v618 = vadd.f32 0.0, %v617
        %v619 = vpop.f32.mrf.mxu0
        %v620 = vadd.f32 0.0, %v619
        %v621 = vpop.f32.mrf.mxu0
        %v622 = vadd.f32 0.0, %v621
        %623 = vdwg.mxu0
        %v624 = vmul.f32 %v553, 1.442695
        %v625 = vpow.pop %v624
        %v626 = vmul.f32 %v555, 1.442695
        %v627 = vpow.pop %v626
        %v628 = vmul.f32 %v606, 1.442695
        %v629 = vpow.pop %v628
        %v630 = vmul.f32 %v608, 1.442695
        %v631 = vpow.pop %v630
        %v632 = vmul.f32 %v557, 1.442695
        %v633 = vpow.pop %v632
        %v634 = vmul.f32 %v559, 1.442695
        %v635 = vpow.pop %v634
        %v636 = vmul.f32 %v610, 1.442695
        %v637 = vpow.pop %v636
        %v638 = vmul.f32 %v612, 1.442695
        %v639 = vpow.pop %v638
        %v640 = vmul.f32 %v563, 1.442695
        %v641 = vpow.pop %v640
        %v642 = vmul.f32 %v565, 1.442695
        %v643 = vpow.pop %v642
        %v644 = vmul.f32 %v616, 1.442695
        %v645 = vpow.pop %v644
        %v646 = vmul.f32 %v618, 1.442695
        %v647 = vpow.pop %v646
        %v648 = vmul.f32 %v567, 1.442695
        %v649 = vpow.pop %v648
        %v650 = vmul.f32 %v569, 1.442695
        %v651 = vpow.pop %v650
        %v652 = vmul.f32 %v620, 1.442695
        %v653 = vpow.pop %v652
        %v654 = vmul.f32 %v622, 1.442695
        %v655 = vpow.pop %v654
        %v656 = vadd.f32 %v625, 1.0
        %v657 = vadd.f32 %v627, 1.0
        %v658 = vadd.f32 %v629, 1.0
        %v659 = vadd.f32 %v631, 1.0
        %v660 = vadd.f32 %v633, 1.0
        %v661 = vadd.f32 %v635, 1.0
        %v662 = vadd.f32 %v637, 1.0
        %v663 = vadd.f32 %v639, 1.0
        %v664 = vadd.f32 %v641, 1.0
        %v665 = vadd.f32 %v643, 1.0
        %v666 = vadd.f32 %v645, 1.0
        %v667 = vadd.f32 %v647, 1.0
        %v668 = vadd.f32 %v649, 1.0
        %v669 = vadd.f32 %v651, 1.0
        %v670 = vadd.f32 %v653, 1.0
        %v671 = vadd.f32 %v655, 1.0
        %v672 = vmul.f32 %v656, %v656
        %v673 = vmul.f32 %v657, %v657
        %v674 = vmul.f32 %v658, %v658
        %v675 = vmul.f32 %v659, %v659
        %v676 = vmul.f32 %v660, %v660
        %v677 = vmul.f32 %v661, %v661
        %v678 = vmul.f32 %v662, %v662
        %v679 = vmul.f32 %v663, %v663
        %v680 = vmul.f32 %v664, %v664
        %v681 = vmul.f32 %v665, %v665
        %v682 = vmul.f32 %v666, %v666
        %v683 = vmul.f32 %v667, %v667
        %v684 = vmul.f32 %v668, %v668
        %v685 = vmul.f32 %v669, %v669
        %v686 = vmul.f32 %v670, %v670
        %v687 = vmul.f32 %v671, %v671
        %v688 = vadd.f32 %v672, 1.0
        %v689 = vadd.f32 %v673, 1.0
        %v690 = vadd.f32 %v674, 1.0
        %v691 = vadd.f32 %v675, 1.0
        %v692 = vadd.f32 %v676, 1.0
        %v693 = vadd.f32 %v677, 1.0
        %v694 = vadd.f32 %v678, 1.0
        %v695 = vadd.f32 %v679, 1.0
        %v696 = vadd.f32 %v680, 1.0
        %v697 = vadd.f32 %v681, 1.0
        %v698 = vadd.f32 %v682, 1.0
        %v699 = vadd.f32 %v683, 1.0
        %v700 = vadd.f32 %v684, 1.0
        %v701 = vadd.f32 %v685, 1.0
        %v702 = vadd.f32 %v686, 1.0
        %v703 = vadd.f32 %v687, 1.0
        %v704 = vrcp.pop %v688
        %v705 = vrcp.pop %v689
        %v706 = vrcp.pop %v690
        %v707 = vrcp.pop %v691
        %v708 = vrcp.pop %v692
        %v709 = vrcp.pop %v693
        %v710 = vrcp.pop %v694
        %v711 = vrcp.pop %v695
        %v712 = vrcp.pop %v696
        %v713 = vrcp.pop %v697
        %v714 = vrcp.pop %v698
        %v715 = vrcp.pop %v699
        %v716 = vrcp.pop %v700
        %v717 = vrcp.pop %v701
        %v718 = vrcp.pop %v702
        %v719 = vrcp.pop %v703
        %v720 = vmul.f32 %v704, 2.0
        %v721 = vmul.f32 %v705, 2.0
        %v722 = vmul.f32 %v706, 2.0
        %v723 = vmul.f32 %v707, 2.0
        %v724 = vmul.f32 %v708, 2.0
        %v725 = vmul.f32 %v709, 2.0
        %v726 = vmul.f32 %v710, 2.0
        %v727 = vmul.f32 %v711, 2.0
        %v728 = vmul.f32 %v712, 2.0
        %v729 = vmul.f32 %v713, 2.0
        %v730 = vmul.f32 %v714, 2.0
        %v731 = vmul.f32 %v715, 2.0
        %v732 = vmul.f32 %v716, 2.0
        %v733 = vmul.f32 %v717, 2.0
        %v734 = vmul.f32 %v718, 2.0
        %v735 = vmul.f32 %v719, 2.0
        %v736 = vsub.f32 1.0, %v720
        %v737 = vsub.f32 1.0, %v721
        %v738 = vsub.f32 1.0, %v722
        %v739 = vsub.f32 1.0, %v723
        %v740 = vsub.f32 1.0, %v724
        %v741 = vsub.f32 1.0, %v725
        %v742 = vsub.f32 1.0, %v726
        %v743 = vsub.f32 1.0, %v727
        %v744 = vsub.f32 1.0, %v728
        %v745 = vsub.f32 1.0, %v729
        %v746 = vsub.f32 1.0, %v730
        %v747 = vsub.f32 1.0, %v731
        %v748 = vsub.f32 1.0, %v732
        %v749 = vsub.f32 1.0, %v733
        %v750 = vsub.f32 1.0, %v734
        %v751 = vsub.f32 1.0, %v735
        %v752 = vmul.f32 %v553, %v736
        %v753 = vmul.f32 %v555, %v737
        %v754 = vmul.f32 %v606, %v738
        %v755 = vmul.f32 %v608, %v739
        %v756 = vmul.f32 %v557, %v740
        %v757 = vmul.f32 %v559, %v741
        %v758 = vmul.f32 %v610, %v742
        %v759 = vmul.f32 %v612, %v743
        %v760 = vmul.f32 %v563, %v744
        %v761 = vmul.f32 %v565, %v745
        %v762 = vmul.f32 %v616, %v746
        %v763 = vmul.f32 %v618, %v747
        %v764 = vmul.f32 %v567, %v748
        %v765 = vmul.f32 %v569, %v749
        %v766 = vmul.f32 %v620, %v750
        %v767 = vmul.f32 %v622, %v751
        %v768 = vpack.c.bf16 %v756, %v752
        %v769 = vpack.c.bf16 %v757, %v753
        %v770 = vpack.c.bf16 %v758, %v754
        %v771 = vpack.c.bf16 %v759, %v755
        %v772 = vpack.c.bf16 %v764, %v760
        %v773 = vpack.c.bf16 %v765, %v761
        %v774 = vpack.c.bf16 %v766, %v762
        %v775 = vpack.c.bf16 %v767, %v763
        %v776 = vld [vmem:[#allocation6] sm:$0xff]
        %v777 = vld [vmem:[#allocation6 + $0x8] sm:$0xff]
        %v778 = vld [vmem:[#allocation6 + $0x10] sm:$0xff]
        %v779 = vld [vmem:[#allocation6 + $0x18] sm:$0xff]
        %v780 = vld [vmem:[#allocation6 + $0x20] sm:$0xff]
        %v781 = vld [vmem:[#allocation6 + $0x28] sm:$0xff]
        %v782 = vld [vmem:[#allocation6 + $0x30] sm:$0xff]
        %v783 = vld [vmem:[#allocation6 + $0x38] sm:$0xff]
        %v784 = vld [vmem:[#allocation6 + $0x40] sm:$0xff]
        %v785 = vld [vmem:[#allocation6 + $0x48] sm:$0xff]
        %v786 = vld [vmem:[#allocation6 + $0x50] sm:$0xff]
        %v787 = vld [vmem:[#allocation6 + $0x58] sm:$0xff]
        %v788 = vld [vmem:[#allocation6 + $0x60] sm:$0xff]
        %v789 = vld [vmem:[#allocation6 + $0x68] sm:$0xff]
        %v790 = vld [vmem:[#allocation6 + $0x70] sm:$0xff]
        %v791 = vld [vmem:[#allocation6 + $0x78] sm:$0xff]
        %v792 = vld [vmem:[#allocation6 + $0x80] sm:$0xff]
        %v793 = vld [vmem:[#allocation6 + $0x88] sm:$0xff]
        %v794 = vld [vmem:[#allocation6 + $0x90] sm:$0xff]
        %v795 = vld [vmem:[#allocation6 + $0x98] sm:$0xff]
        %v796 = vld [vmem:[#allocation6 + $0xa0] sm:$0xff]
        %v797 = vld [vmem:[#allocation6 + $0xa8] sm:$0xff]
        %v798 = vld [vmem:[#allocation6 + $0xb0] sm:$0xff]
        %v799 = vld [vmem:[#allocation6 + $0xb8] sm:$0xff]
        %v800 = vld [vmem:[#allocation6 + $0xc0] sm:$0xff]
        %v801 = vld [vmem:[#allocation6 + $0xc8] sm:$0xff]
        %v802 = vld [vmem:[#allocation6 + $0xd0] sm:$0xff]
        %v803 = vld [vmem:[#allocation6 + $0xd8] sm:$0xff]
        %v804 = vld [vmem:[#allocation6 + $0xe0] sm:$0xff]
        %v805 = vld [vmem:[#allocation6 + $0xe8] sm:$0xff]
        %v806 = vld [vmem:[#allocation6 + $0xf0] sm:$0xff]
        %v807 = vld [vmem:[#allocation6 + $0xf8] sm:$0xff]
        %v808 = vld [vmem:[#allocation6 + $0x100] sm:$0xff]
        %v809 = vld [vmem:[#allocation6 + $0x108] sm:$0xff]
        %v810 = vld [vmem:[#allocation6 + $0x110] sm:$0xff]
        %v811 = vld [vmem:[#allocation6 + $0x118] sm:$0xff]
        %v812 = vld [vmem:[#allocation6 + $0x120] sm:$0xff]
        %v813 = vld [vmem:[#allocation6 + $0x128] sm:$0xff]
        %v814 = vld [vmem:[#allocation6 + $0x130] sm:$0xff]
        %v815 = vld [vmem:[#allocation6 + $0x138] sm:$0xff]
        %v816 = vld [vmem:[#allocation6 + $0x140] sm:$0xff]
        %v817 = vld [vmem:[#allocation6 + $0x148] sm:$0xff]
        %v818 = vld [vmem:[#allocation6 + $0x150] sm:$0xff]
        %v819 = vld [vmem:[#allocation6 + $0x158] sm:$0xff]
        %v820 = vld [vmem:[#allocation6 + $0x160] sm:$0xff]
        %v821 = vld [vmem:[#allocation6 + $0x168] sm:$0xff]
        %v822 = vld [vmem:[#allocation6 + $0x170] sm:$0xff]
        %v823 = vld [vmem:[#allocation6 + $0x178] sm:$0xff]
        %v824 = vld [vmem:[#allocation6 + $0x180] sm:$0xff]
        %v825 = vld [vmem:[#allocation6 + $0x188] sm:$0xff]
        %v826 = vld [vmem:[#allocation6 + $0x190] sm:$0xff]
        %v827 = vld [vmem:[#allocation6 + $0x198] sm:$0xff]
        %v828 = vld [vmem:[#allocation6 + $0x1a0] sm:$0xff]
        %v829 = vld [vmem:[#allocation6 + $0x1a8] sm:$0xff]
        %v830 = vld [vmem:[#allocation6 + $0x1b0] sm:$0xff]
        %v831 = vld [vmem:[#allocation6 + $0x1b8] sm:$0xff]
        %v832 = vld [vmem:[#allocation6 + $0x1c0] sm:$0xff]
        %v833 = vld [vmem:[#allocation6 + $0x1c8] sm:$0xff]
        %v834 = vld [vmem:[#allocation6 + $0x1d0] sm:$0xff]
        %v835 = vld [vmem:[#allocation6 + $0x1d8] sm:$0xff]
        %v836 = vld [vmem:[#allocation6 + $0x1e0] sm:$0xff]
        %v837 = vld [vmem:[#allocation6 + $0x1e8] sm:$0xff]
        %v838 = vld [vmem:[#allocation6 + $0x1f0] sm:$0xff]
        %v839 = vld [vmem:[#allocation6 + $0x1f8] sm:$0xff]
        %v840 = vld [vmem:[#allocation6 + $0x200] sm:$0xff]
        %v841 = vld [vmem:[#allocation6 + $0x208] sm:$0xff]
        %v842 = vld [vmem:[#allocation6 + $0x210] sm:$0xff]
        %v843 = vld [vmem:[#allocation6 + $0x218] sm:$0xff]
        %v844 = vld [vmem:[#allocation6 + $0x220] sm:$0xff]
        %v845 = vld [vmem:[#allocation6 + $0x228] sm:$0xff]
        %v846 = vld [vmem:[#allocation6 + $0x230] sm:$0xff]
        %v847 = vld [vmem:[#allocation6 + $0x238] sm:$0xff]
        %v848 = vld [vmem:[#allocation6 + $0x240] sm:$0xff]
        %v849 = vld [vmem:[#allocation6 + $0x248] sm:$0xff]
        %v850 = vld [vmem:[#allocation6 + $0x250] sm:$0xff]
        %v851 = vld [vmem:[#allocation6 + $0x258] sm:$0xff]
        %v852 = vld [vmem:[#allocation6 + $0x260] sm:$0xff]
        %v853 = vld [vmem:[#allocation6 + $0x268] sm:$0xff]
        %v854 = vld [vmem:[#allocation6 + $0x270] sm:$0xff]
        %v855 = vld [vmem:[#allocation6 + $0x278] sm:$0xff]
        %v856 = vld [vmem:[#allocation6 + $0x280] sm:$0xff]
        %v857 = vld [vmem:[#allocation6 + $0x288] sm:$0xff]
        %v858 = vld [vmem:[#allocation6 + $0x290] sm:$0xff]
        %v859 = vld [vmem:[#allocation6 + $0x298] sm:$0xff]
        %v860 = vld [vmem:[#allocation6 + $0x2a0] sm:$0xff]
        %v861 = vld [vmem:[#allocation6 + $0x2a8] sm:$0xff]
        %v862 = vld [vmem:[#allocation6 + $0x2b0] sm:$0xff]
        %v863 = vld [vmem:[#allocation6 + $0x2b8] sm:$0xff]
        %v864 = vld [vmem:[#allocation6 + $0x2c0] sm:$0xff]
        %v865 = vld [vmem:[#allocation6 + $0x2c8] sm:$0xff]
        %v866 = vld [vmem:[#allocation6 + $0x2d0] sm:$0xff]
        %v867 = vld [vmem:[#allocation6 + $0x2d8] sm:$0xff]
        %v868 = vld [vmem:[#allocation6 + $0x2e0] sm:$0xff]
        %v869 = vld [vmem:[#allocation6 + $0x2e8] sm:$0xff]
        %v870 = vld [vmem:[#allocation6 + $0x2f0] sm:$0xff]
        %v871 = vld [vmem:[#allocation6 + $0x2f8] sm:$0xff]
        %v872 = vld [vmem:[#allocation6 + $0x300] sm:$0xff]
        %v873 = vld [vmem:[#allocation6 + $0x308] sm:$0xff]
        %v874 = vld [vmem:[#allocation6 + $0x310] sm:$0xff]
        %v875 = vld [vmem:[#allocation6 + $0x318] sm:$0xff]
        %v876 = vld [vmem:[#allocation6 + $0x320] sm:$0xff]
        %v877 = vld [vmem:[#allocation6 + $0x328] sm:$0xff]
        %v878 = vld [vmem:[#allocation6 + $0x330] sm:$0xff]
        %v879 = vld [vmem:[#allocation6 + $0x338] sm:$0xff]
        %v880 = vld [vmem:[#allocation6 + $0x340] sm:$0xff]
        %v881 = vld [vmem:[#allocation6 + $0x348] sm:$0xff]
        %v882 = vld [vmem:[#allocation6 + $0x350] sm:$0xff]
        %v883 = vld [vmem:[#allocation6 + $0x358] sm:$0xff]
        %v884 = vld [vmem:[#allocation6 + $0x360] sm:$0xff]
        %v885 = vld [vmem:[#allocation6 + $0x368] sm:$0xff]
        %v886 = vld [vmem:[#allocation6 + $0x370] sm:$0xff]
        %v887 = vld [vmem:[#allocation6 + $0x378] sm:$0xff]
        %v888 = vld [vmem:[#allocation6 + $0x380] sm:$0xff]
        %v889 = vld [vmem:[#allocation6 + $0x388] sm:$0xff]
        %v890 = vld [vmem:[#allocation6 + $0x390] sm:$0xff]
        %v891 = vld [vmem:[#allocation6 + $0x398] sm:$0xff]
        %v892 = vld [vmem:[#allocation6 + $0x3a0] sm:$0xff]
        %v893 = vld [vmem:[#allocation6 + $0x3a8] sm:$0xff]
        %v894 = vld [vmem:[#allocation6 + $0x3b0] sm:$0xff]
        %v895 = vld [vmem:[#allocation6 + $0x3b8] sm:$0xff]
        %v896 = vld [vmem:[#allocation6 + $0x3c0] sm:$0xff]
        %v897 = vld [vmem:[#allocation6 + $0x3c8] sm:$0xff]
        %v898 = vld [vmem:[#allocation6 + $0x3d0] sm:$0xff]
        %v899 = vld [vmem:[#allocation6 + $0x3d8] sm:$0xff]
        %v900 = vld [vmem:[#allocation6 + $0x3e0] sm:$0xff]
        %v901 = vld [vmem:[#allocation6 + $0x3e8] sm:$0xff]
        %v902 = vld [vmem:[#allocation6 + $0x3f0] sm:$0xff]
        %v903 = vld [vmem:[#allocation6 + $0x3f8] sm:$0xff]
        %v904 = vld [vmem:[#allocation6 + $0x400] sm:$0xff]
        %v905 = vld [vmem:[#allocation6 + $0x408] sm:$0xff]
        %v906 = vld [vmem:[#allocation6 + $0x410] sm:$0xff]
        %v907 = vld [vmem:[#allocation6 + $0x418] sm:$0xff]
        %v908 = vld [vmem:[#allocation6 + $0x420] sm:$0xff]
        %v909 = vld [vmem:[#allocation6 + $0x428] sm:$0xff]
        %v910 = vld [vmem:[#allocation6 + $0x430] sm:$0xff]
        %v911 = vld [vmem:[#allocation6 + $0x438] sm:$0xff]
        %v912 = vld [vmem:[#allocation6 + $0x440] sm:$0xff]
        %v913 = vld [vmem:[#allocation6 + $0x448] sm:$0xff]
        %v914 = vld [vmem:[#allocation6 + $0x450] sm:$0xff]
        %v915 = vld [vmem:[#allocation6 + $0x458] sm:$0xff]
        %v916 = vld [vmem:[#allocation6 + $0x460] sm:$0xff]
        %v917 = vld [vmem:[#allocation6 + $0x468] sm:$0xff]
        %v918 = vld [vmem:[#allocation6 + $0x470] sm:$0xff]
        %v919 = vld [vmem:[#allocation6 + $0x478] sm:$0xff]
        %v920 = vld [vmem:[#allocation6 + $0x480] sm:$0xff]
        %v921 = vld [vmem:[#allocation6 + $0x488] sm:$0xff]
        %v922 = vld [vmem:[#allocation6 + $0x490] sm:$0xff]
        %v923 = vld [vmem:[#allocation6 + $0x498] sm:$0xff]
        %v924 = vld [vmem:[#allocation6 + $0x4a0] sm:$0xff]
        %v925 = vld [vmem:[#allocation6 + $0x4a8] sm:$0xff]
        %v926 = vld [vmem:[#allocation6 + $0x4b0] sm:$0xff]
        %v927 = vld [vmem:[#allocation6 + $0x4b8] sm:$0xff]
        %v928 = vld [vmem:[#allocation6 + $0x4c0] sm:$0xff]
        %v929 = vld [vmem:[#allocation6 + $0x4c8] sm:$0xff]
        %v930 = vld [vmem:[#allocation6 + $0x4d0] sm:$0xff]
        %v931 = vld [vmem:[#allocation6 + $0x4d8] sm:$0xff]
        %v932 = vld [vmem:[#allocation6 + $0x4e0] sm:$0xff]
        %v933 = vld [vmem:[#allocation6 + $0x4e8] sm:$0xff]
        %v934 = vld [vmem:[#allocation6 + $0x4f0] sm:$0xff]
        %v935 = vld [vmem:[#allocation6 + $0x4f8] sm:$0xff]
        %v936 = vld [vmem:[#allocation6 + $0x500] sm:$0xff]
        %v937 = vld [vmem:[#allocation6 + $0x508] sm:$0xff]
        %v938 = vld [vmem:[#allocation6 + $0x510] sm:$0xff]
        %v939 = vld [vmem:[#allocation6 + $0x518] sm:$0xff]
        %v940 = vld [vmem:[#allocation6 + $0x520] sm:$0xff]
        %v941 = vld [vmem:[#allocation6 + $0x528] sm:$0xff]
        %v942 = vld [vmem:[#allocation6 + $0x530] sm:$0xff]
        %v943 = vld [vmem:[#allocation6 + $0x538] sm:$0xff]
        %v944 = vld [vmem:[#allocation6 + $0x540] sm:$0xff]
        %v945 = vld [vmem:[#allocation6 + $0x548] sm:$0xff]
        %v946 = vld [vmem:[#allocation6 + $0x550] sm:$0xff]
        %v947 = vld [vmem:[#allocation6 + $0x558] sm:$0xff]
        %v948 = vld [vmem:[#allocation6 + $0x560] sm:$0xff]
        %v949 = vld [vmem:[#allocation6 + $0x568] sm:$0xff]
        %v950 = vld [vmem:[#allocation6 + $0x570] sm:$0xff]
        %v951 = vld [vmem:[#allocation6 + $0x578] sm:$0xff]
        %v952 = vld [vmem:[#allocation6 + $0x580] sm:$0xff]
        %v953 = vld [vmem:[#allocation6 + $0x588] sm:$0xff]
        %v954 = vld [vmem:[#allocation6 + $0x590] sm:$0xff]
        %v955 = vld [vmem:[#allocation6 + $0x598] sm:$0xff]
        %v956 = vld [vmem:[#allocation6 + $0x5a0] sm:$0xff]
        %v957 = vld [vmem:[#allocation6 + $0x5a8] sm:$0xff]
        %v958 = vld [vmem:[#allocation6 + $0x5b0] sm:$0xff]
        %v959 = vld [vmem:[#allocation6 + $0x5b8] sm:$0xff]
        %v960 = vld [vmem:[#allocation6 + $0x5c0] sm:$0xff]
        %v961 = vld [vmem:[#allocation6 + $0x5c8] sm:$0xff]
        %v962 = vld [vmem:[#allocation6 + $0x5d0] sm:$0xff]
        %v963 = vld [vmem:[#allocation6 + $0x5d8] sm:$0xff]
        %v964 = vld [vmem:[#allocation6 + $0x5e0] sm:$0xff]
        %v965 = vld [vmem:[#allocation6 + $0x5e8] sm:$0xff]
        %v966 = vld [vmem:[#allocation6 + $0x5f0] sm:$0xff]
        %v967 = vld [vmem:[#allocation6 + $0x5f8] sm:$0xff]
        %v968 = vld [vmem:[#allocation6 + $0x600] sm:$0xff]
        %v969 = vld [vmem:[#allocation6 + $0x608] sm:$0xff]
        %v970 = vld [vmem:[#allocation6 + $0x610] sm:$0xff]
        %v971 = vld [vmem:[#allocation6 + $0x618] sm:$0xff]
        %v972 = vld [vmem:[#allocation6 + $0x620] sm:$0xff]
        %v973 = vld [vmem:[#allocation6 + $0x628] sm:$0xff]
        %v974 = vld [vmem:[#allocation6 + $0x630] sm:$0xff]
        %v975 = vld [vmem:[#allocation6 + $0x638] sm:$0xff]
        %v976 = vld [vmem:[#allocation6 + $0x640] sm:$0xff]
        %v977 = vld [vmem:[#allocation6 + $0x648] sm:$0xff]
        %v978 = vld [vmem:[#allocation6 + $0x650] sm:$0xff]
        %v979 = vld [vmem:[#allocation6 + $0x658] sm:$0xff]
        %v980 = vld [vmem:[#allocation6 + $0x660] sm:$0xff]
        %v981 = vld [vmem:[#allocation6 + $0x668] sm:$0xff]
        %v982 = vld [vmem:[#allocation6 + $0x670] sm:$0xff]
        %v983 = vld [vmem:[#allocation6 + $0x678] sm:$0xff]
        %v984 = vld [vmem:[#allocation6 + $0x680] sm:$0xff]
        %v985 = vld [vmem:[#allocation6 + $0x688] sm:$0xff]
        %v986 = vld [vmem:[#allocation6 + $0x690] sm:$0xff]
        %v987 = vld [vmem:[#allocation6 + $0x698] sm:$0xff]
        %v988 = vld [vmem:[#allocation6 + $0x6a0] sm:$0xff]
        %v989 = vld [vmem:[#allocation6 + $0x6a8] sm:$0xff]
        %v990 = vld [vmem:[#allocation6 + $0x6b0] sm:$0xff]
        %v991 = vld [vmem:[#allocation6 + $0x6b8] sm:$0xff]
        %v992 = vld [vmem:[#allocation6 + $0x6c0] sm:$0xff]
        %v993 = vld [vmem:[#allocation6 + $0x6c8] sm:$0xff]
        %v994 = vld [vmem:[#allocation6 + $0x6d0] sm:$0xff]
        %v995 = vld [vmem:[#allocation6 + $0x6d8] sm:$0xff]
        %v996 = vld [vmem:[#allocation6 + $0x6e0] sm:$0xff]
        %v997 = vld [vmem:[#allocation6 + $0x6e8] sm:$0xff]
        %v998 = vld [vmem:[#allocation6 + $0x6f0] sm:$0xff]
        %v999 = vld [vmem:[#allocation6 + $0x6f8] sm:$0xff]
        %v1000 = vld [vmem:[#allocation6 + $0x700] sm:$0xff]
        %v1001 = vld [vmem:[#allocation6 + $0x708] sm:$0xff]
        %v1002 = vld [vmem:[#allocation6 + $0x710] sm:$0xff]
        %v1003 = vld [vmem:[#allocation6 + $0x718] sm:$0xff]
        %v1004 = vld [vmem:[#allocation6 + $0x720] sm:$0xff]
        %v1005 = vld [vmem:[#allocation6 + $0x728] sm:$0xff]
        %v1006 = vld [vmem:[#allocation6 + $0x730] sm:$0xff]
        %v1007 = vld [vmem:[#allocation6 + $0x738] sm:$0xff]
        %v1008 = vld [vmem:[#allocation6 + $0x740] sm:$0xff]
        %v1009 = vld [vmem:[#allocation6 + $0x748] sm:$0xff]
        %v1010 = vld [vmem:[#allocation6 + $0x750] sm:$0xff]
        %v1011 = vld [vmem:[#allocation6 + $0x758] sm:$0xff]
        %v1012 = vld [vmem:[#allocation6 + $0x760] sm:$0xff]
        %v1013 = vld [vmem:[#allocation6 + $0x768] sm:$0xff]
        %v1014 = vld [vmem:[#allocation6 + $0x770] sm:$0xff]
        %v1015 = vld [vmem:[#allocation6 + $0x778] sm:$0xff]
        %v1016 = vld [vmem:[#allocation6 + $0x780] sm:$0xff]
        %v1017 = vld [vmem:[#allocation6 + $0x788] sm:$0xff]
        %v1018 = vld [vmem:[#allocation6 + $0x790] sm:$0xff]
        %v1019 = vld [vmem:[#allocation6 + $0x798] sm:$0xff]
        %v1020 = vld [vmem:[#allocation6 + $0x7a0] sm:$0xff]
        %v1021 = vld [vmem:[#allocation6 + $0x7a8] sm:$0xff]
        %v1022 = vld [vmem:[#allocation6 + $0x7b0] sm:$0xff]
        %v1023 = vld [vmem:[#allocation6 + $0x7b8] sm:$0xff]
        %v1024 = vld [vmem:[#allocation6 + $0x7c0] sm:$0xff]
        %v1025 = vld [vmem:[#allocation6 + $0x7c8] sm:$0xff]
        %v1026 = vld [vmem:[#allocation6 + $0x7d0] sm:$0xff]
        %v1027 = vld [vmem:[#allocation6 + $0x7d8] sm:$0xff]
        %v1028 = vld [vmem:[#allocation6 + $0x7e0] sm:$0xff]
        %v1029 = vld [vmem:[#allocation6 + $0x7e8] sm:$0xff]
        %v1030 = vld [vmem:[#allocation6 + $0x7f0] sm:$0xff]
        %v1031 = vld [vmem:[#allocation6 + $0x7f8] sm:$0xff]
        %v1033 = vlaneseq
        %v1034 = vshrl.u32 %v1033, 7
        %v1035 = vsub.s32 0, %v1034
        %v1036 = vrot.slane %v304, %v1035
        %v1037 = vlaneseq
        %v1038 = vshrl.u32 %v1037, 7
        %v1039 = vsub.s32 1, %v1038
        %v1040 = vrot.slane %v304, %v1039
        %v1041 = vlaneseq
        %v1042 = vshrl.u32 %v1041, 7
        %v1043 = vsub.s32 2, %v1042
        %v1044 = vrot.slane %v304, %v1043
        %v1045 = vlaneseq
        %v1046 = vshrl.u32 %v1045, 7
        %v1047 = vsub.s32 3, %v1046
        %v1048 = vrot.slane %v304, %v1047
        %v1049 = vlaneseq
        %v1050 = vshrl.u32 %v1049, 7
        %v1051 = vsub.s32 4, %v1050
        %v1052 = vrot.slane %v304, %v1051
        %v1053 = vlaneseq
        %v1054 = vshrl.u32 %v1053, 7
        %v1055 = vsub.s32 5, %v1054
        %v1056 = vrot.slane %v304, %v1055
        %v1057 = vlaneseq
        %v1058 = vshrl.u32 %v1057, 7
        %v1059 = vsub.s32 6, %v1058
        %v1060 = vrot.slane %v304, %v1059
        %v1061 = vlaneseq
        %v1062 = vshrl.u32 %v1061, 7
        %v1063 = vsub.s32 7, %v1062
        %v1064 = vrot.slane %v304, %v1063
        %v1329 = vunpack.c.l.b16 %v776
        %v1330 = vunpack.c.h.b16 %v776
        %v1331 = vunpack.c.l.b16 %v777
        %v1332 = vunpack.c.h.b16 %v777
        %v1333 = vunpack.c.l.b16 %v778
        %v1334 = vunpack.c.h.b16 %v778
        %v1335 = vunpack.c.l.b16 %v779
        %v1336 = vunpack.c.h.b16 %v779
        %v1337 = vunpack.c.l.b16 %v780
        %v1338 = vunpack.c.h.b16 %v780
        %v1339 = vunpack.c.l.b16 %v781
        %v1340 = vunpack.c.h.b16 %v781
        %v1341 = vunpack.c.l.b16 %v782
        %v1342 = vunpack.c.h.b16 %v782
        %v1343 = vunpack.c.l.b16 %v783
        %v1344 = vunpack.c.h.b16 %v783
        %v1345 = vunpack.c.l.b16 %v784
        %v1346 = vunpack.c.h.b16 %v784
        %v1347 = vunpack.c.l.b16 %v785
        %v1348 = vunpack.c.h.b16 %v785
        %v1349 = vunpack.c.l.b16 %v786
        %v1350 = vunpack.c.h.b16 %v786
        %v1351 = vunpack.c.l.b16 %v787
        %v1352 = vunpack.c.h.b16 %v787
        %v1353 = vunpack.c.l.b16 %v788
        %v1354 = vunpack.c.h.b16 %v788
        %v1355 = vunpack.c.l.b16 %v789
        %v1356 = vunpack.c.h.b16 %v789
        %v1357 = vunpack.c.l.b16 %v790
        %v1358 = vunpack.c.h.b16 %v790
        %v1359 = vunpack.c.l.b16 %v791
        %v1360 = vunpack.c.h.b16 %v791
        %v1361 = vunpack.c.l.b16 %v792
        %v1362 = vunpack.c.h.b16 %v792
        %v1363 = vunpack.c.l.b16 %v793
        %v1364 = vunpack.c.h.b16 %v793
        %v1365 = vunpack.c.l.b16 %v794
        %v1366 = vunpack.c.h.b16 %v794
        %v1367 = vunpack.c.l.b16 %v795
        %v1368 = vunpack.c.h.b16 %v795
        %v1369 = vunpack.c.l.b16 %v796
        %v1370 = vunpack.c.h.b16 %v796
        %v1371 = vunpack.c.l.b16 %v797
        %v1372 = vunpack.c.h.b16 %v797
        %v1373 = vunpack.c.l.b16 %v798
        %v1374 = vunpack.c.h.b16 %v798
        %v1375 = vunpack.c.l.b16 %v799
        %v1376 = vunpack.c.h.b16 %v799
        %v1377 = vunpack.c.l.b16 %v800
        %v1378 = vunpack.c.h.b16 %v800
        %v1379 = vunpack.c.l.b16 %v801
        %v1380 = vunpack.c.h.b16 %v801
        %v1381 = vunpack.c.l.b16 %v802
        %v1382 = vunpack.c.h.b16 %v802
        %v1383 = vunpack.c.l.b16 %v803
        %v1384 = vunpack.c.h.b16 %v803
        %v1385 = vunpack.c.l.b16 %v804
        %v1386 = vunpack.c.h.b16 %v804
        %v1387 = vunpack.c.l.b16 %v805
        %v1388 = vunpack.c.h.b16 %v805
        %v1389 = vunpack.c.l.b16 %v806
        %v1390 = vunpack.c.h.b16 %v806
        %v1391 = vunpack.c.l.b16 %v807
        %v1392 = vunpack.c.h.b16 %v807
        %v1393 = vunpack.c.l.b16 %v808
        %v1394 = vunpack.c.h.b16 %v808
        %v1395 = vunpack.c.l.b16 %v809
        %v1396 = vunpack.c.h.b16 %v809
        %v1397 = vunpack.c.l.b16 %v810
        %v1398 = vunpack.c.h.b16 %v810
        %v1399 = vunpack.c.l.b16 %v811
        %v1400 = vunpack.c.h.b16 %v811
        %v1401 = vunpack.c.l.b16 %v812
        %v1402 = vunpack.c.h.b16 %v812
        %v1403 = vunpack.c.l.b16 %v813
        %v1404 = vunpack.c.h.b16 %v813
        %v1405 = vunpack.c.l.b16 %v814
        %v1406 = vunpack.c.h.b16 %v814
        %v1407 = vunpack.c.l.b16 %v815
        %v1408 = vunpack.c.h.b16 %v815
        %v1409 = vunpack.c.l.b16 %v816
        %v1410 = vunpack.c.h.b16 %v816
        %v1411 = vunpack.c.l.b16 %v817
        %v1412 = vunpack.c.h.b16 %v817
        %v1413 = vunpack.c.l.b16 %v818
        %v1414 = vunpack.c.h.b16 %v818
        %v1415 = vunpack.c.l.b16 %v819
        %v1416 = vunpack.c.h.b16 %v819
        %v1417 = vunpack.c.l.b16 %v820
        %v1418 = vunpack.c.h.b16 %v820
        %v1419 = vunpack.c.l.b16 %v821
        %v1420 = vunpack.c.h.b16 %v821
        %v1421 = vunpack.c.l.b16 %v822
        %v1422 = vunpack.c.h.b16 %v822
        %v1423 = vunpack.c.l.b16 %v823
        %v1424 = vunpack.c.h.b16 %v823
        %v1425 = vunpack.c.l.b16 %v824
        %v1426 = vunpack.c.h.b16 %v824
        %v1427 = vunpack.c.l.b16 %v825
        %v1428 = vunpack.c.h.b16 %v825
        %v1429 = vunpack.c.l.b16 %v826
        %v1430 = vunpack.c.h.b16 %v826
        %v1431 = vunpack.c.l.b16 %v827
        %v1432 = vunpack.c.h.b16 %v827
        %v1433 = vunpack.c.l.b16 %v828
        %v1434 = vunpack.c.h.b16 %v828
        %v1435 = vunpack.c.l.b16 %v829
        %v1436 = vunpack.c.h.b16 %v829
        %v1437 = vunpack.c.l.b16 %v830
        %v1438 = vunpack.c.h.b16 %v830
        %v1439 = vunpack.c.l.b16 %v831
        %v1440 = vunpack.c.h.b16 %v831
        %v1441 = vunpack.c.l.b16 %v832
        %v1442 = vunpack.c.h.b16 %v832
        %v1443 = vunpack.c.l.b16 %v833
        %v1444 = vunpack.c.h.b16 %v833
        %v1445 = vunpack.c.l.b16 %v834
        %v1446 = vunpack.c.h.b16 %v834
        %v1447 = vunpack.c.l.b16 %v835
        %v1448 = vunpack.c.h.b16 %v835
        %v1449 = vunpack.c.l.b16 %v836
        %v1450 = vunpack.c.h.b16 %v836
        %v1451 = vunpack.c.l.b16 %v837
        %v1452 = vunpack.c.h.b16 %v837
        %v1453 = vunpack.c.l.b16 %v838
        %v1454 = vunpack.c.h.b16 %v838
        %v1455 = vunpack.c.l.b16 %v839
        %v1456 = vunpack.c.h.b16 %v839
        %v1457 = vunpack.c.l.b16 %v840
        %v1458 = vunpack.c.h.b16 %v840
        %v1459 = vunpack.c.l.b16 %v841
        %v1460 = vunpack.c.h.b16 %v841
        %v1461 = vunpack.c.l.b16 %v842
        %v1462 = vunpack.c.h.b16 %v842
        %v1463 = vunpack.c.l.b16 %v843
        %v1464 = vunpack.c.h.b16 %v843
        %v1465 = vunpack.c.l.b16 %v844
        %v1466 = vunpack.c.h.b16 %v844
        %v1467 = vunpack.c.l.b16 %v845
        %v1468 = vunpack.c.h.b16 %v845
        %v1469 = vunpack.c.l.b16 %v846
        %v1470 = vunpack.c.h.b16 %v846
        %v1471 = vunpack.c.l.b16 %v847
        %v1472 = vunpack.c.h.b16 %v847
        %v1473 = vunpack.c.l.b16 %v848
        %v1474 = vunpack.c.h.b16 %v848
        %v1475 = vunpack.c.l.b16 %v849
        %v1476 = vunpack.c.h.b16 %v849
        %v1477 = vunpack.c.l.b16 %v850
        %v1478 = vunpack.c.h.b16 %v850
        %v1479 = vunpack.c.l.b16 %v851
        %v1480 = vunpack.c.h.b16 %v851
        %v1481 = vunpack.c.l.b16 %v852
        %v1482 = vunpack.c.h.b16 %v852
        %v1483 = vunpack.c.l.b16 %v853
        %v1484 = vunpack.c.h.b16 %v853
        %v1485 = vunpack.c.l.b16 %v854
        %v1486 = vunpack.c.h.b16 %v854
        %v1487 = vunpack.c.l.b16 %v855
        %v1488 = vunpack.c.h.b16 %v855
        %v1489 = vunpack.c.l.b16 %v856
        %v1490 = vunpack.c.h.b16 %v856
        %v1491 = vunpack.c.l.b16 %v857
        %v1492 = vunpack.c.h.b16 %v857
        %v1493 = vunpack.c.l.b16 %v858
        %v1494 = vunpack.c.h.b16 %v858
        %v1495 = vunpack.c.l.b16 %v859
        %v1496 = vunpack.c.h.b16 %v859
        %v1497 = vunpack.c.l.b16 %v860
        %v1498 = vunpack.c.h.b16 %v860
        %v1499 = vunpack.c.l.b16 %v861
        %v1500 = vunpack.c.h.b16 %v861
        %v1501 = vunpack.c.l.b16 %v862
        %v1502 = vunpack.c.h.b16 %v862
        %v1503 = vunpack.c.l.b16 %v863
        %v1504 = vunpack.c.h.b16 %v863
        %v1505 = vunpack.c.l.b16 %v864
        %v1506 = vunpack.c.h.b16 %v864
        %v1507 = vunpack.c.l.b16 %v865
        %v1508 = vunpack.c.h.b16 %v865
        %v1509 = vunpack.c.l.b16 %v866
        %v1510 = vunpack.c.h.b16 %v866
        %v1511 = vunpack.c.l.b16 %v867
        %v1512 = vunpack.c.h.b16 %v867
        %v1513 = vunpack.c.l.b16 %v868
        %v1514 = vunpack.c.h.b16 %v868
        %v1515 = vunpack.c.l.b16 %v869
        %v1516 = vunpack.c.h.b16 %v869
        %v1517 = vunpack.c.l.b16 %v870
        %v1518 = vunpack.c.h.b16 %v870
        %v1519 = vunpack.c.l.b16 %v871
        %v1520 = vunpack.c.h.b16 %v871
        %v1521 = vunpack.c.l.b16 %v872
        %v1522 = vunpack.c.h.b16 %v872
        %v1523 = vunpack.c.l.b16 %v873
        %v1524 = vunpack.c.h.b16 %v873
        %v1525 = vunpack.c.l.b16 %v874
        %v1526 = vunpack.c.h.b16 %v874
        %v1527 = vunpack.c.l.b16 %v875
        %v1528 = vunpack.c.h.b16 %v875
        %v1529 = vunpack.c.l.b16 %v876
        %v1530 = vunpack.c.h.b16 %v876
        %v1531 = vunpack.c.l.b16 %v877
        %v1532 = vunpack.c.h.b16 %v877
        %v1533 = vunpack.c.l.b16 %v878
        %v1534 = vunpack.c.h.b16 %v878
        %v1535 = vunpack.c.l.b16 %v879
        %v1536 = vunpack.c.h.b16 %v879
        %v1537 = vunpack.c.l.b16 %v880
        %v1538 = vunpack.c.h.b16 %v880
        %v1539 = vunpack.c.l.b16 %v881
        %v1540 = vunpack.c.h.b16 %v881
        %v1541 = vunpack.c.l.b16 %v882
        %v1542 = vunpack.c.h.b16 %v882
        %v1543 = vunpack.c.l.b16 %v883
        %v1544 = vunpack.c.h.b16 %v883
        %v1545 = vunpack.c.l.b16 %v884
        %v1546 = vunpack.c.h.b16 %v884
        %v1547 = vunpack.c.l.b16 %v885
        %v1548 = vunpack.c.h.b16 %v885
        %v1549 = vunpack.c.l.b16 %v886
        %v1550 = vunpack.c.h.b16 %v886
        %v1551 = vunpack.c.l.b16 %v887
        %v1552 = vunpack.c.h.b16 %v887
        %v1553 = vunpack.c.l.b16 %v888
        %v1554 = vunpack.c.h.b16 %v888
        %v1555 = vunpack.c.l.b16 %v889
        %v1556 = vunpack.c.h.b16 %v889
        %v1557 = vunpack.c.l.b16 %v890
        %v1558 = vunpack.c.h.b16 %v890
        %v1559 = vunpack.c.l.b16 %v891
        %v1560 = vunpack.c.h.b16 %v891
        %v1561 = vunpack.c.l.b16 %v892
        %v1562 = vunpack.c.h.b16 %v892
        %v1563 = vunpack.c.l.b16 %v893
        %v1564 = vunpack.c.h.b16 %v893
        %v1565 = vunpack.c.l.b16 %v894
        %v1566 = vunpack.c.h.b16 %v894
        %v1567 = vunpack.c.l.b16 %v895
        %v1568 = vunpack.c.h.b16 %v895
        %v1569 = vunpack.c.l.b16 %v896
        %v1570 = vunpack.c.h.b16 %v896
        %v1571 = vunpack.c.l.b16 %v897
        %v1572 = vunpack.c.h.b16 %v897
        %v1573 = vunpack.c.l.b16 %v898
        %v1574 = vunpack.c.h.b16 %v898
        %v1575 = vunpack.c.l.b16 %v899
        %v1576 = vunpack.c.h.b16 %v899
        %v1577 = vunpack.c.l.b16 %v900
        %v1578 = vunpack.c.h.b16 %v900
        %v1579 = vunpack.c.l.b16 %v901
        %v1580 = vunpack.c.h.b16 %v901
        %v1581 = vunpack.c.l.b16 %v902
        %v1582 = vunpack.c.h.b16 %v902
        %v1583 = vunpack.c.l.b16 %v903
        %v1584 = vunpack.c.h.b16 %v903
        %v1585 = vunpack.c.l.b16 %v904
        %v1586 = vunpack.c.h.b16 %v904
        %v1587 = vunpack.c.l.b16 %v905
        %v1588 = vunpack.c.h.b16 %v905
        %v1589 = vunpack.c.l.b16 %v906
        %v1590 = vunpack.c.h.b16 %v906
        %v1591 = vunpack.c.l.b16 %v907
        %v1592 = vunpack.c.h.b16 %v907
        %v1593 = vunpack.c.l.b16 %v908
        %v1594 = vunpack.c.h.b16 %v908
        %v1595 = vunpack.c.l.b16 %v909
        %v1596 = vunpack.c.h.b16 %v909
        %v1597 = vunpack.c.l.b16 %v910
        %v1598 = vunpack.c.h.b16 %v910
        %v1599 = vunpack.c.l.b16 %v911
        %v1600 = vunpack.c.h.b16 %v911
        %v1601 = vunpack.c.l.b16 %v912
        %v1602 = vunpack.c.h.b16 %v912
        %v1603 = vunpack.c.l.b16 %v913
        %v1604 = vunpack.c.h.b16 %v913
        %v1605 = vunpack.c.l.b16 %v914
        %v1606 = vunpack.c.h.b16 %v914
        %v1607 = vunpack.c.l.b16 %v915
        %v1608 = vunpack.c.h.b16 %v915
        %v1609 = vunpack.c.l.b16 %v916
        %v1610 = vunpack.c.h.b16 %v916
        %v1611 = vunpack.c.l.b16 %v917
        %v1612 = vunpack.c.h.b16 %v917
        %v1613 = vunpack.c.l.b16 %v918
        %v1614 = vunpack.c.h.b16 %v918
        %v1615 = vunpack.c.l.b16 %v919
        %v1616 = vunpack.c.h.b16 %v919
        %v1617 = vunpack.c.l.b16 %v920
        %v1618 = vunpack.c.h.b16 %v920
        %v1619 = vunpack.c.l.b16 %v921
        %v1620 = vunpack.c.h.b16 %v921
        %v1621 = vunpack.c.l.b16 %v922
        %v1622 = vunpack.c.h.b16 %v922
        %v1623 = vunpack.c.l.b16 %v923
        %v1624 = vunpack.c.h.b16 %v923
        %v1625 = vunpack.c.l.b16 %v924
        %v1626 = vunpack.c.h.b16 %v924
        %v1627 = vunpack.c.l.b16 %v925
        %v1628 = vunpack.c.h.b16 %v925
        %v1629 = vunpack.c.l.b16 %v926
        %v1630 = vunpack.c.h.b16 %v926
        %v1631 = vunpack.c.l.b16 %v927
        %v1632 = vunpack.c.h.b16 %v927
        %v1633 = vunpack.c.l.b16 %v928
        %v1634 = vunpack.c.h.b16 %v928
        %v1635 = vunpack.c.l.b16 %v929
        %v1636 = vunpack.c.h.b16 %v929
        %v1637 = vunpack.c.l.b16 %v930
        %v1638 = vunpack.c.h.b16 %v930
        %v1639 = vunpack.c.l.b16 %v931
        %v1640 = vunpack.c.h.b16 %v931
        %v1641 = vunpack.c.l.b16 %v932
        %v1642 = vunpack.c.h.b16 %v932
        %v1643 = vunpack.c.l.b16 %v933
        %v1644 = vunpack.c.h.b16 %v933
        %v1645 = vunpack.c.l.b16 %v934
        %v1646 = vunpack.c.h.b16 %v934
        %v1647 = vunpack.c.l.b16 %v935
        %v1648 = vunpack.c.h.b16 %v935
        %v1649 = vunpack.c.l.b16 %v936
        %v1650 = vunpack.c.h.b16 %v936
        %v1651 = vunpack.c.l.b16 %v937
        %v1652 = vunpack.c.h.b16 %v937
        %v1653 = vunpack.c.l.b16 %v938
        %v1654 = vunpack.c.h.b16 %v938
        %v1655 = vunpack.c.l.b16 %v939
        %v1656 = vunpack.c.h.b16 %v939
        %v1657 = vunpack.c.l.b16 %v940
        %v1658 = vunpack.c.h.b16 %v940
        %v1659 = vunpack.c.l.b16 %v941
        %v1660 = vunpack.c.h.b16 %v941
        %v1661 = vunpack.c.l.b16 %v942
        %v1662 = vunpack.c.h.b16 %v942
        %v1663 = vunpack.c.l.b16 %v943
        %v1664 = vunpack.c.h.b16 %v943
        %v1665 = vunpack.c.l.b16 %v944
        %v1666 = vunpack.c.h.b16 %v944
        %v1667 = vunpack.c.l.b16 %v945
        %v1668 = vunpack.c.h.b16 %v945
        %v1669 = vunpack.c.l.b16 %v946
        %v1670 = vunpack.c.h.b16 %v946
        %v1671 = vunpack.c.l.b16 %v947
        %v1672 = vunpack.c.h.b16 %v947
        %v1673 = vunpack.c.l.b16 %v948
        %v1674 = vunpack.c.h.b16 %v948
        %v1675 = vunpack.c.l.b16 %v949
        %v1676 = vunpack.c.h.b16 %v949
        %v1677 = vunpack.c.l.b16 %v950
        %v1678 = vunpack.c.h.b16 %v950
        %v1679 = vunpack.c.l.b16 %v951
        %v1680 = vunpack.c.h.b16 %v951
        %v1681 = vunpack.c.l.b16 %v952
        %v1682 = vunpack.c.h.b16 %v952
        %v1683 = vunpack.c.l.b16 %v953
        %v1684 = vunpack.c.h.b16 %v953
        %v1685 = vunpack.c.l.b16 %v954
        %v1686 = vunpack.c.h.b16 %v954
        %v1687 = vunpack.c.l.b16 %v955
        %v1688 = vunpack.c.h.b16 %v955
        %v1689 = vunpack.c.l.b16 %v956
        %v1690 = vunpack.c.h.b16 %v956
        %v1691 = vunpack.c.l.b16 %v957
        %v1692 = vunpack.c.h.b16 %v957
        %v1693 = vunpack.c.l.b16 %v958
        %v1694 = vunpack.c.h.b16 %v958
        %v1695 = vunpack.c.l.b16 %v959
        %v1696 = vunpack.c.h.b16 %v959
        %v1697 = vunpack.c.l.b16 %v960
        %v1698 = vunpack.c.h.b16 %v960
        %v1699 = vunpack.c.l.b16 %v961
        %v1700 = vunpack.c.h.b16 %v961
        %v1701 = vunpack.c.l.b16 %v962
        %v1702 = vunpack.c.h.b16 %v962
        %v1703 = vunpack.c.l.b16 %v963
        %v1704 = vunpack.c.h.b16 %v963
        %v1705 = vunpack.c.l.b16 %v964
        %v1706 = vunpack.c.h.b16 %v964
        %v1707 = vunpack.c.l.b16 %v965
        %v1708 = vunpack.c.h.b16 %v965
        %v1709 = vunpack.c.l.b16 %v966
        %v1710 = vunpack.c.h.b16 %v966
        %v1711 = vunpack.c.l.b16 %v967
        %v1712 = vunpack.c.h.b16 %v967
        %v1713 = vunpack.c.l.b16 %v968
        %v1714 = vunpack.c.h.b16 %v968
        %v1715 = vunpack.c.l.b16 %v969
        %v1716 = vunpack.c.h.b16 %v969
        %v1717 = vunpack.c.l.b16 %v970
        %v1718 = vunpack.c.h.b16 %v970
        %v1719 = vunpack.c.l.b16 %v971
        %v1720 = vunpack.c.h.b16 %v971
        %v1721 = vunpack.c.l.b16 %v972
        %v1722 = vunpack.c.h.b16 %v972
        %v1723 = vunpack.c.l.b16 %v973
        %v1724 = vunpack.c.h.b16 %v973
        %v1725 = vunpack.c.l.b16 %v974
        %v1726 = vunpack.c.h.b16 %v974
        %v1727 = vunpack.c.l.b16 %v975
        %v1728 = vunpack.c.h.b16 %v975
        %v1729 = vunpack.c.l.b16 %v976
        %v1730 = vunpack.c.h.b16 %v976
        %v1731 = vunpack.c.l.b16 %v977
        %v1732 = vunpack.c.h.b16 %v977
        %v1733 = vunpack.c.l.b16 %v978
        %v1734 = vunpack.c.h.b16 %v978
        %v1735 = vunpack.c.l.b16 %v979
        %v1736 = vunpack.c.h.b16 %v979
        %v1737 = vunpack.c.l.b16 %v980
        %v1738 = vunpack.c.h.b16 %v980
        %v1739 = vunpack.c.l.b16 %v981
        %v1740 = vunpack.c.h.b16 %v981
        %v1741 = vunpack.c.l.b16 %v982
        %v1742 = vunpack.c.h.b16 %v982
        %v1743 = vunpack.c.l.b16 %v983
        %v1744 = vunpack.c.h.b16 %v983
        %v1745 = vunpack.c.l.b16 %v984
        %v1746 = vunpack.c.h.b16 %v984
        %v1747 = vunpack.c.l.b16 %v985
        %v1748 = vunpack.c.h.b16 %v985
        %v1749 = vunpack.c.l.b16 %v986
        %v1750 = vunpack.c.h.b16 %v986
        %v1751 = vunpack.c.l.b16 %v987
        %v1752 = vunpack.c.h.b16 %v987
        %v1753 = vunpack.c.l.b16 %v988
        %v1754 = vunpack.c.h.b16 %v988
        %v1755 = vunpack.c.l.b16 %v989
        %v1756 = vunpack.c.h.b16 %v989
        %v1757 = vunpack.c.l.b16 %v990
        %v1758 = vunpack.c.h.b16 %v990
        %v1759 = vunpack.c.l.b16 %v991
        %v1760 = vunpack.c.h.b16 %v991
        %v1761 = vunpack.c.l.b16 %v992
        %v1762 = vunpack.c.h.b16 %v992
        %v1763 = vunpack.c.l.b16 %v993
        %v1764 = vunpack.c.h.b16 %v993
        %v1765 = vunpack.c.l.b16 %v994
        %v1766 = vunpack.c.h.b16 %v994
        %v1767 = vunpack.c.l.b16 %v995
        %v1768 = vunpack.c.h.b16 %v995
        %v1769 = vunpack.c.l.b16 %v996
        %v1770 = vunpack.c.h.b16 %v996
        %v1771 = vunpack.c.l.b16 %v997
        %v1772 = vunpack.c.h.b16 %v997
        %v1773 = vunpack.c.l.b16 %v998
        %v1774 = vunpack.c.h.b16 %v998
        %v1775 = vunpack.c.l.b16 %v999
        %v1776 = vunpack.c.h.b16 %v999
        %v1777 = vunpack.c.l.b16 %v1000
        %v1778 = vunpack.c.h.b16 %v1000
        %v1779 = vunpack.c.l.b16 %v1001
        %v1780 = vunpack.c.h.b16 %v1001
        %v1781 = vunpack.c.l.b16 %v1002
        %v1782 = vunpack.c.h.b16 %v1002
        %v1783 = vunpack.c.l.b16 %v1003
        %v1784 = vunpack.c.h.b16 %v1003
        %v1785 = vunpack.c.l.b16 %v1004
        %v1786 = vunpack.c.h.b16 %v1004
        %v1787 = vunpack.c.l.b16 %v1005
        %v1788 = vunpack.c.h.b16 %v1005
        %v1789 = vunpack.c.l.b16 %v1006
        %v1790 = vunpack.c.h.b16 %v1006
        %v1791 = vunpack.c.l.b16 %v1007
        %v1792 = vunpack.c.h.b16 %v1007
        %v1793 = vunpack.c.l.b16 %v1008
        %v1794 = vunpack.c.h.b16 %v1008
        %v1795 = vunpack.c.l.b16 %v1009
        %v1796 = vunpack.c.h.b16 %v1009
        %v1797 = vunpack.c.l.b16 %v1010
        %v1798 = vunpack.c.h.b16 %v1010
        %v1799 = vunpack.c.l.b16 %v1011
        %v1800 = vunpack.c.h.b16 %v1011
        %v1801 = vunpack.c.l.b16 %v1012
        %v1802 = vunpack.c.h.b16 %v1012
        %v1803 = vunpack.c.l.b16 %v1013
        %v1804 = vunpack.c.h.b16 %v1013
        %v1805 = vunpack.c.l.b16 %v1014
        %v1806 = vunpack.c.h.b16 %v1014
        %v1807 = vunpack.c.l.b16 %v1015
        %v1808 = vunpack.c.h.b16 %v1015
        %v1809 = vunpack.c.l.b16 %v1016
        %v1810 = vunpack.c.h.b16 %v1016
        %v1811 = vunpack.c.l.b16 %v1017
        %v1812 = vunpack.c.h.b16 %v1017
        %v1813 = vunpack.c.l.b16 %v1018
        %v1814 = vunpack.c.h.b16 %v1018
        %v1815 = vunpack.c.l.b16 %v1019
        %v1816 = vunpack.c.h.b16 %v1019
        %v1817 = vunpack.c.l.b16 %v1020
        %v1818 = vunpack.c.h.b16 %v1020
        %v1819 = vunpack.c.l.b16 %v1021
        %v1820 = vunpack.c.h.b16 %v1021
        %v1821 = vunpack.c.l.b16 %v1022
        %v1822 = vunpack.c.h.b16 %v1022
        %v1823 = vunpack.c.l.b16 %v1023
        %v1824 = vunpack.c.h.b16 %v1023
        %v1825 = vunpack.c.l.b16 %v1024
        %v1826 = vunpack.c.h.b16 %v1024
        %v1827 = vunpack.c.l.b16 %v1025
        %v1828 = vunpack.c.h.b16 %v1025
        %v1829 = vunpack.c.l.b16 %v1026
        %v1830 = vunpack.c.h.b16 %v1026
        %v1831 = vunpack.c.l.b16 %v1027
        %v1832 = vunpack.c.h.b16 %v1027
        %v1833 = vunpack.c.l.b16 %v1028
        %v1834 = vunpack.c.h.b16 %v1028
        %v1835 = vunpack.c.l.b16 %v1029
        %v1836 = vunpack.c.h.b16 %v1029
        %v1837 = vunpack.c.l.b16 %v1030
        %v1838 = vunpack.c.h.b16 %v1030
        %v1839 = vunpack.c.l.b16 %v1031
        %v1840 = vunpack.c.h.b16 %v1031
        %v1841 = vpack.c.b16 %v1337, %v1329
        %v1842 = vpack.c.b16 %v1338, %v1330
        %v1843 = vpack.c.b16 %v1339, %v1331
        %v1844 = vpack.c.b16 %v1340, %v1332
        %v1845 = vpack.c.b16 %v1341, %v1333
        %v1846 = vpack.c.b16 %v1342, %v1334
        %v1847 = vpack.c.b16 %v1343, %v1335
        %v1848 = vpack.c.b16 %v1344, %v1336
        %v1849 = vpack.c.b16 %v1353, %v1345
        %v1850 = vpack.c.b16 %v1354, %v1346
        %v1851 = vpack.c.b16 %v1355, %v1347
        %v1852 = vpack.c.b16 %v1356, %v1348
        %v1853 = vpack.c.b16 %v1357, %v1349
        %v1854 = vpack.c.b16 %v1358, %v1350
        %v1855 = vpack.c.b16 %v1359, %v1351
        %v1856 = vpack.c.b16 %v1360, %v1352
        %v1857 = vpack.c.b16 %v1369, %v1361
        %v1858 = vpack.c.b16 %v1370, %v1362
        %v1859 = vpack.c.b16 %v1371, %v1363
        %v1860 = vpack.c.b16 %v1372, %v1364
        %v1861 = vpack.c.b16 %v1373, %v1365
        %v1862 = vpack.c.b16 %v1374, %v1366
        %v1863 = vpack.c.b16 %v1375, %v1367
        %v1864 = vpack.c.b16 %v1376, %v1368
        %v1865 = vpack.c.b16 %v1385, %v1377
        %v1866 = vpack.c.b16 %v1386, %v1378
        %v1867 = vpack.c.b16 %v1387, %v1379
        %v1868 = vpack.c.b16 %v1388, %v1380
        %v1869 = vpack.c.b16 %v1389, %v1381
        %v1870 = vpack.c.b16 %v1390, %v1382
        %v1871 = vpack.c.b16 %v1391, %v1383
        %v1872 = vpack.c.b16 %v1392, %v1384
        %v1873 = vpack.c.b16 %v1401, %v1393
        %v1874 = vpack.c.b16 %v1402, %v1394
        %v1875 = vpack.c.b16 %v1403, %v1395
        %v1876 = vpack.c.b16 %v1404, %v1396
        %v1877 = vpack.c.b16 %v1405, %v1397
        %v1878 = vpack.c.b16 %v1406, %v1398
        %v1879 = vpack.c.b16 %v1407, %v1399
        %v1880 = vpack.c.b16 %v1408, %v1400
        %v1881 = vpack.c.b16 %v1417, %v1409
        %v1882 = vpack.c.b16 %v1418, %v1410
        %v1883 = vpack.c.b16 %v1419, %v1411
        %v1884 = vpack.c.b16 %v1420, %v1412
        %v1885 = vpack.c.b16 %v1421, %v1413
        %v1886 = vpack.c.b16 %v1422, %v1414
        %v1887 = vpack.c.b16 %v1423, %v1415
        %v1888 = vpack.c.b16 %v1424, %v1416
        %v1889 = vpack.c.b16 %v1433, %v1425
        %v1890 = vpack.c.b16 %v1434, %v1426
        %v1891 = vpack.c.b16 %v1435, %v1427
        %v1892 = vpack.c.b16 %v1436, %v1428
        %v1893 = vpack.c.b16 %v1437, %v1429
        %v1894 = vpack.c.b16 %v1438, %v1430
        %v1895 = vpack.c.b16 %v1439, %v1431
        %v1896 = vpack.c.b16 %v1440, %v1432
        %v1897 = vpack.c.b16 %v1449, %v1441
        %v1898 = vpack.c.b16 %v1450, %v1442
        %v1899 = vpack.c.b16 %v1451, %v1443
        %v1900 = vpack.c.b16 %v1452, %v1444
        %v1901 = vpack.c.b16 %v1453, %v1445
        %v1902 = vpack.c.b16 %v1454, %v1446
        %v1903 = vpack.c.b16 %v1455, %v1447
        %v1904 = vpack.c.b16 %v1456, %v1448
        %v1905 = vpack.c.b16 %v1465, %v1457
        %v1906 = vpack.c.b16 %v1466, %v1458
        %v1907 = vpack.c.b16 %v1467, %v1459
        %v1908 = vpack.c.b16 %v1468, %v1460
        %v1909 = vpack.c.b16 %v1469, %v1461
        %v1910 = vpack.c.b16 %v1470, %v1462
        %v1911 = vpack.c.b16 %v1471, %v1463
        %v1912 = vpack.c.b16 %v1472, %v1464
        %v1913 = vpack.c.b16 %v1481, %v1473
        %v1914 = vpack.c.b16 %v1482, %v1474
        %v1915 = vpack.c.b16 %v1483, %v1475
        %v1916 = vpack.c.b16 %v1484, %v1476
        %v1917 = vpack.c.b16 %v1485, %v1477
        %v1918 = vpack.c.b16 %v1486, %v1478
        %v1919 = vpack.c.b16 %v1487, %v1479
        %v1920 = vpack.c.b16 %v1488, %v1480
        %v1921 = vpack.c.b16 %v1497, %v1489
        %v1922 = vpack.c.b16 %v1498, %v1490
        %v1923 = vpack.c.b16 %v1499, %v1491
        %v1924 = vpack.c.b16 %v1500, %v1492
        %v1925 = vpack.c.b16 %v1501, %v1493
        %v1926 = vpack.c.b16 %v1502, %v1494
        %v1927 = vpack.c.b16 %v1503, %v1495
        %v1928 = vpack.c.b16 %v1504, %v1496
        %v1929 = vpack.c.b16 %v1513, %v1505
        %v1930 = vpack.c.b16 %v1514, %v1506
        %v1931 = vpack.c.b16 %v1515, %v1507
        %v1932 = vpack.c.b16 %v1516, %v1508
        %v1933 = vpack.c.b16 %v1517, %v1509
        %v1934 = vpack.c.b16 %v1518, %v1510
        %v1935 = vpack.c.b16 %v1519, %v1511
        %v1936 = vpack.c.b16 %v1520, %v1512
        %v1937 = vpack.c.b16 %v1529, %v1521
        %v1938 = vpack.c.b16 %v1530, %v1522
        %v1939 = vpack.c.b16 %v1531, %v1523
        %v1940 = vpack.c.b16 %v1532, %v1524
        %v1941 = vpack.c.b16 %v1533, %v1525
        %v1942 = vpack.c.b16 %v1534, %v1526
        %v1943 = vpack.c.b16 %v1535, %v1527
        %v1944 = vpack.c.b16 %v1536, %v1528
        %v1945 = vpack.c.b16 %v1545, %v1537
        %v1946 = vpack.c.b16 %v1546, %v1538
        %v1947 = vpack.c.b16 %v1547, %v1539
        %v1948 = vpack.c.b16 %v1548, %v1540
        %v1949 = vpack.c.b16 %v1549, %v1541
        %v1950 = vpack.c.b16 %v1550, %v1542
        %v1951 = vpack.c.b16 %v1551, %v1543
        %v1952 = vpack.c.b16 %v1552, %v1544
        %v1953 = vpack.c.b16 %v1561, %v1553
        %v1954 = vpack.c.b16 %v1562, %v1554
        %v1955 = vpack.c.b16 %v1563, %v1555
        %v1956 = vpack.c.b16 %v1564, %v1556
        %v1957 = vpack.c.b16 %v1565, %v1557
        %v1958 = vpack.c.b16 %v1566, %v1558
        %v1959 = vpack.c.b16 %v1567, %v1559
        %v1960 = vpack.c.b16 %v1568, %v1560
        %v1961 = vpack.c.b16 %v1577, %v1569
        %v1962 = vpack.c.b16 %v1578, %v1570
        %v1963 = vpack.c.b16 %v1579, %v1571
        %v1964 = vpack.c.b16 %v1580, %v1572
        %v1965 = vpack.c.b16 %v1581, %v1573
        %v1966 = vpack.c.b16 %v1582, %v1574
        %v1967 = vpack.c.b16 %v1583, %v1575
        %v1968 = vpack.c.b16 %v1584, %v1576
        %v1969 = vpack.c.b16 %v1593, %v1585
        %v1970 = vpack.c.b16 %v1594, %v1586
        %v1971 = vpack.c.b16 %v1595, %v1587
        %v1972 = vpack.c.b16 %v1596, %v1588
        %v1973 = vpack.c.b16 %v1597, %v1589
        %v1974 = vpack.c.b16 %v1598, %v1590
        %v1975 = vpack.c.b16 %v1599, %v1591
        %v1976 = vpack.c.b16 %v1600, %v1592
        %v1977 = vpack.c.b16 %v1609, %v1601
        %v1978 = vpack.c.b16 %v1610, %v1602
        %v1979 = vpack.c.b16 %v1611, %v1603
        %v1980 = vpack.c.b16 %v1612, %v1604
        %v1981 = vpack.c.b16 %v1613, %v1605
        %v1982 = vpack.c.b16 %v1614, %v1606
        %v1983 = vpack.c.b16 %v1615, %v1607
        %v1984 = vpack.c.b16 %v1616, %v1608
        %v1985 = vpack.c.b16 %v1625, %v1617
        %v1986 = vpack.c.b16 %v1626, %v1618
        %v1987 = vpack.c.b16 %v1627, %v1619
        %v1988 = vpack.c.b16 %v1628, %v1620
        %v1989 = vpack.c.b16 %v1629, %v1621
        %v1990 = vpack.c.b16 %v1630, %v1622
        %v1991 = vpack.c.b16 %v1631, %v1623
        %v1992 = vpack.c.b16 %v1632, %v1624
        %v1993 = vpack.c.b16 %v1641, %v1633
        %v1994 = vpack.c.b16 %v1642, %v1634
        %v1995 = vpack.c.b16 %v1643, %v1635
        %v1996 = vpack.c.b16 %v1644, %v1636
        %v1997 = vpack.c.b16 %v1645, %v1637
        %v1998 = vpack.c.b16 %v1646, %v1638
        %v1999 = vpack.c.b16 %v1647, %v1639
        %v2000 = vpack.c.b16 %v1648, %v1640
        %v2001 = vpack.c.b16 %v1657, %v1649
        %v2002 = vpack.c.b16 %v1658, %v1650
        %v2003 = vpack.c.b16 %v1659, %v1651
        %v2004 = vpack.c.b16 %v1660, %v1652
        %v2005 = vpack.c.b16 %v1661, %v1653
        %v2006 = vpack.c.b16 %v1662, %v1654
        %v2007 = vpack.c.b16 %v1663, %v1655
        %v2008 = vpack.c.b16 %v1664, %v1656
        %v2009 = vpack.c.b16 %v1673, %v1665
        %v2010 = vpack.c.b16 %v1674, %v1666
        %v2011 = vpack.c.b16 %v1675, %v1667
        %v2012 = vpack.c.b16 %v1676, %v1668
        %v2013 = vpack.c.b16 %v1677, %v1669
        %v2014 = vpack.c.b16 %v1678, %v1670
        %v2015 = vpack.c.b16 %v1679, %v1671
        %v2016 = vpack.c.b16 %v1680, %v1672
        %v2017 = vpack.c.b16 %v1689, %v1681
        %v2018 = vpack.c.b16 %v1690, %v1682
        %v2019 = vpack.c.b16 %v1691, %v1683
        %v2020 = vpack.c.b16 %v1692, %v1684
        %v2021 = vpack.c.b16 %v1693, %v1685
        %v2022 = vpack.c.b16 %v1694, %v1686
        %v2023 = vpack.c.b16 %v1695, %v1687
        %v2024 = vpack.c.b16 %v1696, %v1688
        %v2025 = vpack.c.b16 %v1705, %v1697
        %v2026 = vpack.c.b16 %v1706, %v1698
        %v2027 = vpack.c.b16 %v1707, %v1699
        %v2028 = vpack.c.b16 %v1708, %v1700
        %v2029 = vpack.c.b16 %v1709, %v1701
        %v2030 = vpack.c.b16 %v1710, %v1702
        %v2031 = vpack.c.b16 %v1711, %v1703
        %v2032 = vpack.c.b16 %v1712, %v1704
        %v2033 = vpack.c.b16 %v1721, %v1713
        %v2034 = vpack.c.b16 %v1722, %v1714
        %v2035 = vpack.c.b16 %v1723, %v1715
        %v2036 = vpack.c.b16 %v1724, %v1716
        %v2037 = vpack.c.b16 %v1725, %v1717
        %v2038 = vpack.c.b16 %v1726, %v1718
        %v2039 = vpack.c.b16 %v1727, %v1719
        %v2040 = vpack.c.b16 %v1728, %v1720
        %v2041 = vpack.c.b16 %v1737, %v1729
        %v2042 = vpack.c.b16 %v1738, %v1730
        %v2043 = vpack.c.b16 %v1739, %v1731
        %v2044 = vpack.c.b16 %v1740, %v1732
        %v2045 = vpack.c.b16 %v1741, %v1733
        %v2046 = vpack.c.b16 %v1742, %v1734
        %v2047 = vpack.c.b16 %v1743, %v1735
        %v2048 = vpack.c.b16 %v1744, %v1736
        %v2049 = vpack.c.b16 %v1753, %v1745
        %v2050 = vpack.c.b16 %v1754, %v1746
        %v2051 = vpack.c.b16 %v1755, %v1747
        %v2052 = vpack.c.b16 %v1756, %v1748
        %v2053 = vpack.c.b16 %v1757, %v1749
        %v2054 = vpack.c.b16 %v1758, %v1750
        %v2055 = vpack.c.b16 %v1759, %v1751
        %v2056 = vpack.c.b16 %v1760, %v1752
        %v2057 = vpack.c.b16 %v1769, %v1761
        %v2058 = vpack.c.b16 %v1770, %v1762
        %v2059 = vpack.c.b16 %v1771, %v1763
        %v2060 = vpack.c.b16 %v1772, %v1764
        %v2061 = vpack.c.b16 %v1773, %v1765
        %v2062 = vpack.c.b16 %v1774, %v1766
        %v2063 = vpack.c.b16 %v1775, %v1767
        %v2064 = vpack.c.b16 %v1776, %v1768
        %v2065 = vpack.c.b16 %v1785, %v1777
        %v2066 = vpack.c.b16 %v1786, %v1778
        %v2067 = vpack.c.b16 %v1787, %v1779
        %v2068 = vpack.c.b16 %v1788, %v1780
        %v2069 = vpack.c.b16 %v1789, %v1781
        %v2070 = vpack.c.b16 %v1790, %v1782
        %v2071 = vpack.c.b16 %v1791, %v1783
        %v2072 = vpack.c.b16 %v1792, %v1784
        %v2073 = vpack.c.b16 %v1801, %v1793
        %v2074 = vpack.c.b16 %v1802, %v1794
        %v2075 = vpack.c.b16 %v1803, %v1795
        %v2076 = vpack.c.b16 %v1804, %v1796
        %v2077 = vpack.c.b16 %v1805, %v1797
        %v2078 = vpack.c.b16 %v1806, %v1798
        %v2079 = vpack.c.b16 %v1807, %v1799
        %v2080 = vpack.c.b16 %v1808, %v1800
        %v2081 = vpack.c.b16 %v1817, %v1809
        %v2082 = vpack.c.b16 %v1818, %v1810
        %v2083 = vpack.c.b16 %v1819, %v1811
        %v2084 = vpack.c.b16 %v1820, %v1812
        %v2085 = vpack.c.b16 %v1821, %v1813
        %v2086 = vpack.c.b16 %v1822, %v1814
        %v2087 = vpack.c.b16 %v1823, %v1815
        %v2088 = vpack.c.b16 %v1824, %v1816
        %v2089 = vpack.c.b16 %v1833, %v1825
        %v2090 = vpack.c.b16 %v1834, %v1826
        %v2091 = vpack.c.b16 %v1835, %v1827
        %v2092 = vpack.c.b16 %v1836, %v1828
        %v2093 = vpack.c.b16 %v1837, %v1829
        %v2094 = vpack.c.b16 %v1838, %v1830
        %v2095 = vpack.c.b16 %v1839, %v1831
        %v2096 = vpack.c.b16 %v1840, %v1832
        %2353 = vmatprep.subr.bf16.mxu0 %v1898
        %2354 = vmatpush1.bf16.msra.mxu0 %v1897
        %2355 = vmatprep.subr.bf16.mxu0 %v1890
        %2356 = vmatpush1.bf16.msra.mxu0 %v1889
        %2357 = vmatprep.subr.bf16.mxu0 %v1882
        %2358 = vmatpush1.bf16.msra.mxu0 %v1881
        %2359 = vmatprep.subr.bf16.mxu0 %v1874
        %2360 = vmatpush1.bf16.msra.mxu0 %v1873
        %2361 = vmatprep.subr.bf16.mxu0 %v1866
        %2362 = vmatpush1.bf16.msra.mxu0 %v1865
        %2363 = vmatprep.subr.bf16.mxu0 %v1858
        %2364 = vmatpush1.bf16.msra.mxu0 %v1857
        %2365 = vmatprep.subr.bf16.mxu0 %v1850
        %2366 = vmatpush1.bf16.msra.mxu0 %v1849
        %2367 = vmatprep.subr.bf16.mxu0 %v1842
        %2368 = vmatpush1.bf16.msra.mxu0 %v1841
        %2369 = vmatprep.subr.bf16.mxu0 %v1962
        %2370 = vmatpush2.bf16.msra.mxu0 %v1961
        %2371 = vmatprep.subr.bf16.mxu0 %v1954
        %2372 = vmatpush2.bf16.msra.mxu0 %v1953
        %2373 = vmatprep.subr.bf16.mxu0 %v1946
        %2374 = vmatpush2.bf16.msra.mxu0 %v1945
        %2375 = vmatprep.subr.bf16.mxu0 %v1938
        %2376 = vmatpush2.bf16.msra.mxu0 %v1937
        %2377 = vmatprep.subr.bf16.mxu0 %v1930
        %2378 = vmatpush2.bf16.msra.mxu0 %v1929
        %2379 = vmatprep.subr.bf16.mxu0 %v1922
        %2380 = vmatpush2.bf16.msra.mxu0 %v1921
        %2381 = vmatprep.subr.bf16.mxu0 %v1914
        %2382 = vmatpush2.bf16.msra.mxu0 %v1913
        %2383 = vmatprep.subr.bf16.mxu0 %v1906
        %2384 = vmatpush2.bf16.msra.mxu0 %v1905
        %2385 = vmatprep.mubr.bf16.mxu0 %v769
        %2386 = vmatmul.mubr.bf16.gmra.mxu0 %v768
        %v2387 = vpop.f32.mrf.mxu0
        %v2388 = vadd.f32 %v1036, %v2387
        %v2389 = vpop.f32.mrf.mxu0
        %v2390 = vadd.f32 %v1040, %v2389
        %v2391 = vpop.f32.mrf.mxu0
        %v2392 = vadd.f32 %v1036, %v2391
        %v2393 = vpop.f32.mrf.mxu0
        %v2394 = vadd.f32 %v1040, %v2393
        %2395 = vmatprep.mubr.bf16.mxu0 %v773
        %2396 = vmatmul.mubr.bf16.gmra.mxu0 %v772
        %v2397 = vpop.f32.mrf.mxu0
        %v2398 = vadd.f32 %v1036, %v2397
        %v2399 = vpop.f32.mrf.mxu0
        %v2400 = vadd.f32 %v1040, %v2399
        %v2401 = vpop.f32.mrf.mxu0
        %v2402 = vadd.f32 %v1036, %v2401
        %v2403 = vpop.f32.mrf.mxu0
        %v2404 = vadd.f32 %v1040, %v2403
        %2405 = vdwg.mxu0
        %2406 = vmatprep.subr.bf16.mxu0 %v2026
        %2407 = vmatpush1.bf16.msra.mxu0 %v2025
        %2408 = vmatprep.subr.bf16.mxu0 %v2018
        %2409 = vmatpush1.bf16.msra.mxu0 %v2017
        %2410 = vmatprep.subr.bf16.mxu0 %v2010
        %2411 = vmatpush1.bf16.msra.mxu0 %v2009
        %2412 = vmatprep.subr.bf16.mxu0 %v2002
        %2413 = vmatpush1.bf16.msra.mxu0 %v2001
        %2414 = vmatprep.subr.bf16.mxu0 %v1994
        %2415 = vmatpush1.bf16.msra.mxu0 %v1993
        %2416 = vmatprep.subr.bf16.mxu0 %v1986
        %2417 = vmatpush1.bf16.msra.mxu0 %v1985
        %2418 = vmatprep.subr.bf16.mxu0 %v1978
        %2419 = vmatpush1.bf16.msra.mxu0 %v1977
        %2420 = vmatprep.subr.bf16.mxu0 %v1970
        %2421 = vmatpush1.bf16.msra.mxu0 %v1969
        %2422 = vmatprep.subr.bf16.mxu0 %v2090
        %2423 = vmatpush2.bf16.msra.mxu0 %v2089
        %2424 = vmatprep.subr.bf16.mxu0 %v2082
        %2425 = vmatpush2.bf16.msra.mxu0 %v2081
        %2426 = vmatprep.subr.bf16.mxu0 %v2074
        %2427 = vmatpush2.bf16.msra.mxu0 %v2073
        %2428 = vmatprep.subr.bf16.mxu0 %v2066
        %2429 = vmatpush2.bf16.msra.mxu0 %v2065
        %2430 = vmatprep.subr.bf16.mxu0 %v2058
        %2431 = vmatpush2.bf16.msra.mxu0 %v2057
        %2432 = vmatprep.subr.bf16.mxu0 %v2050
        %2433 = vmatpush2.bf16.msra.mxu0 %v2049
        %2434 = vmatprep.subr.bf16.mxu0 %v2042
        %2435 = vmatpush2.bf16.msra.mxu0 %v2041
        %2436 = vmatprep.subr.bf16.mxu0 %v2034
        %2437 = vmatpush2.bf16.msra.mxu0 %v2033
        %2438 = vmatprep.mubr.bf16.mxu0 %v771
        %2439 = vmatmul.mubr.bf16.gmra.mxu0 %v770
        %v2440 = vpop.f32.mrf.mxu0
        %v2441 = vadd.f32 %v2388, %v2440
        %v2442 = vpop.f32.mrf.mxu0
        %v2443 = vadd.f32 %v2390, %v2442
        %v2444 = vpop.f32.mrf.mxu0
        %v2445 = vadd.f32 %v2392, %v2444
        %v2446 = vpop.f32.mrf.mxu0
        %v2447 = vadd.f32 %v2394, %v2446
        %2448 = vmatprep.mubr.bf16.mxu0 %v775
        %2449 = vmatmul.mubr.bf16.gmra.mxu0 %v774
        %v2450 = vpop.f32.mrf.mxu0
        %v2451 = vadd.f32 %v2398, %v2450
        %v2452 = vpop.f32.mrf.mxu0
        %v2453 = vadd.f32 %v2400, %v2452
        %v2454 = vpop.f32.mrf.mxu0
        %v2455 = vadd.f32 %v2402, %v2454
        %v2456 = vpop.f32.mrf.mxu0
        %v2457 = vadd.f32 %v2404, %v2456
        %2458 = vdwg.mxu0
        %2459 = vmatprep.subr.bf16.mxu0 %v1900
        %2460 = vmatpush1.bf16.msra.mxu0 %v1899
        %2461 = vmatprep.subr.bf16.mxu0 %v1892
        %2462 = vmatpush1.bf16.msra.mxu0 %v1891
        %2463 = vmatprep.subr.bf16.mxu0 %v1884
        %2464 = vmatpush1.bf16.msra.mxu0 %v1883
        %2465 = vmatprep.subr.bf16.mxu0 %v1876
        %2466 = vmatpush1.bf16.msra.mxu0 %v1875
        %2467 = vmatprep.subr.bf16.mxu0 %v1868
        %2468 = vmatpush1.bf16.msra.mxu0 %v1867
        %2469 = vmatprep.subr.bf16.mxu0 %v1860
        %2470 = vmatpush1.bf16.msra.mxu0 %v1859
        %2471 = vmatprep.subr.bf16.mxu0 %v1852
        %2472 = vmatpush1.bf16.msra.mxu0 %v1851
        %2473 = vmatprep.subr.bf16.mxu0 %v1844
        %2474 = vmatpush1.bf16.msra.mxu0 %v1843
        %2475 = vmatprep.subr.bf16.mxu0 %v1964
        %2476 = vmatpush2.bf16.msra.mxu0 %v1963
        %2477 = vmatprep.subr.bf16.mxu0 %v1956
        %2478 = vmatpush2.bf16.msra.mxu0 %v1955
        %2479 = vmatprep.subr.bf16.mxu0 %v1948
        %2480 = vmatpush2.bf16.msra.mxu0 %v1947
        %2481 = vmatprep.subr.bf16.mxu0 %v1940
        %2482 = vmatpush2.bf16.msra.mxu0 %v1939
        %2483 = vmatprep.subr.bf16.mxu0 %v1932
        %2484 = vmatpush2.bf16.msra.mxu0 %v1931
        %2485 = vmatprep.subr.bf16.mxu0 %v1924
        %2486 = vmatpush2.bf16.msra.mxu0 %v1923
        %2487 = vmatprep.subr.bf16.mxu0 %v1916
        %2488 = vmatpush2.bf16.msra.mxu0 %v1915
        %2489 = vmatprep.subr.bf16.mxu0 %v1908
        %2490 = vmatpush2.bf16.msra.mxu0 %v1907
        %2491 = vmatprep.mubr.bf16.mxu0 %v769
        %2492 = vmatmul.mubr.bf16.gmra.mxu0 %v768
        %v2493 = vpop.f32.mrf.mxu0
        %v2494 = vadd.f32 %v1044, %v2493
        %v2495 = vpop.f32.mrf.mxu0
        %v2496 = vadd.f32 %v1048, %v2495
        %v2497 = vpop.f32.mrf.mxu0
        %v2498 = vadd.f32 %v1044, %v2497
        %v2499 = vpop.f32.mrf.mxu0
        %v2500 = vadd.f32 %v1048, %v2499
        %2501 = vmatprep.mubr.bf16.mxu0 %v773
        %2502 = vmatmul.mubr.bf16.gmra.mxu0 %v772
        %v2503 = vpop.f32.mrf.mxu0
        %v2504 = vadd.f32 %v1044, %v2503
        %v2505 = vpop.f32.mrf.mxu0
        %v2506 = vadd.f32 %v1048, %v2505
        %v2507 = vpop.f32.mrf.mxu0
        %v2508 = vadd.f32 %v1044, %v2507
        %v2509 = vpop.f32.mrf.mxu0
        %v2510 = vadd.f32 %v1048, %v2509
        %2511 = vdwg.mxu0
        %2512 = vmatprep.subr.bf16.mxu0 %v2028
        %2513 = vmatpush1.bf16.msra.mxu0 %v2027
        %2514 = vmatprep.subr.bf16.mxu0 %v2020
        %2515 = vmatpush1.bf16.msra.mxu0 %v2019
        %2516 = vmatprep.subr.bf16.mxu0 %v2012
        %2517 = vmatpush1.bf16.msra.mxu0 %v2011
        %2518 = vmatprep.subr.bf16.mxu0 %v2004
        %2519 = vmatpush1.bf16.msra.mxu0 %v2003
        %2520 = vmatprep.subr.bf16.mxu0 %v1996
        %2521 = vmatpush1.bf16.msra.mxu0 %v1995
        %2522 = vmatprep.subr.bf16.mxu0 %v1988
        %2523 = vmatpush1.bf16.msra.mxu0 %v1987
        %2524 = vmatprep.subr.bf16.mxu0 %v1980
        %2525 = vmatpush1.bf16.msra.mxu0 %v1979
        %2526 = vmatprep.subr.bf16.mxu0 %v1972
        %2527 = vmatpush1.bf16.msra.mxu0 %v1971
        %2528 = vmatprep.subr.bf16.mxu0 %v2092
        %2529 = vmatpush2.bf16.msra.mxu0 %v2091
        %2530 = vmatprep.subr.bf16.mxu0 %v2084
        %2531 = vmatpush2.bf16.msra.mxu0 %v2083
        %2532 = vmatprep.subr.bf16.mxu0 %v2076
        %2533 = vmatpush2.bf16.msra.mxu0 %v2075
        %2534 = vmatprep.subr.bf16.mxu0 %v2068
        %2535 = vmatpush2.bf16.msra.mxu0 %v2067
        %2536 = vmatprep.subr.bf16.mxu0 %v2060
        %2537 = vmatpush2.bf16.msra.mxu0 %v2059
        %2538 = vmatprep.subr.bf16.mxu0 %v2052
        %2539 = vmatpush2.bf16.msra.mxu0 %v2051
        %2540 = vmatprep.subr.bf16.mxu0 %v2044
        %2541 = vmatpush2.bf16.msra.mxu0 %v2043
        %2542 = vmatprep.subr.bf16.mxu0 %v2036
        %2543 = vmatpush2.bf16.msra.mxu0 %v2035
        %2544 = vmatprep.mubr.bf16.mxu0 %v771
        %2545 = vmatmul.mubr.bf16.gmra.mxu0 %v770
        %v2546 = vpop.f32.mrf.mxu0
        %v2547 = vadd.f32 %v2494, %v2546
        %v2548 = vpop.f32.mrf.mxu0
        %v2549 = vadd.f32 %v2496, %v2548
        %v2550 = vpop.f32.mrf.mxu0
        %v2551 = vadd.f32 %v2498, %v2550
        %v2552 = vpop.f32.mrf.mxu0
        %v2553 = vadd.f32 %v2500, %v2552
        %2554 = vmatprep.mubr.bf16.mxu0 %v775
        %2555 = vmatmul.mubr.bf16.gmra.mxu0 %v774
        %v2556 = vpop.f32.mrf.mxu0
        %v2557 = vadd.f32 %v2504, %v2556
        %v2558 = vpop.f32.mrf.mxu0
        %v2559 = vadd.f32 %v2506, %v2558
        %v2560 = vpop.f32.mrf.mxu0
        %v2561 = vadd.f32 %v2508, %v2560
        %v2562 = vpop.f32.mrf.mxu0
        %v2563 = vadd.f32 %v2510, %v2562
        %2564 = vdwg.mxu0
        %2565 = vmatprep.subr.bf16.mxu0 %v1902
        %2566 = vmatpush1.bf16.msra.mxu0 %v1901
        %2567 = vmatprep.subr.bf16.mxu0 %v1894
        %2568 = vmatpush1.bf16.msra.mxu0 %v1893
        %2569 = vmatprep.subr.bf16.mxu0 %v1886
        %2570 = vmatpush1.bf16.msra.mxu0 %v1885
        %2571 = vmatprep.subr.bf16.mxu0 %v1878
        %2572 = vmatpush1.bf16.msra.mxu0 %v1877
        %2573 = vmatprep.subr.bf16.mxu0 %v1870
        %2574 = vmatpush1.bf16.msra.mxu0 %v1869
        %2575 = vmatprep.subr.bf16.mxu0 %v1862
        %2576 = vmatpush1.bf16.msra.mxu0 %v1861
        %2577 = vmatprep.subr.bf16.mxu0 %v1854
        %2578 = vmatpush1.bf16.msra.mxu0 %v1853
        %2579 = vmatprep.subr.bf16.mxu0 %v1846
        %2580 = vmatpush1.bf16.msra.mxu0 %v1845
        %2581 = vmatprep.subr.bf16.mxu0 %v1966
        %2582 = vmatpush2.bf16.msra.mxu0 %v1965
        %2583 = vmatprep.subr.bf16.mxu0 %v1958
        %2584 = vmatpush2.bf16.msra.mxu0 %v1957
        %2585 = vmatprep.subr.bf16.mxu0 %v1950
        %2586 = vmatpush2.bf16.msra.mxu0 %v1949
        %2587 = vmatprep.subr.bf16.mxu0 %v1942
        %2588 = vmatpush2.bf16.msra.mxu0 %v1941
        %2589 = vmatprep.subr.bf16.mxu0 %v1934
        %2590 = vmatpush2.bf16.msra.mxu0 %v1933
        %2591 = vmatprep.subr.bf16.mxu0 %v1926
        %2592 = vmatpush2.bf16.msra.mxu0 %v1925
        %2593 = vmatprep.subr.bf16.mxu0 %v1918
        %2594 = vmatpush2.bf16.msra.mxu0 %v1917
        %2595 = vmatprep.subr.bf16.mxu0 %v1910
        %2596 = vmatpush2.bf16.msra.mxu0 %v1909
        %2597 = vmatprep.mubr.bf16.mxu0 %v769
        %2598 = vmatmul.mubr.bf16.gmra.mxu0 %v768
        %v2599 = vpop.f32.mrf.mxu0
        %v2600 = vadd.f32 %v1052, %v2599
        %v2601 = vpop.f32.mrf.mxu0
        %v2602 = vadd.f32 %v1056, %v2601
        %v2603 = vpop.f32.mrf.mxu0
        %v2604 = vadd.f32 %v1052, %v2603
        %v2605 = vpop.f32.mrf.mxu0
        %v2606 = vadd.f32 %v1056, %v2605
        %2607 = vmatprep.mubr.bf16.mxu0 %v773
        %2608 = vmatmul.mubr.bf16.gmra.mxu0 %v772
        %v2609 = vpop.f32.mrf.mxu0
        %v2610 = vadd.f32 %v1052, %v2609
        %v2611 = vpop.f32.mrf.mxu0
        %v2612 = vadd.f32 %v1056, %v2611
        %v2613 = vpop.f32.mrf.mxu0
        %v2614 = vadd.f32 %v1052, %v2613
        %v2615 = vpop.f32.mrf.mxu0
        %v2616 = vadd.f32 %v1056, %v2615
        %2617 = vdwg.mxu0
        %2618 = vmatprep.subr.bf16.mxu0 %v2030
        %2619 = vmatpush1.bf16.msra.mxu0 %v2029
        %2620 = vmatprep.subr.bf16.mxu0 %v2022
        %2621 = vmatpush1.bf16.msra.mxu0 %v2021
        %2622 = vmatprep.subr.bf16.mxu0 %v2014
        %2623 = vmatpush1.bf16.msra.mxu0 %v2013
        %2624 = vmatprep.subr.bf16.mxu0 %v2006
        %2625 = vmatpush1.bf16.msra.mxu0 %v2005
        %2626 = vmatprep.subr.bf16.mxu0 %v1998
        %2627 = vmatpush1.bf16.msra.mxu0 %v1997
        %2628 = vmatprep.subr.bf16.mxu0 %v1990
        %2629 = vmatpush1.bf16.msra.mxu0 %v1989
        %2630 = vmatprep.subr.bf16.mxu0 %v1982
        %2631 = vmatpush1.bf16.msra.mxu0 %v1981
        %2632 = vmatprep.subr.bf16.mxu0 %v1974
        %2633 = vmatpush1.bf16.msra.mxu0 %v1973
        %2634 = vmatprep.subr.bf16.mxu0 %v2094
        %2635 = vmatpush2.bf16.msra.mxu0 %v2093
        %2636 = vmatprep.subr.bf16.mxu0 %v2086
        %2637 = vmatpush2.bf16.msra.mxu0 %v2085
        %2638 = vmatprep.subr.bf16.mxu0 %v2078
        %2639 = vmatpush2.bf16.msra.mxu0 %v2077
        %2640 = vmatprep.subr.bf16.mxu0 %v2070
        %2641 = vmatpush2.bf16.msra.mxu0 %v2069
        %2642 = vmatprep.subr.bf16.mxu0 %v2062
        %2643 = vmatpush2.bf16.msra.mxu0 %v2061
        %2644 = vmatprep.subr.bf16.mxu0 %v2054
        %2645 = vmatpush2.bf16.msra.mxu0 %v2053
        %2646 = vmatprep.subr.bf16.mxu0 %v2046
        %2647 = vmatpush2.bf16.msra.mxu0 %v2045
        %2648 = vmatprep.subr.bf16.mxu0 %v2038
        %2649 = vmatpush2.bf16.msra.mxu0 %v2037
        %2650 = vmatprep.mubr.bf16.mxu0 %v771
        %2651 = vmatmul.mubr.bf16.gmra.mxu0 %v770
        %v2652 = vpop.f32.mrf.mxu0
        %v2653 = vadd.f32 %v2600, %v2652
        %v2654 = vpop.f32.mrf.mxu0
        %v2655 = vadd.f32 %v2602, %v2654
        %v2656 = vpop.f32.mrf.mxu0
        %v2657 = vadd.f32 %v2604, %v2656
        %v2658 = vpop.f32.mrf.mxu0
        %v2659 = vadd.f32 %v2606, %v2658
        %2660 = vmatprep.mubr.bf16.mxu0 %v775
        %2661 = vmatmul.mubr.bf16.gmra.mxu0 %v774
        %v2662 = vpop.f32.mrf.mxu0
        %v2663 = vadd.f32 %v2610, %v2662
        %v2664 = vpop.f32.mrf.mxu0
        %v2665 = vadd.f32 %v2612, %v2664
        %v2666 = vpop.f32.mrf.mxu0
        %v2667 = vadd.f32 %v2614, %v2666
        %v2668 = vpop.f32.mrf.mxu0
        %v2669 = vadd.f32 %v2616, %v2668
        %2670 = vdwg.mxu0
        %2671 = vmatprep.subr.bf16.mxu0 %v1904
        %2672 = vmatpush1.bf16.msra.mxu0 %v1903
        %2673 = vmatprep.subr.bf16.mxu0 %v1896
        %2674 = vmatpush1.bf16.msra.mxu0 %v1895
        %2675 = vmatprep.subr.bf16.mxu0 %v1888
        %2676 = vmatpush1.bf16.msra.mxu0 %v1887
        %2677 = vmatprep.subr.bf16.mxu0 %v1880
        %2678 = vmatpush1.bf16.msra.mxu0 %v1879
        %2679 = vmatprep.subr.bf16.mxu0 %v1872
        %2680 = vmatpush1.bf16.msra.mxu0 %v1871
        %2681 = vmatprep.subr.bf16.mxu0 %v1864
        %2682 = vmatpush1.bf16.msra.mxu0 %v1863
        %2683 = vmatprep.subr.bf16.mxu0 %v1856
        %2684 = vmatpush1.bf16.msra.mxu0 %v1855
        %2685 = vmatprep.subr.bf16.mxu0 %v1848
        %2686 = vmatpush1.bf16.msra.mxu0 %v1847
        %2687 = vmatprep.subr.bf16.mxu0 %v1968
        %2688 = vmatpush2.bf16.msra.mxu0 %v1967
        %2689 = vmatprep.subr.bf16.mxu0 %v1960
        %2690 = vmatpush2.bf16.msra.mxu0 %v1959
        %2691 = vmatprep.subr.bf16.mxu0 %v1952
        %2692 = vmatpush2.bf16.msra.mxu0 %v1951
        %2693 = vmatprep.subr.bf16.mxu0 %v1944
        %2694 = vmatpush2.bf16.msra.mxu0 %v1943
        %2695 = vmatprep.subr.bf16.mxu0 %v1936
        %2696 = vmatpush2.bf16.msra.mxu0 %v1935
        %2697 = vmatprep.subr.bf16.mxu0 %v1928
        %2698 = vmatpush2.bf16.msra.mxu0 %v1927
        %2699 = vmatprep.subr.bf16.mxu0 %v1920
        %2700 = vmatpush2.bf16.msra.mxu0 %v1919
        %2701 = vmatprep.subr.bf16.mxu0 %v1912
        %2702 = vmatpush2.bf16.msra.mxu0 %v1911
        %2703 = vmatprep.mubr.bf16.mxu0 %v769
        %2704 = vmatmul.mubr.bf16.gmra.mxu0 %v768
        %v2705 = vpop.f32.mrf.mxu0
        %v2706 = vadd.f32 %v1060, %v2705
        %v2707 = vpop.f32.mrf.mxu0
        %v2708 = vadd.f32 %v1064, %v2707
        %v2709 = vpop.f32.mrf.mxu0
        %v2710 = vadd.f32 %v1060, %v2709
        %v2711 = vpop.f32.mrf.mxu0
        %v2712 = vadd.f32 %v1064, %v2711
        %2713 = vmatprep.mubr.bf16.mxu0 %v773
        %2714 = vmatmul.mubr.bf16.gmra.mxu0 %v772
        %v2715 = vpop.f32.mrf.mxu0
        %v2716 = vadd.f32 %v1060, %v2715
        %v2717 = vpop.f32.mrf.mxu0
        %v2718 = vadd.f32 %v1064, %v2717
        %v2719 = vpop.f32.mrf.mxu0
        %v2720 = vadd.f32 %v1060, %v2719
        %v2721 = vpop.f32.mrf.mxu0
        %v2722 = vadd.f32 %v1064, %v2721
        %2723 = vdwg.mxu0
        %2724 = vmatprep.subr.bf16.mxu0 %v2032
        %2725 = vmatpush1.bf16.msra.mxu0 %v2031
        %2726 = vmatprep.subr.bf16.mxu0 %v2024
        %2727 = vmatpush1.bf16.msra.mxu0 %v2023
        %2728 = vmatprep.subr.bf16.mxu0 %v2016
        %2729 = vmatpush1.bf16.msra.mxu0 %v2015
        %2730 = vmatprep.subr.bf16.mxu0 %v2008
        %2731 = vmatpush1.bf16.msra.mxu0 %v2007
        %2732 = vmatprep.subr.bf16.mxu0 %v2000
        %2733 = vmatpush1.bf16.msra.mxu0 %v1999
        %2734 = vmatprep.subr.bf16.mxu0 %v1992
        %2735 = vmatpush1.bf16.msra.mxu0 %v1991
        %2736 = vmatprep.subr.bf16.mxu0 %v1984
        %2737 = vmatpush1.bf16.msra.mxu0 %v1983
        %2738 = vmatprep.subr.bf16.mxu0 %v1976
        %2739 = vmatpush1.bf16.msra.mxu0 %v1975
        %2740 = vmatprep.subr.bf16.mxu0 %v2096
        %2741 = vmatpush2.bf16.msra.mxu0 %v2095
        %2742 = vmatprep.subr.bf16.mxu0 %v2088
        %2743 = vmatpush2.bf16.msra.mxu0 %v2087
        %2744 = vmatprep.subr.bf16.mxu0 %v2080
        %2745 = vmatpush2.bf16.msra.mxu0 %v2079
        %2746 = vmatprep.subr.bf16.mxu0 %v2072
        %2747 = vmatpush2.bf16.msra.mxu0 %v2071
        %2748 = vmatprep.subr.bf16.mxu0 %v2064
        %2749 = vmatpush2.bf16.msra.mxu0 %v2063
        %2750 = vmatprep.subr.bf16.mxu0 %v2056
        %2751 = vmatpush2.bf16.msra.mxu0 %v2055
        %2752 = vmatprep.subr.bf16.mxu0 %v2048
        %2753 = vmatpush2.bf16.msra.mxu0 %v2047
        %2754 = vmatprep.subr.bf16.mxu0 %v2040
        %2755 = vmatpush2.bf16.msra.mxu0 %v2039
        %2756 = vmatprep.mubr.bf16.mxu0 %v771
        %2757 = vmatmul.mubr.bf16.gmra.mxu0 %v770
        %v2758 = vpop.f32.mrf.mxu0
        %v2759 = vadd.f32 %v2706, %v2758
        %v2760 = vpop.f32.mrf.mxu0
        %v2761 = vadd.f32 %v2708, %v2760
        %v2762 = vpop.f32.mrf.mxu0
        %v2763 = vadd.f32 %v2710, %v2762
        %v2764 = vpop.f32.mrf.mxu0
        %v2765 = vadd.f32 %v2712, %v2764
        %2766 = vmatprep.mubr.bf16.mxu0 %v775
        %2767 = vmatmul.mubr.bf16.gmra.mxu0 %v774
        %v2768 = vpop.f32.mrf.mxu0
        %v2769 = vadd.f32 %v2716, %v2768
        %v2770 = vpop.f32.mrf.mxu0
        %v2771 = vadd.f32 %v2718, %v2770
        %v2772 = vpop.f32.mrf.mxu0
        %v2773 = vadd.f32 %v2720, %v2772
        %v2774 = vpop.f32.mrf.mxu0
        %v2775 = vadd.f32 %v2722, %v2774
        %2776 = vdwg.mxu0
        %v2777 = vmul.f32 %v2441, 1.442695
        %v2778 = vpow.pop %v2777
        %v2779 = vmul.f32 %v2443, 1.442695
        %v2780 = vpow.pop %v2779
        %v2781 = vmul.f32 %v2547, 1.442695
        %v2782 = vpow.pop %v2781
        %v2783 = vmul.f32 %v2549, 1.442695
        %v2784 = vpow.pop %v2783
        %v2785 = vmul.f32 %v2653, 1.442695
        %v2786 = vpow.pop %v2785
        %v2787 = vmul.f32 %v2655, 1.442695
        %v2788 = vpow.pop %v2787
        %v2789 = vmul.f32 %v2759, 1.442695
        %v2790 = vpow.pop %v2789
        %v2791 = vmul.f32 %v2761, 1.442695
        %v2792 = vpow.pop %v2791
        %v2793 = vmul.f32 %v2445, 1.442695
        %v2794 = vpow.pop %v2793
        %v2795 = vmul.f32 %v2447, 1.442695
        %v2796 = vpow.pop %v2795
        %v2797 = vmul.f32 %v2551, 1.442695
        %v2798 = vpow.pop %v2797
        %v2799 = vmul.f32 %v2553, 1.442695
        %v2800 = vpow.pop %v2799
        %v2801 = vmul.f32 %v2657, 1.442695
        %v2802 = vpow.pop %v2801
        %v2803 = vmul.f32 %v2659, 1.442695
        %v2804 = vpow.pop %v2803
        %v2805 = vmul.f32 %v2763, 1.442695
        %v2806 = vpow.pop %v2805
        %v2807 = vmul.f32 %v2765, 1.442695
        %v2808 = vpow.pop %v2807
        %v2809 = vmul.f32 %v2451, 1.442695
        %v2810 = vpow.pop %v2809
        %v2811 = vmul.f32 %v2453, 1.442695
        %v2812 = vpow.pop %v2811
        %v2813 = vmul.f32 %v2557, 1.442695
        %v2814 = vpow.pop %v2813
        %v2815 = vmul.f32 %v2559, 1.442695
        %v2816 = vpow.pop %v2815
        %v2817 = vmul.f32 %v2663, 1.442695
        %v2818 = vpow.pop %v2817
        %v2819 = vmul.f32 %v2665, 1.442695
        %v2820 = vpow.pop %v2819
        %v2821 = vmul.f32 %v2769, 1.442695
        %v2822 = vpow.pop %v2821
        %v2823 = vmul.f32 %v2771, 1.442695
        %v2824 = vpow.pop %v2823
        %v2825 = vmul.f32 %v2455, 1.442695
        %v2826 = vpow.pop %v2825
        %v2827 = vmul.f32 %v2457, 1.442695
        %v2828 = vpow.pop %v2827
        %v2829 = vmul.f32 %v2561, 1.442695
        %v2830 = vpow.pop %v2829
        %v2831 = vmul.f32 %v2563, 1.442695
        %v2832 = vpow.pop %v2831
        %v2833 = vmul.f32 %v2667, 1.442695
        %v2834 = vpow.pop %v2833
        %v2835 = vmul.f32 %v2669, 1.442695
        %v2836 = vpow.pop %v2835
        %v2837 = vmul.f32 %v2773, 1.442695
        %v2838 = vpow.pop %v2837
        %v2839 = vmul.f32 %v2775, 1.442695
        %v2840 = vpow.pop %v2839
        %v2841 = vadd.f32 %v2778, 1.0
        %v2842 = vadd.f32 %v2780, 1.0
        %v2843 = vadd.f32 %v2782, 1.0
        %v2844 = vadd.f32 %v2784, 1.0
        %v2845 = vadd.f32 %v2786, 1.0
        %v2846 = vadd.f32 %v2788, 1.0
        %v2847 = vadd.f32 %v2790, 1.0
        %v2848 = vadd.f32 %v2792, 1.0
        %v2849 = vadd.f32 %v2794, 1.0
        %v2850 = vadd.f32 %v2796, 1.0
        %v2851 = vadd.f32 %v2798, 1.0
        %v2852 = vadd.f32 %v2800, 1.0
        %v2853 = vadd.f32 %v2802, 1.0
        %v2854 = vadd.f32 %v2804, 1.0
        %v2855 = vadd.f32 %v2806, 1.0
        %v2856 = vadd.f32 %v2808, 1.0
        %v2857 = vadd.f32 %v2810, 1.0
        %v2858 = vadd.f32 %v2812, 1.0
        %v2859 = vadd.f32 %v2814, 1.0
        %v2860 = vadd.f32 %v2816, 1.0
        %v2861 = vadd.f32 %v2818, 1.0
        %v2862 = vadd.f32 %v2820, 1.0
        %v2863 = vadd.f32 %v2822, 1.0
        %v2864 = vadd.f32 %v2824, 1.0
        %v2865 = vadd.f32 %v2826, 1.0
        %v2866 = vadd.f32 %v2828, 1.0
        %v2867 = vadd.f32 %v2830, 1.0
        %v2868 = vadd.f32 %v2832, 1.0
        %v2869 = vadd.f32 %v2834, 1.0
        %v2870 = vadd.f32 %v2836, 1.0
        %v2871 = vadd.f32 %v2838, 1.0
        %v2872 = vadd.f32 %v2840, 1.0
        %v2873 = vmul.f32 %v2841, %v2841
        %v2874 = vmul.f32 %v2842, %v2842
        %v2875 = vmul.f32 %v2843, %v2843
        %v2876 = vmul.f32 %v2844, %v2844
        %v2877 = vmul.f32 %v2845, %v2845
        %v2878 = vmul.f32 %v2846, %v2846
        %v2879 = vmul.f32 %v2847, %v2847
        %v2880 = vmul.f32 %v2848, %v2848
        %v2881 = vmul.f32 %v2849, %v2849
        %v2882 = vmul.f32 %v2850, %v2850
        %v2883 = vmul.f32 %v2851, %v2851
        %v2884 = vmul.f32 %v2852, %v2852
        %v2885 = vmul.f32 %v2853, %v2853
        %v2886 = vmul.f32 %v2854, %v2854
        %v2887 = vmul.f32 %v2855, %v2855
        %v2888 = vmul.f32 %v2856, %v2856
        %v2889 = vmul.f32 %v2857, %v2857
        %v2890 = vmul.f32 %v2858, %v2858
        %v2891 = vmul.f32 %v2859, %v2859
        %v2892 = vmul.f32 %v2860, %v2860
        %v2893 = vmul.f32 %v2861, %v2861
        %v2894 = vmul.f32 %v2862, %v2862
        %v2895 = vmul.f32 %v2863, %v2863
        %v2896 = vmul.f32 %v2864, %v2864
        %v2897 = vmul.f32 %v2865, %v2865
        %v2898 = vmul.f32 %v2866, %v2866
        %v2899 = vmul.f32 %v2867, %v2867
        %v2900 = vmul.f32 %v2868, %v2868
        %v2901 = vmul.f32 %v2869, %v2869
        %v2902 = vmul.f32 %v2870, %v2870
        %v2903 = vmul.f32 %v2871, %v2871
        %v2904 = vmul.f32 %v2872, %v2872
        %v2905 = vadd.f32 %v2873, 1.0
        %v2906 = vadd.f32 %v2874, 1.0
        %v2907 = vadd.f32 %v2875, 1.0
        %v2908 = vadd.f32 %v2876, 1.0
        %v2909 = vadd.f32 %v2877, 1.0
        %v2910 = vadd.f32 %v2878, 1.0
        %v2911 = vadd.f32 %v2879, 1.0
        %v2912 = vadd.f32 %v2880, 1.0
        %v2913 = vadd.f32 %v2881, 1.0
        %v2914 = vadd.f32 %v2882, 1.0
        %v2915 = vadd.f32 %v2883, 1.0
        %v2916 = vadd.f32 %v2884, 1.0
        %v2917 = vadd.f32 %v2885, 1.0
        %v2918 = vadd.f32 %v2886, 1.0
        %v2919 = vadd.f32 %v2887, 1.0
        %v2920 = vadd.f32 %v2888, 1.0
        %v2921 = vadd.f32 %v2889, 1.0
        %v2922 = vadd.f32 %v2890, 1.0
        %v2923 = vadd.f32 %v2891, 1.0
        %v2924 = vadd.f32 %v2892, 1.0
        %v2925 = vadd.f32 %v2893, 1.0
        %v2926 = vadd.f32 %v2894, 1.0
        %v2927 = vadd.f32 %v2895, 1.0
        %v2928 = vadd.f32 %v2896, 1.0
        %v2929 = vadd.f32 %v2897, 1.0
        %v2930 = vadd.f32 %v2898, 1.0
        %v2931 = vadd.f32 %v2899, 1.0
        %v2932 = vadd.f32 %v2900, 1.0
        %v2933 = vadd.f32 %v2901, 1.0
        %v2934 = vadd.f32 %v2902, 1.0
        %v2935 = vadd.f32 %v2903, 1.0
        %v2936 = vadd.f32 %v2904, 1.0
        %v2937 = vrcp.pop %v2905
        %v2938 = vrcp.pop %v2906
        %v2939 = vrcp.pop %v2907
        %v2940 = vrcp.pop %v2908
        %v2941 = vrcp.pop %v2909
        %v2942 = vrcp.pop %v2910
        %v2943 = vrcp.pop %v2911
        %v2944 = vrcp.pop %v2912
        %v2945 = vrcp.pop %v2913
        %v2946 = vrcp.pop %v2914
        %v2947 = vrcp.pop %v2915
        %v2948 = vrcp.pop %v2916
        %v2949 = vrcp.pop %v2917
        %v2950 = vrcp.pop %v2918
        %v2951 = vrcp.pop %v2919
        %v2952 = vrcp.pop %v2920
        %v2953 = vrcp.pop %v2921
        %v2954 = vrcp.pop %v2922
        %v2955 = vrcp.pop %v2923
        %v2956 = vrcp.pop %v2924
        %v2957 = vrcp.pop %v2925
        %v2958 = vrcp.pop %v2926
        %v2959 = vrcp.pop %v2927
        %v2960 = vrcp.pop %v2928
        %v2961 = vrcp.pop %v2929
        %v2962 = vrcp.pop %v2930
        %v2963 = vrcp.pop %v2931
        %v2964 = vrcp.pop %v2932
        %v2965 = vrcp.pop %v2933
        %v2966 = vrcp.pop %v2934
        %v2967 = vrcp.pop %v2935
        %v2968 = vrcp.pop %v2936
        %v2969 = vmul.f32 %v2937, 2.0
        %v2970 = vmul.f32 %v2938, 2.0
        %v2971 = vmul.f32 %v2939, 2.0
        %v2972 = vmul.f32 %v2940, 2.0
        %v2973 = vmul.f32 %v2941, 2.0
        %v2974 = vmul.f32 %v2942, 2.0
        %v2975 = vmul.f32 %v2943, 2.0
        %v2976 = vmul.f32 %v2944, 2.0
        %v2977 = vmul.f32 %v2945, 2.0
        %v2978 = vmul.f32 %v2946, 2.0
        %v2979 = vmul.f32 %v2947, 2.0
        %v2980 = vmul.f32 %v2948, 2.0
        %v2981 = vmul.f32 %v2949, 2.0
        %v2982 = vmul.f32 %v2950, 2.0
        %v2983 = vmul.f32 %v2951, 2.0
        %v2984 = vmul.f32 %v2952, 2.0
        %v2985 = vmul.f32 %v2953, 2.0
        %v2986 = vmul.f32 %v2954, 2.0
        %v2987 = vmul.f32 %v2955, 2.0
        %v2988 = vmul.f32 %v2956, 2.0
        %v2989 = vmul.f32 %v2957, 2.0
        %v2990 = vmul.f32 %v2958, 2.0
        %v2991 = vmul.f32 %v2959, 2.0
        %v2992 = vmul.f32 %v2960, 2.0
        %v2993 = vmul.f32 %v2961, 2.0
        %v2994 = vmul.f32 %v2962, 2.0
        %v2995 = vmul.f32 %v2963, 2.0
        %v2996 = vmul.f32 %v2964, 2.0
        %v2997 = vmul.f32 %v2965, 2.0
        %v2998 = vmul.f32 %v2966, 2.0
        %v2999 = vmul.f32 %v2967, 2.0
        %v3000 = vmul.f32 %v2968, 2.0
        %v3001 = vsub.f32 1.0, %v2969
        %v3002 = vsub.f32 1.0, %v2970
        %v3003 = vsub.f32 1.0, %v2971
        %v3004 = vsub.f32 1.0, %v2972
        %v3005 = vsub.f32 1.0, %v2973
        %v3006 = vsub.f32 1.0, %v2974
        %v3007 = vsub.f32 1.0, %v2975
        %v3008 = vsub.f32 1.0, %v2976
        %v3009 = vsub.f32 1.0, %v2977
        %v3010 = vsub.f32 1.0, %v2978
        %v3011 = vsub.f32 1.0, %v2979
        %v3012 = vsub.f32 1.0, %v2980
        %v3013 = vsub.f32 1.0, %v2981
        %v3014 = vsub.f32 1.0, %v2982
        %v3015 = vsub.f32 1.0, %v2983
        %v3016 = vsub.f32 1.0, %v2984
        %v3017 = vsub.f32 1.0, %v2985
        %v3018 = vsub.f32 1.0, %v2986
        %v3019 = vsub.f32 1.0, %v2987
        %v3020 = vsub.f32 1.0, %v2988
        %v3021 = vsub.f32 1.0, %v2989
        %v3022 = vsub.f32 1.0, %v2990
        %v3023 = vsub.f32 1.0, %v2991
        %v3024 = vsub.f32 1.0, %v2992
        %v3025 = vsub.f32 1.0, %v2993
        %v3026 = vsub.f32 1.0, %v2994
        %v3027 = vsub.f32 1.0, %v2995
        %v3028 = vsub.f32 1.0, %v2996
        %v3029 = vsub.f32 1.0, %v2997
        %v3030 = vsub.f32 1.0, %v2998
        %v3031 = vsub.f32 1.0, %v2999
        %v3032 = vsub.f32 1.0, %v3000
        %v3033 = vmul.f32 %v2441, %v3001
        %v3034 = vmul.f32 %v2443, %v3002
        %v3035 = vmul.f32 %v2547, %v3003
        %v3036 = vmul.f32 %v2549, %v3004
        %v3037 = vmul.f32 %v2653, %v3005
        %v3038 = vmul.f32 %v2655, %v3006
        %v3039 = vmul.f32 %v2759, %v3007
        %v3040 = vmul.f32 %v2761, %v3008
        %v3041 = vmul.f32 %v2445, %v3009
        %v3042 = vmul.f32 %v2447, %v3010
        %v3043 = vmul.f32 %v2551, %v3011
        %v3044 = vmul.f32 %v2553, %v3012
        %v3045 = vmul.f32 %v2657, %v3013
        %v3046 = vmul.f32 %v2659, %v3014
        %v3047 = vmul.f32 %v2763, %v3015
        %v3048 = vmul.f32 %v2765, %v3016
        %v3049 = vmul.f32 %v2451, %v3017
        %v3050 = vmul.f32 %v2453, %v3018
        %v3051 = vmul.f32 %v2557, %v3019
        %v3052 = vmul.f32 %v2559, %v3020
        %v3053 = vmul.f32 %v2663, %v3021
        %v3054 = vmul.f32 %v2665, %v3022
        %v3055 = vmul.f32 %v2769, %v3023
        %v3056 = vmul.f32 %v2771, %v3024
        %v3057 = vmul.f32 %v2455, %v3025
        %v3058 = vmul.f32 %v2457, %v3026
        %v3059 = vmul.f32 %v2561, %v3027
        %v3060 = vmul.f32 %v2563, %v3028
        %v3061 = vmul.f32 %v2667, %v3029
        %v3062 = vmul.f32 %v2669, %v3030
        %v3063 = vmul.f32 %v2773, %v3031
        %v3064 = vmul.f32 %v2775, %v3032
        %v3065 = vpack.c.bf16 %v3041, %v3033
        %v3066 = vpack.c.bf16 %v3042, %v3034
        %v3067 = vpack.c.bf16 %v3043, %v3035
        %v3068 = vpack.c.bf16 %v3044, %v3036
        %v3069 = vpack.c.bf16 %v3045, %v3037
        %v3070 = vpack.c.bf16 %v3046, %v3038
        %v3071 = vpack.c.bf16 %v3047, %v3039
        %v3072 = vpack.c.bf16 %v3048, %v3040
        %v3073 = vpack.c.bf16 %v3057, %v3049
        %v3074 = vpack.c.bf16 %v3058, %v3050
        %v3075 = vpack.c.bf16 %v3059, %v3051
        %v3076 = vpack.c.bf16 %v3060, %v3052
        %v3077 = vpack.c.bf16 %v3061, %v3053
        %v3078 = vpack.c.bf16 %v3062, %v3054
        %v3079 = vpack.c.bf16 %v3063, %v3055
        %v3080 = vpack.c.bf16 %v3064, %v3056
        %v3081 = vld [vmem:[#allocation7] sm:$0xff]
        %v3082 = vld [vmem:[#allocation7 + $0x8] sm:$0xff]
        %v3083 = vld [vmem:[#allocation7 + $0x10] sm:$0xff]
        %v3084 = vld [vmem:[#allocation7 + $0x18] sm:$0xff]
        %v3085 = vld [vmem:[#allocation7 + $0x20] sm:$0xff]
        %v3086 = vld [vmem:[#allocation7 + $0x28] sm:$0xff]
        %v3087 = vld [vmem:[#allocation7 + $0x30] sm:$0xff]
        %v3088 = vld [vmem:[#allocation7 + $0x38] sm:$0xff]
        %v3089 = vld [vmem:[#allocation7 + $0x40] sm:$0xff]
        %v3090 = vld [vmem:[#allocation7 + $0x48] sm:$0xff]
        %v3091 = vld [vmem:[#allocation7 + $0x50] sm:$0xff]
        %v3092 = vld [vmem:[#allocation7 + $0x58] sm:$0xff]
        %v3093 = vld [vmem:[#allocation7 + $0x60] sm:$0xff]
        %v3094 = vld [vmem:[#allocation7 + $0x68] sm:$0xff]
        %v3095 = vld [vmem:[#allocation7 + $0x70] sm:$0xff]
        %v3096 = vld [vmem:[#allocation7 + $0x78] sm:$0xff]
        %v3097 = vld [vmem:[#allocation7 + $0x80] sm:$0xff]
        %v3098 = vld [vmem:[#allocation7 + $0x88] sm:$0xff]
        %v3099 = vld [vmem:[#allocation7 + $0x90] sm:$0xff]
        %v3100 = vld [vmem:[#allocation7 + $0x98] sm:$0xff]
        %v3101 = vld [vmem:[#allocation7 + $0xa0] sm:$0xff]
        %v3102 = vld [vmem:[#allocation7 + $0xa8] sm:$0xff]
        %v3103 = vld [vmem:[#allocation7 + $0xb0] sm:$0xff]
        %v3104 = vld [vmem:[#allocation7 + $0xb8] sm:$0xff]
        %v3105 = vld [vmem:[#allocation7 + $0xc0] sm:$0xff]
        %v3106 = vld [vmem:[#allocation7 + $0xc8] sm:$0xff]
        %v3107 = vld [vmem:[#allocation7 + $0xd0] sm:$0xff]
        %v3108 = vld [vmem:[#allocation7 + $0xd8] sm:$0xff]
        %v3109 = vld [vmem:[#allocation7 + $0xe0] sm:$0xff]
        %v3110 = vld [vmem:[#allocation7 + $0xe8] sm:$0xff]
        %v3111 = vld [vmem:[#allocation7 + $0xf0] sm:$0xff]
        %v3112 = vld [vmem:[#allocation7 + $0xf8] sm:$0xff]
        %v3113 = vld [vmem:[#allocation7 + $0x100] sm:$0xff]
        %v3114 = vld [vmem:[#allocation7 + $0x108] sm:$0xff]
        %v3115 = vld [vmem:[#allocation7 + $0x110] sm:$0xff]
        %v3116 = vld [vmem:[#allocation7 + $0x118] sm:$0xff]
        %v3117 = vld [vmem:[#allocation7 + $0x120] sm:$0xff]
        %v3118 = vld [vmem:[#allocation7 + $0x128] sm:$0xff]
        %v3119 = vld [vmem:[#allocation7 + $0x130] sm:$0xff]
        %v3120 = vld [vmem:[#allocation7 + $0x138] sm:$0xff]
        %v3121 = vld [vmem:[#allocation7 + $0x140] sm:$0xff]
        %v3122 = vld [vmem:[#allocation7 + $0x148] sm:$0xff]
        %v3123 = vld [vmem:[#allocation7 + $0x150] sm:$0xff]
        %v3124 = vld [vmem:[#allocation7 + $0x158] sm:$0xff]
        %v3125 = vld [vmem:[#allocation7 + $0x160] sm:$0xff]
        %v3126 = vld [vmem:[#allocation7 + $0x168] sm:$0xff]
        %v3127 = vld [vmem:[#allocation7 + $0x170] sm:$0xff]
        %v3128 = vld [vmem:[#allocation7 + $0x178] sm:$0xff]
        %v3129 = vld [vmem:[#allocation7 + $0x180] sm:$0xff]
        %v3130 = vld [vmem:[#allocation7 + $0x188] sm:$0xff]
        %v3131 = vld [vmem:[#allocation7 + $0x190] sm:$0xff]
        %v3132 = vld [vmem:[#allocation7 + $0x198] sm:$0xff]
        %v3133 = vld [vmem:[#allocation7 + $0x1a0] sm:$0xff]
        %v3134 = vld [vmem:[#allocation7 + $0x1a8] sm:$0xff]
        %v3135 = vld [vmem:[#allocation7 + $0x1b0] sm:$0xff]
        %v3136 = vld [vmem:[#allocation7 + $0x1b8] sm:$0xff]
        %v3137 = vld [vmem:[#allocation7 + $0x1c0] sm:$0xff]
        %v3138 = vld [vmem:[#allocation7 + $0x1c8] sm:$0xff]
        %v3139 = vld [vmem:[#allocation7 + $0x1d0] sm:$0xff]
        %v3140 = vld [vmem:[#allocation7 + $0x1d8] sm:$0xff]
        %v3141 = vld [vmem:[#allocation7 + $0x1e0] sm:$0xff]
        %v3142 = vld [vmem:[#allocation7 + $0x1e8] sm:$0xff]
        %v3143 = vld [vmem:[#allocation7 + $0x1f0] sm:$0xff]
        %v3144 = vld [vmem:[#allocation7 + $0x1f8] sm:$0xff]
        %v3145 = vld [vmem:[#allocation7 + $0x200] sm:$0xff]
        %v3146 = vld [vmem:[#allocation7 + $0x208] sm:$0xff]
        %v3147 = vld [vmem:[#allocation7 + $0x210] sm:$0xff]
        %v3148 = vld [vmem:[#allocation7 + $0x218] sm:$0xff]
        %v3149 = vld [vmem:[#allocation7 + $0x220] sm:$0xff]
        %v3150 = vld [vmem:[#allocation7 + $0x228] sm:$0xff]
        %v3151 = vld [vmem:[#allocation7 + $0x230] sm:$0xff]
        %v3152 = vld [vmem:[#allocation7 + $0x238] sm:$0xff]
        %v3153 = vld [vmem:[#allocation7 + $0x240] sm:$0xff]
        %v3154 = vld [vmem:[#allocation7 + $0x248] sm:$0xff]
        %v3155 = vld [vmem:[#allocation7 + $0x250] sm:$0xff]
        %v3156 = vld [vmem:[#allocation7 + $0x258] sm:$0xff]
        %v3157 = vld [vmem:[#allocation7 + $0x260] sm:$0xff]
        %v3158 = vld [vmem:[#allocation7 + $0x268] sm:$0xff]
        %v3159 = vld [vmem:[#allocation7 + $0x270] sm:$0xff]
        %v3160 = vld [vmem:[#allocation7 + $0x278] sm:$0xff]
        %v3161 = vld [vmem:[#allocation7 + $0x280] sm:$0xff]
        %v3162 = vld [vmem:[#allocation7 + $0x288] sm:$0xff]
        %v3163 = vld [vmem:[#allocation7 + $0x290] sm:$0xff]
        %v3164 = vld [vmem:[#allocation7 + $0x298] sm:$0xff]
        %v3165 = vld [vmem:[#allocation7 + $0x2a0] sm:$0xff]
        %v3166 = vld [vmem:[#allocation7 + $0x2a8] sm:$0xff]
        %v3167 = vld [vmem:[#allocation7 + $0x2b0] sm:$0xff]
        %v3168 = vld [vmem:[#allocation7 + $0x2b8] sm:$0xff]
        %v3169 = vld [vmem:[#allocation7 + $0x2c0] sm:$0xff]
        %v3170 = vld [vmem:[#allocation7 + $0x2c8] sm:$0xff]
        %v3171 = vld [vmem:[#allocation7 + $0x2d0] sm:$0xff]
        %v3172 = vld [vmem:[#allocation7 + $0x2d8] sm:$0xff]
        %v3173 = vld [vmem:[#allocation7 + $0x2e0] sm:$0xff]
        %v3174 = vld [vmem:[#allocation7 + $0x2e8] sm:$0xff]
        %v3175 = vld [vmem:[#allocation7 + $0x2f0] sm:$0xff]
        %v3176 = vld [vmem:[#allocation7 + $0x2f8] sm:$0xff]
        %v3177 = vld [vmem:[#allocation7 + $0x300] sm:$0xff]
        %v3178 = vld [vmem:[#allocation7 + $0x308] sm:$0xff]
        %v3179 = vld [vmem:[#allocation7 + $0x310] sm:$0xff]
        %v3180 = vld [vmem:[#allocation7 + $0x318] sm:$0xff]
        %v3181 = vld [vmem:[#allocation7 + $0x320] sm:$0xff]
        %v3182 = vld [vmem:[#allocation7 + $0x328] sm:$0xff]
        %v3183 = vld [vmem:[#allocation7 + $0x330] sm:$0xff]
        %v3184 = vld [vmem:[#allocation7 + $0x338] sm:$0xff]
        %v3185 = vld [vmem:[#allocation7 + $0x340] sm:$0xff]
        %v3186 = vld [vmem:[#allocation7 + $0x348] sm:$0xff]
        %v3187 = vld [vmem:[#allocation7 + $0x350] sm:$0xff]
        %v3188 = vld [vmem:[#allocation7 + $0x358] sm:$0xff]
        %v3189 = vld [vmem:[#allocation7 + $0x360] sm:$0xff]
        %v3190 = vld [vmem:[#allocation7 + $0x368] sm:$0xff]
        %v3191 = vld [vmem:[#allocation7 + $0x370] sm:$0xff]
        %v3192 = vld [vmem:[#allocation7 + $0x378] sm:$0xff]
        %v3193 = vld [vmem:[#allocation7 + $0x380] sm:$0xff]
        %v3194 = vld [vmem:[#allocation7 + $0x388] sm:$0xff]
        %v3195 = vld [vmem:[#allocation7 + $0x390] sm:$0xff]
        %v3196 = vld [vmem:[#allocation7 + $0x398] sm:$0xff]
        %v3197 = vld [vmem:[#allocation7 + $0x3a0] sm:$0xff]
        %v3198 = vld [vmem:[#allocation7 + $0x3a8] sm:$0xff]
        %v3199 = vld [vmem:[#allocation7 + $0x3b0] sm:$0xff]
        %v3200 = vld [vmem:[#allocation7 + $0x3b8] sm:$0xff]
        %v3201 = vld [vmem:[#allocation7 + $0x3c0] sm:$0xff]
        %v3202 = vld [vmem:[#allocation7 + $0x3c8] sm:$0xff]
        %v3203 = vld [vmem:[#allocation7 + $0x3d0] sm:$0xff]
        %v3204 = vld [vmem:[#allocation7 + $0x3d8] sm:$0xff]
        %v3205 = vld [vmem:[#allocation7 + $0x3e0] sm:$0xff]
        %v3206 = vld [vmem:[#allocation7 + $0x3e8] sm:$0xff]
        %v3207 = vld [vmem:[#allocation7 + $0x3f0] sm:$0xff]
        %v3208 = vld [vmem:[#allocation7 + $0x3f8] sm:$0xff]
        %v3209 = vld [vmem:[#allocation7 + $0x400] sm:$0xff]
        %v3210 = vld [vmem:[#allocation7 + $0x408] sm:$0xff]
        %v3211 = vld [vmem:[#allocation7 + $0x410] sm:$0xff]
        %v3212 = vld [vmem:[#allocation7 + $0x418] sm:$0xff]
        %v3213 = vld [vmem:[#allocation7 + $0x420] sm:$0xff]
        %v3214 = vld [vmem:[#allocation7 + $0x428] sm:$0xff]
        %v3215 = vld [vmem:[#allocation7 + $0x430] sm:$0xff]
        %v3216 = vld [vmem:[#allocation7 + $0x438] sm:$0xff]
        %v3217 = vld [vmem:[#allocation7 + $0x440] sm:$0xff]
        %v3218 = vld [vmem:[#allocation7 + $0x448] sm:$0xff]
        %v3219 = vld [vmem:[#allocation7 + $0x450] sm:$0xff]
        %v3220 = vld [vmem:[#allocation7 + $0x458] sm:$0xff]
        %v3221 = vld [vmem:[#allocation7 + $0x460] sm:$0xff]
        %v3222 = vld [vmem:[#allocation7 + $0x468] sm:$0xff]
        %v3223 = vld [vmem:[#allocation7 + $0x470] sm:$0xff]
        %v3224 = vld [vmem:[#allocation7 + $0x478] sm:$0xff]
        %v3225 = vld [vmem:[#allocation7 + $0x480] sm:$0xff]
        %v3226 = vld [vmem:[#allocation7 + $0x488] sm:$0xff]
        %v3227 = vld [vmem:[#allocation7 + $0x490] sm:$0xff]
        %v3228 = vld [vmem:[#allocation7 + $0x498] sm:$0xff]
        %v3229 = vld [vmem:[#allocation7 + $0x4a0] sm:$0xff]
        %v3230 = vld [vmem:[#allocation7 + $0x4a8] sm:$0xff]
        %v3231 = vld [vmem:[#allocation7 + $0x4b0] sm:$0xff]
        %v3232 = vld [vmem:[#allocation7 + $0x4b8] sm:$0xff]
        %v3233 = vld [vmem:[#allocation7 + $0x4c0] sm:$0xff]
        %v3234 = vld [vmem:[#allocation7 + $0x4c8] sm:$0xff]
        %v3235 = vld [vmem:[#allocation7 + $0x4d0] sm:$0xff]
        %v3236 = vld [vmem:[#allocation7 + $0x4d8] sm:$0xff]
        %v3237 = vld [vmem:[#allocation7 + $0x4e0] sm:$0xff]
        %v3238 = vld [vmem:[#allocation7 + $0x4e8] sm:$0xff]
        %v3239 = vld [vmem:[#allocation7 + $0x4f0] sm:$0xff]
        %v3240 = vld [vmem:[#allocation7 + $0x4f8] sm:$0xff]
        %v3241 = vld [vmem:[#allocation7 + $0x500] sm:$0xff]
        %v3242 = vld [vmem:[#allocation7 + $0x508] sm:$0xff]
        %v3243 = vld [vmem:[#allocation7 + $0x510] sm:$0xff]
        %v3244 = vld [vmem:[#allocation7 + $0x518] sm:$0xff]
        %v3245 = vld [vmem:[#allocation7 + $0x520] sm:$0xff]
        %v3246 = vld [vmem:[#allocation7 + $0x528] sm:$0xff]
        %v3247 = vld [vmem:[#allocation7 + $0x530] sm:$0xff]
        %v3248 = vld [vmem:[#allocation7 + $0x538] sm:$0xff]
        %v3249 = vld [vmem:[#allocation7 + $0x540] sm:$0xff]
        %v3250 = vld [vmem:[#allocation7 + $0x548] sm:$0xff]
        %v3251 = vld [vmem:[#allocation7 + $0x550] sm:$0xff]
        %v3252 = vld [vmem:[#allocation7 + $0x558] sm:$0xff]
        %v3253 = vld [vmem:[#allocation7 + $0x560] sm:$0xff]
        %v3254 = vld [vmem:[#allocation7 + $0x568] sm:$0xff]
        %v3255 = vld [vmem:[#allocation7 + $0x570] sm:$0xff]
        %v3256 = vld [vmem:[#allocation7 + $0x578] sm:$0xff]
        %v3257 = vld [vmem:[#allocation7 + $0x580] sm:$0xff]
        %v3258 = vld [vmem:[#allocation7 + $0x588] sm:$0xff]
        %v3259 = vld [vmem:[#allocation7 + $0x590] sm:$0xff]
        %v3260 = vld [vmem:[#allocation7 + $0x598] sm:$0xff]
        %v3261 = vld [vmem:[#allocation7 + $0x5a0] sm:$0xff]
        %v3262 = vld [vmem:[#allocation7 + $0x5a8] sm:$0xff]
        %v3263 = vld [vmem:[#allocation7 + $0x5b0] sm:$0xff]
        %v3264 = vld [vmem:[#allocation7 + $0x5b8] sm:$0xff]
        %v3265 = vld [vmem:[#allocation7 + $0x5c0] sm:$0xff]
        %v3266 = vld [vmem:[#allocation7 + $0x5c8] sm:$0xff]
        %v3267 = vld [vmem:[#allocation7 + $0x5d0] sm:$0xff]
        %v3268 = vld [vmem:[#allocation7 + $0x5d8] sm:$0xff]
        %v3269 = vld [vmem:[#allocation7 + $0x5e0] sm:$0xff]
        %v3270 = vld [vmem:[#allocation7 + $0x5e8] sm:$0xff]
        %v3271 = vld [vmem:[#allocation7 + $0x5f0] sm:$0xff]
        %v3272 = vld [vmem:[#allocation7 + $0x5f8] sm:$0xff]
        %v3273 = vld [vmem:[#allocation7 + $0x600] sm:$0xff]
        %v3274 = vld [vmem:[#allocation7 + $0x608] sm:$0xff]
        %v3275 = vld [vmem:[#allocation7 + $0x610] sm:$0xff]
        %v3276 = vld [vmem:[#allocation7 + $0x618] sm:$0xff]
        %v3277 = vld [vmem:[#allocation7 + $0x620] sm:$0xff]
        %v3278 = vld [vmem:[#allocation7 + $0x628] sm:$0xff]
        %v3279 = vld [vmem:[#allocation7 + $0x630] sm:$0xff]
        %v3280 = vld [vmem:[#allocation7 + $0x638] sm:$0xff]
        %v3281 = vld [vmem:[#allocation7 + $0x640] sm:$0xff]
        %v3282 = vld [vmem:[#allocation7 + $0x648] sm:$0xff]
        %v3283 = vld [vmem:[#allocation7 + $0x650] sm:$0xff]
        %v3284 = vld [vmem:[#allocation7 + $0x658] sm:$0xff]
        %v3285 = vld [vmem:[#allocation7 + $0x660] sm:$0xff]
        %v3286 = vld [vmem:[#allocation7 + $0x668] sm:$0xff]
        %v3287 = vld [vmem:[#allocation7 + $0x670] sm:$0xff]
        %v3288 = vld [vmem:[#allocation7 + $0x678] sm:$0xff]
        %v3289 = vld [vmem:[#allocation7 + $0x680] sm:$0xff]
        %v3290 = vld [vmem:[#allocation7 + $0x688] sm:$0xff]
        %v3291 = vld [vmem:[#allocation7 + $0x690] sm:$0xff]
        %v3292 = vld [vmem:[#allocation7 + $0x698] sm:$0xff]
        %v3293 = vld [vmem:[#allocation7 + $0x6a0] sm:$0xff]
        %v3294 = vld [vmem:[#allocation7 + $0x6a8] sm:$0xff]
        %v3295 = vld [vmem:[#allocation7 + $0x6b0] sm:$0xff]
        %v3296 = vld [vmem:[#allocation7 + $0x6b8] sm:$0xff]
        %v3297 = vld [vmem:[#allocation7 + $0x6c0] sm:$0xff]
        %v3298 = vld [vmem:[#allocation7 + $0x6c8] sm:$0xff]
        %v3299 = vld [vmem:[#allocation7 + $0x6d0] sm:$0xff]
        %v3300 = vld [vmem:[#allocation7 + $0x6d8] sm:$0xff]
        %v3301 = vld [vmem:[#allocation7 + $0x6e0] sm:$0xff]
        %v3302 = vld [vmem:[#allocation7 + $0x6e8] sm:$0xff]
        %v3303 = vld [vmem:[#allocation7 + $0x6f0] sm:$0xff]
        %v3304 = vld [vmem:[#allocation7 + $0x6f8] sm:$0xff]
        %v3305 = vld [vmem:[#allocation7 + $0x700] sm:$0xff]
        %v3306 = vld [vmem:[#allocation7 + $0x708] sm:$0xff]
        %v3307 = vld [vmem:[#allocation7 + $0x710] sm:$0xff]
        %v3308 = vld [vmem:[#allocation7 + $0x718] sm:$0xff]
        %v3309 = vld [vmem:[#allocation7 + $0x720] sm:$0xff]
        %v3310 = vld [vmem:[#allocation7 + $0x728] sm:$0xff]
        %v3311 = vld [vmem:[#allocation7 + $0x730] sm:$0xff]
        %v3312 = vld [vmem:[#allocation7 + $0x738] sm:$0xff]
        %v3313 = vld [vmem:[#allocation7 + $0x740] sm:$0xff]
        %v3314 = vld [vmem:[#allocation7 + $0x748] sm:$0xff]
        %v3315 = vld [vmem:[#allocation7 + $0x750] sm:$0xff]
        %v3316 = vld [vmem:[#allocation7 + $0x758] sm:$0xff]
        %v3317 = vld [vmem:[#allocation7 + $0x760] sm:$0xff]
        %v3318 = vld [vmem:[#allocation7 + $0x768] sm:$0xff]
        %v3319 = vld [vmem:[#allocation7 + $0x770] sm:$0xff]
        %v3320 = vld [vmem:[#allocation7 + $0x778] sm:$0xff]
        %v3321 = vld [vmem:[#allocation7 + $0x780] sm:$0xff]
        %v3322 = vld [vmem:[#allocation7 + $0x788] sm:$0xff]
        %v3323 = vld [vmem:[#allocation7 + $0x790] sm:$0xff]
        %v3324 = vld [vmem:[#allocation7 + $0x798] sm:$0xff]
        %v3325 = vld [vmem:[#allocation7 + $0x7a0] sm:$0xff]
        %v3326 = vld [vmem:[#allocation7 + $0x7a8] sm:$0xff]
        %v3327 = vld [vmem:[#allocation7 + $0x7b0] sm:$0xff]
        %v3328 = vld [vmem:[#allocation7 + $0x7b8] sm:$0xff]
        %v3329 = vld [vmem:[#allocation7 + $0x7c0] sm:$0xff]
        %v3330 = vld [vmem:[#allocation7 + $0x7c8] sm:$0xff]
        %v3331 = vld [vmem:[#allocation7 + $0x7d0] sm:$0xff]
        %v3332 = vld [vmem:[#allocation7 + $0x7d8] sm:$0xff]
        %v3333 = vld [vmem:[#allocation7 + $0x7e0] sm:$0xff]
        %v3334 = vld [vmem:[#allocation7 + $0x7e8] sm:$0xff]
        %v3335 = vld [vmem:[#allocation7 + $0x7f0] sm:$0xff]
        %v3336 = vld [vmem:[#allocation7 + $0x7f8] sm:$0xff]
        %v3337 = vld [vmem:[#allocation7 + $0x800] sm:$0xff]
        %v3338 = vld [vmem:[#allocation7 + $0x808] sm:$0xff]
        %v3339 = vld [vmem:[#allocation7 + $0x810] sm:$0xff]
        %v3340 = vld [vmem:[#allocation7 + $0x818] sm:$0xff]
        %v3341 = vld [vmem:[#allocation7 + $0x820] sm:$0xff]
        %v3342 = vld [vmem:[#allocation7 + $0x828] sm:$0xff]
        %v3343 = vld [vmem:[#allocation7 + $0x830] sm:$0xff]
        %v3344 = vld [vmem:[#allocation7 + $0x838] sm:$0xff]
        %v3345 = vld [vmem:[#allocation7 + $0x840] sm:$0xff]
        %v3346 = vld [vmem:[#allocation7 + $0x848] sm:$0xff]
        %v3347 = vld [vmem:[#allocation7 + $0x850] sm:$0xff]
        %v3348 = vld [vmem:[#allocation7 + $0x858] sm:$0xff]
        %v3349 = vld [vmem:[#allocation7 + $0x860] sm:$0xff]
        %v3350 = vld [vmem:[#allocation7 + $0x868] sm:$0xff]
        %v3351 = vld [vmem:[#allocation7 + $0x870] sm:$0xff]
        %v3352 = vld [vmem:[#allocation7 + $0x878] sm:$0xff]
        %v3353 = vld [vmem:[#allocation7 + $0x880] sm:$0xff]
        %v3354 = vld [vmem:[#allocation7 + $0x888] sm:$0xff]
        %v3355 = vld [vmem:[#allocation7 + $0x890] sm:$0xff]
        %v3356 = vld [vmem:[#allocation7 + $0x898] sm:$0xff]
        %v3357 = vld [vmem:[#allocation7 + $0x8a0] sm:$0xff]
        %v3358 = vld [vmem:[#allocation7 + $0x8a8] sm:$0xff]
        %v3359 = vld [vmem:[#allocation7 + $0x8b0] sm:$0xff]
        %v3360 = vld [vmem:[#allocation7 + $0x8b8] sm:$0xff]
        %v3361 = vld [vmem:[#allocation7 + $0x8c0] sm:$0xff]
        %v3362 = vld [vmem:[#allocation7 + $0x8c8] sm:$0xff]
        %v3363 = vld [vmem:[#allocation7 + $0x8d0] sm:$0xff]
        %v3364 = vld [vmem:[#allocation7 + $0x8d8] sm:$0xff]
        %v3365 = vld [vmem:[#allocation7 + $0x8e0] sm:$0xff]
        %v3366 = vld [vmem:[#allocation7 + $0x8e8] sm:$0xff]
        %v3367 = vld [vmem:[#allocation7 + $0x8f0] sm:$0xff]
        %v3368 = vld [vmem:[#allocation7 + $0x8f8] sm:$0xff]
        %v3369 = vld [vmem:[#allocation7 + $0x900] sm:$0xff]
        %v3370 = vld [vmem:[#allocation7 + $0x908] sm:$0xff]
        %v3371 = vld [vmem:[#allocation7 + $0x910] sm:$0xff]
        %v3372 = vld [vmem:[#allocation7 + $0x918] sm:$0xff]
        %v3373 = vld [vmem:[#allocation7 + $0x920] sm:$0xff]
        %v3374 = vld [vmem:[#allocation7 + $0x928] sm:$0xff]
        %v3375 = vld [vmem:[#allocation7 + $0x930] sm:$0xff]
        %v3376 = vld [vmem:[#allocation7 + $0x938] sm:$0xff]
        %v3377 = vld [vmem:[#allocation7 + $0x940] sm:$0xff]
        %v3378 = vld [vmem:[#allocation7 + $0x948] sm:$0xff]
        %v3379 = vld [vmem:[#allocation7 + $0x950] sm:$0xff]
        %v3380 = vld [vmem:[#allocation7 + $0x958] sm:$0xff]
        %v3381 = vld [vmem:[#allocation7 + $0x960] sm:$0xff]
        %v3382 = vld [vmem:[#allocation7 + $0x968] sm:$0xff]
        %v3383 = vld [vmem:[#allocation7 + $0x970] sm:$0xff]
        %v3384 = vld [vmem:[#allocation7 + $0x978] sm:$0xff]
        %v3385 = vld [vmem:[#allocation7 + $0x980] sm:$0xff]
        %v3386 = vld [vmem:[#allocation7 + $0x988] sm:$0xff]
        %v3387 = vld [vmem:[#allocation7 + $0x990] sm:$0xff]
        %v3388 = vld [vmem:[#allocation7 + $0x998] sm:$0xff]
        %v3389 = vld [vmem:[#allocation7 + $0x9a0] sm:$0xff]
        %v3390 = vld [vmem:[#allocation7 + $0x9a8] sm:$0xff]
        %v3391 = vld [vmem:[#allocation7 + $0x9b0] sm:$0xff]
        %v3392 = vld [vmem:[#allocation7 + $0x9b8] sm:$0xff]
        %v3393 = vld [vmem:[#allocation7 + $0x9c0] sm:$0xff]
        %v3394 = vld [vmem:[#allocation7 + $0x9c8] sm:$0xff]
        %v3395 = vld [vmem:[#allocation7 + $0x9d0] sm:$0xff]
        %v3396 = vld [vmem:[#allocation7 + $0x9d8] sm:$0xff]
        %v3397 = vld [vmem:[#allocation7 + $0x9e0] sm:$0xff]
        %v3398 = vld [vmem:[#allocation7 + $0x9e8] sm:$0xff]
        %v3399 = vld [vmem:[#allocation7 + $0x9f0] sm:$0xff]
        %v3400 = vld [vmem:[#allocation7 + $0x9f8] sm:$0xff]
        %v3401 = vld [vmem:[#allocation7 + $0xa00] sm:$0xff]
        %v3402 = vld [vmem:[#allocation7 + $0xa08] sm:$0xff]
        %v3403 = vld [vmem:[#allocation7 + $0xa10] sm:$0xff]
        %v3404 = vld [vmem:[#allocation7 + $0xa18] sm:$0xff]
        %v3405 = vld [vmem:[#allocation7 + $0xa20] sm:$0xff]
        %v3406 = vld [vmem:[#allocation7 + $0xa28] sm:$0xff]
        %v3407 = vld [vmem:[#allocation7 + $0xa30] sm:$0xff]
        %v3408 = vld [vmem:[#allocation7 + $0xa38] sm:$0xff]
        %v3409 = vld [vmem:[#allocation7 + $0xa40] sm:$0xff]
        %v3410 = vld [vmem:[#allocation7 + $0xa48] sm:$0xff]
        %v3411 = vld [vmem:[#allocation7 + $0xa50] sm:$0xff]
        %v3412 = vld [vmem:[#allocation7 + $0xa58] sm:$0xff]
        %v3413 = vld [vmem:[#allocation7 + $0xa60] sm:$0xff]
        %v3414 = vld [vmem:[#allocation7 + $0xa68] sm:$0xff]
        %v3415 = vld [vmem:[#allocation7 + $0xa70] sm:$0xff]
        %v3416 = vld [vmem:[#allocation7 + $0xa78] sm:$0xff]
        %v3417 = vld [vmem:[#allocation7 + $0xa80] sm:$0xff]
        %v3418 = vld [vmem:[#allocation7 + $0xa88] sm:$0xff]
        %v3419 = vld [vmem:[#allocation7 + $0xa90] sm:$0xff]
        %v3420 = vld [vmem:[#allocation7 + $0xa98] sm:$0xff]
        %v3421 = vld [vmem:[#allocation7 + $0xaa0] sm:$0xff]
        %v3422 = vld [vmem:[#allocation7 + $0xaa8] sm:$0xff]
        %v3423 = vld [vmem:[#allocation7 + $0xab0] sm:$0xff]
        %v3424 = vld [vmem:[#allocation7 + $0xab8] sm:$0xff]
        %v3425 = vld [vmem:[#allocation7 + $0xac0] sm:$0xff]
        %v3426 = vld [vmem:[#allocation7 + $0xac8] sm:$0xff]
        %v3427 = vld [vmem:[#allocation7 + $0xad0] sm:$0xff]
        %v3428 = vld [vmem:[#allocation7 + $0xad8] sm:$0xff]
        %v3429 = vld [vmem:[#allocation7 + $0xae0] sm:$0xff]
        %v3430 = vld [vmem:[#allocation7 + $0xae8] sm:$0xff]
        %v3431 = vld [vmem:[#allocation7 + $0xaf0] sm:$0xff]
        %v3432 = vld [vmem:[#allocation7 + $0xaf8] sm:$0xff]
        %v3433 = vld [vmem:[#allocation7 + $0xb00] sm:$0xff]
        %v3434 = vld [vmem:[#allocation7 + $0xb08] sm:$0xff]
        %v3435 = vld [vmem:[#allocation7 + $0xb10] sm:$0xff]
        %v3436 = vld [vmem:[#allocation7 + $0xb18] sm:$0xff]
        %v3437 = vld [vmem:[#allocation7 + $0xb20] sm:$0xff]
        %v3438 = vld [vmem:[#allocation7 + $0xb28] sm:$0xff]
        %v3439 = vld [vmem:[#allocation7 + $0xb30] sm:$0xff]
        %v3440 = vld [vmem:[#allocation7 + $0xb38] sm:$0xff]
        %v3441 = vld [vmem:[#allocation7 + $0xb40] sm:$0xff]
        %v3442 = vld [vmem:[#allocation7 + $0xb48] sm:$0xff]
        %v3443 = vld [vmem:[#allocation7 + $0xb50] sm:$0xff]
        %v3444 = vld [vmem:[#allocation7 + $0xb58] sm:$0xff]
        %v3445 = vld [vmem:[#allocation7 + $0xb60] sm:$0xff]
        %v3446 = vld [vmem:[#allocation7 + $0xb68] sm:$0xff]
        %v3447 = vld [vmem:[#allocation7 + $0xb70] sm:$0xff]
        %v3448 = vld [vmem:[#allocation7 + $0xb78] sm:$0xff]
        %v3449 = vld [vmem:[#allocation7 + $0xb80] sm:$0xff]
        %v3450 = vld [vmem:[#allocation7 + $0xb88] sm:$0xff]
        %v3451 = vld [vmem:[#allocation7 + $0xb90] sm:$0xff]
        %v3452 = vld [vmem:[#allocation7 + $0xb98] sm:$0xff]
        %v3453 = vld [vmem:[#allocation7 + $0xba0] sm:$0xff]
        %v3454 = vld [vmem:[#allocation7 + $0xba8] sm:$0xff]
        %v3455 = vld [vmem:[#allocation7 + $0xbb0] sm:$0xff]
        %v3456 = vld [vmem:[#allocation7 + $0xbb8] sm:$0xff]
        %v3457 = vld [vmem:[#allocation7 + $0xbc0] sm:$0xff]
        %v3458 = vld [vmem:[#allocation7 + $0xbc8] sm:$0xff]
        %v3459 = vld [vmem:[#allocation7 + $0xbd0] sm:$0xff]
        %v3460 = vld [vmem:[#allocation7 + $0xbd8] sm:$0xff]
        %v3461 = vld [vmem:[#allocation7 + $0xbe0] sm:$0xff]
        %v3462 = vld [vmem:[#allocation7 + $0xbe8] sm:$0xff]
        %v3463 = vld [vmem:[#allocation7 + $0xbf0] sm:$0xff]
        %v3464 = vld [vmem:[#allocation7 + $0xbf8] sm:$0xff]
        %v3465 = vld [vmem:[#allocation7 + $0xc00] sm:$0xff]
        %v3466 = vld [vmem:[#allocation7 + $0xc08] sm:$0xff]
        %v3467 = vld [vmem:[#allocation7 + $0xc10] sm:$0xff]
        %v3468 = vld [vmem:[#allocation7 + $0xc18] sm:$0xff]
        %v3469 = vld [vmem:[#allocation7 + $0xc20] sm:$0xff]
        %v3470 = vld [vmem:[#allocation7 + $0xc28] sm:$0xff]
        %v3471 = vld [vmem:[#allocation7 + $0xc30] sm:$0xff]
        %v3472 = vld [vmem:[#allocation7 + $0xc38] sm:$0xff]
        %v3473 = vld [vmem:[#allocation7 + $0xc40] sm:$0xff]
        %v3474 = vld [vmem:[#allocation7 + $0xc48] sm:$0xff]
        %v3475 = vld [vmem:[#allocation7 + $0xc50] sm:$0xff]
        %v3476 = vld [vmem:[#allocation7 + $0xc58] sm:$0xff]
        %v3477 = vld [vmem:[#allocation7 + $0xc60] sm:$0xff]
        %v3478 = vld [vmem:[#allocation7 + $0xc68] sm:$0xff]
        %v3479 = vld [vmem:[#allocation7 + $0xc70] sm:$0xff]
        %v3480 = vld [vmem:[#allocation7 + $0xc78] sm:$0xff]
        %v3481 = vld [vmem:[#allocation7 + $0xc80] sm:$0xff]
        %v3482 = vld [vmem:[#allocation7 + $0xc88] sm:$0xff]
        %v3483 = vld [vmem:[#allocation7 + $0xc90] sm:$0xff]
        %v3484 = vld [vmem:[#allocation7 + $0xc98] sm:$0xff]
        %v3485 = vld [vmem:[#allocation7 + $0xca0] sm:$0xff]
        %v3486 = vld [vmem:[#allocation7 + $0xca8] sm:$0xff]
        %v3487 = vld [vmem:[#allocation7 + $0xcb0] sm:$0xff]
        %v3488 = vld [vmem:[#allocation7 + $0xcb8] sm:$0xff]
        %v3489 = vld [vmem:[#allocation7 + $0xcc0] sm:$0xff]
        %v3490 = vld [vmem:[#allocation7 + $0xcc8] sm:$0xff]
        %v3491 = vld [vmem:[#allocation7 + $0xcd0] sm:$0xff]
        %v3492 = vld [vmem:[#allocation7 + $0xcd8] sm:$0xff]
        %v3493 = vld [vmem:[#allocation7 + $0xce0] sm:$0xff]
        %v3494 = vld [vmem:[#allocation7 + $0xce8] sm:$0xff]
        %v3495 = vld [vmem:[#allocation7 + $0xcf0] sm:$0xff]
        %v3496 = vld [vmem:[#allocation7 + $0xcf8] sm:$0xff]
        %v3497 = vld [vmem:[#allocation7 + $0xd00] sm:$0xff]
        %v3498 = vld [vmem:[#allocation7 + $0xd08] sm:$0xff]
        %v3499 = vld [vmem:[#allocation7 + $0xd10] sm:$0xff]
        %v3500 = vld [vmem:[#allocation7 + $0xd18] sm:$0xff]
        %v3501 = vld [vmem:[#allocation7 + $0xd20] sm:$0xff]
        %v3502 = vld [vmem:[#allocation7 + $0xd28] sm:$0xff]
        %v3503 = vld [vmem:[#allocation7 + $0xd30] sm:$0xff]
        %v3504 = vld [vmem:[#allocation7 + $0xd38] sm:$0xff]
        %v3505 = vld [vmem:[#allocation7 + $0xd40] sm:$0xff]
        %v3506 = vld [vmem:[#allocation7 + $0xd48] sm:$0xff]
        %v3507 = vld [vmem:[#allocation7 + $0xd50] sm:$0xff]
        %v3508 = vld [vmem:[#allocation7 + $0xd58] sm:$0xff]
        %v3509 = vld [vmem:[#allocation7 + $0xd60] sm:$0xff]
        %v3510 = vld [vmem:[#allocation7 + $0xd68] sm:$0xff]
        %v3511 = vld [vmem:[#allocation7 + $0xd70] sm:$0xff]
        %v3512 = vld [vmem:[#allocation7 + $0xd78] sm:$0xff]
        %v3513 = vld [vmem:[#allocation7 + $0xd80] sm:$0xff]
        %v3514 = vld [vmem:[#allocation7 + $0xd88] sm:$0xff]
        %v3515 = vld [vmem:[#allocation7 + $0xd90] sm:$0xff]
        %v3516 = vld [vmem:[#allocation7 + $0xd98] sm:$0xff]
        %v3517 = vld [vmem:[#allocation7 + $0xda0] sm:$0xff]
        %v3518 = vld [vmem:[#allocation7 + $0xda8] sm:$0xff]
        %v3519 = vld [vmem:[#allocation7 + $0xdb0] sm:$0xff]
        %v3520 = vld [vmem:[#allocation7 + $0xdb8] sm:$0xff]
        %v3521 = vld [vmem:[#allocation7 + $0xdc0] sm:$0xff]
        %v3522 = vld [vmem:[#allocation7 + $0xdc8] sm:$0xff]
        %v3523 = vld [vmem:[#allocation7 + $0xdd0] sm:$0xff]
        %v3524 = vld [vmem:[#allocation7 + $0xdd8] sm:$0xff]
        %v3525 = vld [vmem:[#allocation7 + $0xde0] sm:$0xff]
        %v3526 = vld [vmem:[#allocation7 + $0xde8] sm:$0xff]
        %v3527 = vld [vmem:[#allocation7 + $0xdf0] sm:$0xff]
        %v3528 = vld [vmem:[#allocation7 + $0xdf8] sm:$0xff]
        %v3529 = vld [vmem:[#allocation7 + $0xe00] sm:$0xff]
        %v3530 = vld [vmem:[#allocation7 + $0xe08] sm:$0xff]
        %v3531 = vld [vmem:[#allocation7 + $0xe10] sm:$0xff]
        %v3532 = vld [vmem:[#allocation7 + $0xe18] sm:$0xff]
        %v3533 = vld [vmem:[#allocation7 + $0xe20] sm:$0xff]
        %v3534 = vld [vmem:[#allocation7 + $0xe28] sm:$0xff]
        %v3535 = vld [vmem:[#allocation7 + $0xe30] sm:$0xff]
        %v3536 = vld [vmem:[#allocation7 + $0xe38] sm:$0xff]
        %v3537 = vld [vmem:[#allocation7 + $0xe40] sm:$0xff]
        %v3538 = vld [vmem:[#allocation7 + $0xe48] sm:$0xff]
        %v3539 = vld [vmem:[#allocation7 + $0xe50] sm:$0xff]
        %v3540 = vld [vmem:[#allocation7 + $0xe58] sm:$0xff]
        %v3541 = vld [vmem:[#allocation7 + $0xe60] sm:$0xff]
        %v3542 = vld [vmem:[#allocation7 + $0xe68] sm:$0xff]
        %v3543 = vld [vmem:[#allocation7 + $0xe70] sm:$0xff]
        %v3544 = vld [vmem:[#allocation7 + $0xe78] sm:$0xff]
        %v3545 = vld [vmem:[#allocation7 + $0xe80] sm:$0xff]
        %v3546 = vld [vmem:[#allocation7 + $0xe88] sm:$0xff]
        %v3547 = vld [vmem:[#allocation7 + $0xe90] sm:$0xff]
        %v3548 = vld [vmem:[#allocation7 + $0xe98] sm:$0xff]
        %v3549 = vld [vmem:[#allocation7 + $0xea0] sm:$0xff]
        %v3550 = vld [vmem:[#allocation7 + $0xea8] sm:$0xff]
        %v3551 = vld [vmem:[#allocation7 + $0xeb0] sm:$0xff]
        %v3552 = vld [vmem:[#allocation7 + $0xeb8] sm:$0xff]
        %v3553 = vld [vmem:[#allocation7 + $0xec0] sm:$0xff]
        %v3554 = vld [vmem:[#allocation7 + $0xec8] sm:$0xff]
        %v3555 = vld [vmem:[#allocation7 + $0xed0] sm:$0xff]
        %v3556 = vld [vmem:[#allocation7 + $0xed8] sm:$0xff]
        %v3557 = vld [vmem:[#allocation7 + $0xee0] sm:$0xff]
        %v3558 = vld [vmem:[#allocation7 + $0xee8] sm:$0xff]
        %v3559 = vld [vmem:[#allocation7 + $0xef0] sm:$0xff]
        %v3560 = vld [vmem:[#allocation7 + $0xef8] sm:$0xff]
        %v3561 = vld [vmem:[#allocation7 + $0xf00] sm:$0xff]
        %v3562 = vld [vmem:[#allocation7 + $0xf08] sm:$0xff]
        %v3563 = vld [vmem:[#allocation7 + $0xf10] sm:$0xff]
        %v3564 = vld [vmem:[#allocation7 + $0xf18] sm:$0xff]
        %v3565 = vld [vmem:[#allocation7 + $0xf20] sm:$0xff]
        %v3566 = vld [vmem:[#allocation7 + $0xf28] sm:$0xff]
        %v3567 = vld [vmem:[#allocation7 + $0xf30] sm:$0xff]
        %v3568 = vld [vmem:[#allocation7 + $0xf38] sm:$0xff]
        %v3569 = vld [vmem:[#allocation7 + $0xf40] sm:$0xff]
        %v3570 = vld [vmem:[#allocation7 + $0xf48] sm:$0xff]
        %v3571 = vld [vmem:[#allocation7 + $0xf50] sm:$0xff]
        %v3572 = vld [vmem:[#allocation7 + $0xf58] sm:$0xff]
        %v3573 = vld [vmem:[#allocation7 + $0xf60] sm:$0xff]
        %v3574 = vld [vmem:[#allocation7 + $0xf68] sm:$0xff]
        %v3575 = vld [vmem:[#allocation7 + $0xf70] sm:$0xff]
        %v3576 = vld [vmem:[#allocation7 + $0xf78] sm:$0xff]
        %v3577 = vld [vmem:[#allocation7 + $0xf80] sm:$0xff]
        %v3578 = vld [vmem:[#allocation7 + $0xf88] sm:$0xff]
        %v3579 = vld [vmem:[#allocation7 + $0xf90] sm:$0xff]
        %v3580 = vld [vmem:[#allocation7 + $0xf98] sm:$0xff]
        %v3581 = vld [vmem:[#allocation7 + $0xfa0] sm:$0xff]
        %v3582 = vld [vmem:[#allocation7 + $0xfa8] sm:$0xff]
        %v3583 = vld [vmem:[#allocation7 + $0xfb0] sm:$0xff]
        %v3584 = vld [vmem:[#allocation7 + $0xfb8] sm:$0xff]
        %v3585 = vld [vmem:[#allocation7 + $0xfc0] sm:$0xff]
        %v3586 = vld [vmem:[#allocation7 + $0xfc8] sm:$0xff]
        %v3587 = vld [vmem:[#allocation7 + $0xfd0] sm:$0xff]
        %v3588 = vld [vmem:[#allocation7 + $0xfd8] sm:$0xff]
        %v3589 = vld [vmem:[#allocation7 + $0xfe0] sm:$0xff]
        %v3590 = vld [vmem:[#allocation7 + $0xfe8] sm:$0xff]
        %v3591 = vld [vmem:[#allocation7 + $0xff0] sm:$0xff]
        %v3592 = vld [vmem:[#allocation7 + $0xff8] sm:$0xff]
        %v3594 = vlaneseq
        %v3595 = vshrl.u32 %v3594, 7
        %v3596 = vsub.s32 0, %v3595
        %v3597 = vrot.slane %v306, %v3596
        %v3598 = vlaneseq
        %v3599 = vshrl.u32 %v3598, 7
        %v3600 = vsub.s32 1, %v3599
        %v3601 = vrot.slane %v306, %v3600
        %v3602 = vlaneseq
        %v3603 = vshrl.u32 %v3602, 7
        %v3604 = vsub.s32 2, %v3603
        %v3605 = vrot.slane %v306, %v3604
        %v3606 = vlaneseq
        %v3607 = vshrl.u32 %v3606, 7
        %v3608 = vsub.s32 3, %v3607
        %v3609 = vrot.slane %v306, %v3608
        %v3610 = vlaneseq
        %v3611 = vshrl.u32 %v3610, 7
        %v3612 = vsub.s32 4, %v3611
        %v3613 = vrot.slane %v306, %v3612
        %v3614 = vlaneseq
        %v3615 = vshrl.u32 %v3614, 7
        %v3616 = vsub.s32 5, %v3615
        %v3617 = vrot.slane %v306, %v3616
        %v3618 = vlaneseq
        %v3619 = vshrl.u32 %v3618, 7
        %v3620 = vsub.s32 6, %v3619
        %v3621 = vrot.slane %v306, %v3620
        %v3622 = vlaneseq
        %v3623 = vshrl.u32 %v3622, 7
        %v3624 = vsub.s32 7, %v3623
        %v3625 = vrot.slane %v306, %v3624
        %v4146 = vunpack.c.l.b16 %v3081
        %v4147 = vunpack.c.h.b16 %v3081
        %v4148 = vunpack.c.l.b16 %v3082
        %v4149 = vunpack.c.h.b16 %v3082
        %v4150 = vunpack.c.l.b16 %v3083
        %v4151 = vunpack.c.h.b16 %v3083
        %v4152 = vunpack.c.l.b16 %v3084
        %v4153 = vunpack.c.h.b16 %v3084
        %v4154 = vunpack.c.l.b16 %v3085
        %v4155 = vunpack.c.h.b16 %v3085
        %v4156 = vunpack.c.l.b16 %v3086
        %v4157 = vunpack.c.h.b16 %v3086
        %v4158 = vunpack.c.l.b16 %v3087
        %v4159 = vunpack.c.h.b16 %v3087
        %v4160 = vunpack.c.l.b16 %v3088
        %v4161 = vunpack.c.h.b16 %v3088
        %v4162 = vunpack.c.l.b16 %v3089
        %v4163 = vunpack.c.h.b16 %v3089
        %v4164 = vunpack.c.l.b16 %v3090
        %v4165 = vunpack.c.h.b16 %v3090
        %v4166 = vunpack.c.l.b16 %v3091
        %v4167 = vunpack.c.h.b16 %v3091
        %v4168 = vunpack.c.l.b16 %v3092
        %v4169 = vunpack.c.h.b16 %v3092
        %v4170 = vunpack.c.l.b16 %v3093
        %v4171 = vunpack.c.h.b16 %v3093
        %v4172 = vunpack.c.l.b16 %v3094
        %v4173 = vunpack.c.h.b16 %v3094
        %v4174 = vunpack.c.l.b16 %v3095
        %v4175 = vunpack.c.h.b16 %v3095
        %v4176 = vunpack.c.l.b16 %v3096
        %v4177 = vunpack.c.h.b16 %v3096
        %v4178 = vunpack.c.l.b16 %v3097
        %v4179 = vunpack.c.h.b16 %v3097
        %v4180 = vunpack.c.l.b16 %v3098
        %v4181 = vunpack.c.h.b16 %v3098
        %v4182 = vunpack.c.l.b16 %v3099
        %v4183 = vunpack.c.h.b16 %v3099
        %v4184 = vunpack.c.l.b16 %v3100
        %v4185 = vunpack.c.h.b16 %v3100
        %v4186 = vunpack.c.l.b16 %v3101
        %v4187 = vunpack.c.h.b16 %v3101
        %v4188 = vunpack.c.l.b16 %v3102
        %v4189 = vunpack.c.h.b16 %v3102
        %v4190 = vunpack.c.l.b16 %v3103
        %v4191 = vunpack.c.h.b16 %v3103
        %v4192 = vunpack.c.l.b16 %v3104
        %v4193 = vunpack.c.h.b16 %v3104
        %v4194 = vunpack.c.l.b16 %v3105
        %v4195 = vunpack.c.h.b16 %v3105
        %v4196 = vunpack.c.l.b16 %v3106
        %v4197 = vunpack.c.h.b16 %v3106
        %v4198 = vunpack.c.l.b16 %v3107
        %v4199 = vunpack.c.h.b16 %v3107
        %v4200 = vunpack.c.l.b16 %v3108
        %v4201 = vunpack.c.h.b16 %v3108
        %v4202 = vunpack.c.l.b16 %v3109
        %v4203 = vunpack.c.h.b16 %v3109
        %v4204 = vunpack.c.l.b16 %v3110
        %v4205 = vunpack.c.h.b16 %v3110
        %v4206 = vunpack.c.l.b16 %v3111
        %v4207 = vunpack.c.h.b16 %v3111
        %v4208 = vunpack.c.l.b16 %v3112
        %v4209 = vunpack.c.h.b16 %v3112
        %v4210 = vunpack.c.l.b16 %v3113
        %v4211 = vunpack.c.h.b16 %v3113
        %v4212 = vunpack.c.l.b16 %v3114
        %v4213 = vunpack.c.h.b16 %v3114
        %v4214 = vunpack.c.l.b16 %v3115
        %v4215 = vunpack.c.h.b16 %v3115
        %v4216 = vunpack.c.l.b16 %v3116
        %v4217 = vunpack.c.h.b16 %v3116
        %v4218 = vunpack.c.l.b16 %v3117
        %v4219 = vunpack.c.h.b16 %v3117
        %v4220 = vunpack.c.l.b16 %v3118
        %v4221 = vunpack.c.h.b16 %v3118
        %v4222 = vunpack.c.l.b16 %v3119
        %v4223 = vunpack.c.h.b16 %v3119
        %v4224 = vunpack.c.l.b16 %v3120
        %v4225 = vunpack.c.h.b16 %v3120
        %v4226 = vunpack.c.l.b16 %v3121
        %v4227 = vunpack.c.h.b16 %v3121
        %v4228 = vunpack.c.l.b16 %v3122
        %v4229 = vunpack.c.h.b16 %v3122
        %v4230 = vunpack.c.l.b16 %v3123
        %v4231 = vunpack.c.h.b16 %v3123
        %v4232 = vunpack.c.l.b16 %v3124
        %v4233 = vunpack.c.h.b16 %v3124
        %v4234 = vunpack.c.l.b16 %v3125
        %v4235 = vunpack.c.h.b16 %v3125
        %v4236 = vunpack.c.l.b16 %v3126
        %v4237 = vunpack.c.h.b16 %v3126
        %v4238 = vunpack.c.l.b16 %v3127
        %v4239 = vunpack.c.h.b16 %v3127
        %v4240 = vunpack.c.l.b16 %v3128
        %v4241 = vunpack.c.h.b16 %v3128
        %v4242 = vunpack.c.l.b16 %v3129
        %v4243 = vunpack.c.h.b16 %v3129
        %v4244 = vunpack.c.l.b16 %v3130
        %v4245 = vunpack.c.h.b16 %v3130
        %v4246 = vunpack.c.l.b16 %v3131
        %v4247 = vunpack.c.h.b16 %v3131
        %v4248 = vunpack.c.l.b16 %v3132
        %v4249 = vunpack.c.h.b16 %v3132
        %v4250 = vunpack.c.l.b16 %v3133
        %v4251 = vunpack.c.h.b16 %v3133
        %v4252 = vunpack.c.l.b16 %v3134
        %v4253 = vunpack.c.h.b16 %v3134
        %v4254 = vunpack.c.l.b16 %v3135
        %v4255 = vunpack.c.h.b16 %v3135
        %v4256 = vunpack.c.l.b16 %v3136
        %v4257 = vunpack.c.h.b16 %v3136
        %v4258 = vunpack.c.l.b16 %v3137
        %v4259 = vunpack.c.h.b16 %v3137
        %v4260 = vunpack.c.l.b16 %v3138
        %v4261 = vunpack.c.h.b16 %v3138
        %v4262 = vunpack.c.l.b16 %v3139
        %v4263 = vunpack.c.h.b16 %v3139
        %v4264 = vunpack.c.l.b16 %v3140
        %v4265 = vunpack.c.h.b16 %v3140
        %v4266 = vunpack.c.l.b16 %v3141
        %v4267 = vunpack.c.h.b16 %v3141
        %v4268 = vunpack.c.l.b16 %v3142
        %v4269 = vunpack.c.h.b16 %v3142
        %v4270 = vunpack.c.l.b16 %v3143
        %v4271 = vunpack.c.h.b16 %v3143
        %v4272 = vunpack.c.l.b16 %v3144
        %v4273 = vunpack.c.h.b16 %v3144
        %v4274 = vunpack.c.l.b16 %v3145
        %v4275 = vunpack.c.h.b16 %v3145
        %v4276 = vunpack.c.l.b16 %v3146
        %v4277 = vunpack.c.h.b16 %v3146
        %v4278 = vunpack.c.l.b16 %v3147
        %v4279 = vunpack.c.h.b16 %v3147
        %v4280 = vunpack.c.l.b16 %v3148
        %v4281 = vunpack.c.h.b16 %v3148
        %v4282 = vunpack.c.l.b16 %v3149
        %v4283 = vunpack.c.h.b16 %v3149
        %v4284 = vunpack.c.l.b16 %v3150
        %v4285 = vunpack.c.h.b16 %v3150
        %v4286 = vunpack.c.l.b16 %v3151
        %v4287 = vunpack.c.h.b16 %v3151
        %v4288 = vunpack.c.l.b16 %v3152
        %v4289 = vunpack.c.h.b16 %v3152
        %v4290 = vunpack.c.l.b16 %v3153
        %v4291 = vunpack.c.h.b16 %v3153
        %v4292 = vunpack.c.l.b16 %v3154
        %v4293 = vunpack.c.h.b16 %v3154
        %v4294 = vunpack.c.l.b16 %v3155
        %v4295 = vunpack.c.h.b16 %v3155
        %v4296 = vunpack.c.l.b16 %v3156
        %v4297 = vunpack.c.h.b16 %v3156
        %v4298 = vunpack.c.l.b16 %v3157
        %v4299 = vunpack.c.h.b16 %v3157
        %v4300 = vunpack.c.l.b16 %v3158
        %v4301 = vunpack.c.h.b16 %v3158
        %v4302 = vunpack.c.l.b16 %v3159
        %v4303 = vunpack.c.h.b16 %v3159
        %v4304 = vunpack.c.l.b16 %v3160
        %v4305 = vunpack.c.h.b16 %v3160
        %v4306 = vunpack.c.l.b16 %v3161
        %v4307 = vunpack.c.h.b16 %v3161
        %v4308 = vunpack.c.l.b16 %v3162
        %v4309 = vunpack.c.h.b16 %v3162
        %v4310 = vunpack.c.l.b16 %v3163
        %v4311 = vunpack.c.h.b16 %v3163
        %v4312 = vunpack.c.l.b16 %v3164
        %v4313 = vunpack.c.h.b16 %v3164
        %v4314 = vunpack.c.l.b16 %v3165
        %v4315 = vunpack.c.h.b16 %v3165
        %v4316 = vunpack.c.l.b16 %v3166
        %v4317 = vunpack.c.h.b16 %v3166
        %v4318 = vunpack.c.l.b16 %v3167
        %v4319 = vunpack.c.h.b16 %v3167
        %v4320 = vunpack.c.l.b16 %v3168
        %v4321 = vunpack.c.h.b16 %v3168
        %v4322 = vunpack.c.l.b16 %v3169
        %v4323 = vunpack.c.h.b16 %v3169
        %v4324 = vunpack.c.l.b16 %v3170
        %v4325 = vunpack.c.h.b16 %v3170
        %v4326 = vunpack.c.l.b16 %v3171
        %v4327 = vunpack.c.h.b16 %v3171
        %v4328 = vunpack.c.l.b16 %v3172
        %v4329 = vunpack.c.h.b16 %v3172
        %v4330 = vunpack.c.l.b16 %v3173
        %v4331 = vunpack.c.h.b16 %v3173
        %v4332 = vunpack.c.l.b16 %v3174
        %v4333 = vunpack.c.h.b16 %v3174
        %v4334 = vunpack.c.l.b16 %v3175
        %v4335 = vunpack.c.h.b16 %v3175
        %v4336 = vunpack.c.l.b16 %v3176
        %v4337 = vunpack.c.h.b16 %v3176
        %v4338 = vunpack.c.l.b16 %v3177
        %v4339 = vunpack.c.h.b16 %v3177
        %v4340 = vunpack.c.l.b16 %v3178
        %v4341 = vunpack.c.h.b16 %v3178
        %v4342 = vunpack.c.l.b16 %v3179
        %v4343 = vunpack.c.h.b16 %v3179
        %v4344 = vunpack.c.l.b16 %v3180
        %v4345 = vunpack.c.h.b16 %v3180
        %v4346 = vunpack.c.l.b16 %v3181
        %v4347 = vunpack.c.h.b16 %v3181
        %v4348 = vunpack.c.l.b16 %v3182
        %v4349 = vunpack.c.h.b16 %v3182
        %v4350 = vunpack.c.l.b16 %v3183
        %v4351 = vunpack.c.h.b16 %v3183
        %v4352 = vunpack.c.l.b16 %v3184
        %v4353 = vunpack.c.h.b16 %v3184
        %v4354 = vunpack.c.l.b16 %v3185
        %v4355 = vunpack.c.h.b16 %v3185
        %v4356 = vunpack.c.l.b16 %v3186
        %v4357 = vunpack.c.h.b16 %v3186
        %v4358 = vunpack.c.l.b16 %v3187
        %v4359 = vunpack.c.h.b16 %v3187
        %v4360 = vunpack.c.l.b16 %v3188
        %v4361 = vunpack.c.h.b16 %v3188
        %v4362 = vunpack.c.l.b16 %v3189
        %v4363 = vunpack.c.h.b16 %v3189
        %v4364 = vunpack.c.l.b16 %v3190
        %v4365 = vunpack.c.h.b16 %v3190
        %v4366 = vunpack.c.l.b16 %v3191
        %v4367 = vunpack.c.h.b16 %v3191
        %v4368 = vunpack.c.l.b16 %v3192
        %v4369 = vunpack.c.h.b16 %v3192
        %v4370 = vunpack.c.l.b16 %v3193
        %v4371 = vunpack.c.h.b16 %v3193
        %v4372 = vunpack.c.l.b16 %v3194
        %v4373 = vunpack.c.h.b16 %v3194
        %v4374 = vunpack.c.l.b16 %v3195
        %v4375 = vunpack.c.h.b16 %v3195
        %v4376 = vunpack.c.l.b16 %v3196
        %v4377 = vunpack.c.h.b16 %v3196
        %v4378 = vunpack.c.l.b16 %v3197
        %v4379 = vunpack.c.h.b16 %v3197
        %v4380 = vunpack.c.l.b16 %v3198
        %v4381 = vunpack.c.h.b16 %v3198
        %v4382 = vunpack.c.l.b16 %v3199
        %v4383 = vunpack.c.h.b16 %v3199
        %v4384 = vunpack.c.l.b16 %v3200
        %v4385 = vunpack.c.h.b16 %v3200
        %v4386 = vunpack.c.l.b16 %v3201
        %v4387 = vunpack.c.h.b16 %v3201
        %v4388 = vunpack.c.l.b16 %v3202
        %v4389 = vunpack.c.h.b16 %v3202
        %v4390 = vunpack.c.l.b16 %v3203
        %v4391 = vunpack.c.h.b16 %v3203
        %v4392 = vunpack.c.l.b16 %v3204
        %v4393 = vunpack.c.h.b16 %v3204
        %v4394 = vunpack.c.l.b16 %v3205
        %v4395 = vunpack.c.h.b16 %v3205
        %v4396 = vunpack.c.l.b16 %v3206
        %v4397 = vunpack.c.h.b16 %v3206
        %v4398 = vunpack.c.l.b16 %v3207
        %v4399 = vunpack.c.h.b16 %v3207
        %v4400 = vunpack.c.l.b16 %v3208
        %v4401 = vunpack.c.h.b16 %v3208
        %v4402 = vunpack.c.l.b16 %v3209
        %v4403 = vunpack.c.h.b16 %v3209
        %v4404 = vunpack.c.l.b16 %v3210
        %v4405 = vunpack.c.h.b16 %v3210
        %v4406 = vunpack.c.l.b16 %v3211
        %v4407 = vunpack.c.h.b16 %v3211
        %v4408 = vunpack.c.l.b16 %v3212
        %v4409 = vunpack.c.h.b16 %v3212
        %v4410 = vunpack.c.l.b16 %v3213
        %v4411 = vunpack.c.h.b16 %v3213
        %v4412 = vunpack.c.l.b16 %v3214
        %v4413 = vunpack.c.h.b16 %v3214
        %v4414 = vunpack.c.l.b16 %v3215
        %v4415 = vunpack.c.h.b16 %v3215
        %v4416 = vunpack.c.l.b16 %v3216
        %v4417 = vunpack.c.h.b16 %v3216
        %v4418 = vunpack.c.l.b16 %v3217
        %v4419 = vunpack.c.h.b16 %v3217
        %v4420 = vunpack.c.l.b16 %v3218
        %v4421 = vunpack.c.h.b16 %v3218
        %v4422 = vunpack.c.l.b16 %v3219
        %v4423 = vunpack.c.h.b16 %v3219
        %v4424 = vunpack.c.l.b16 %v3220
        %v4425 = vunpack.c.h.b16 %v3220
        %v4426 = vunpack.c.l.b16 %v3221
        %v4427 = vunpack.c.h.b16 %v3221
        %v4428 = vunpack.c.l.b16 %v3222
        %v4429 = vunpack.c.h.b16 %v3222
        %v4430 = vunpack.c.l.b16 %v3223
        %v4431 = vunpack.c.h.b16 %v3223
        %v4432 = vunpack.c.l.b16 %v3224
        %v4433 = vunpack.c.h.b16 %v3224
        %v4434 = vunpack.c.l.b16 %v3225
        %v4435 = vunpack.c.h.b16 %v3225
        %v4436 = vunpack.c.l.b16 %v3226
        %v4437 = vunpack.c.h.b16 %v3226
        %v4438 = vunpack.c.l.b16 %v3227
        %v4439 = vunpack.c.h.b16 %v3227
        %v4440 = vunpack.c.l.b16 %v3228
        %v4441 = vunpack.c.h.b16 %v3228
        %v4442 = vunpack.c.l.b16 %v3229
        %v4443 = vunpack.c.h.b16 %v3229
        %v4444 = vunpack.c.l.b16 %v3230
        %v4445 = vunpack.c.h.b16 %v3230
        %v4446 = vunpack.c.l.b16 %v3231
        %v4447 = vunpack.c.h.b16 %v3231
        %v4448 = vunpack.c.l.b16 %v3232
        %v4449 = vunpack.c.h.b16 %v3232
        %v4450 = vunpack.c.l.b16 %v3233
        %v4451 = vunpack.c.h.b16 %v3233
        %v4452 = vunpack.c.l.b16 %v3234
        %v4453 = vunpack.c.h.b16 %v3234
        %v4454 = vunpack.c.l.b16 %v3235
        %v4455 = vunpack.c.h.b16 %v3235
        %v4456 = vunpack.c.l.b16 %v3236
        %v4457 = vunpack.c.h.b16 %v3236
        %v4458 = vunpack.c.l.b16 %v3237
        %v4459 = vunpack.c.h.b16 %v3237
        %v4460 = vunpack.c.l.b16 %v3238
        %v4461 = vunpack.c.h.b16 %v3238
        %v4462 = vunpack.c.l.b16 %v3239
        %v4463 = vunpack.c.h.b16 %v3239
        %v4464 = vunpack.c.l.b16 %v3240
        %v4465 = vunpack.c.h.b16 %v3240
        %v4466 = vunpack.c.l.b16 %v3241
        %v4467 = vunpack.c.h.b16 %v3241
        %v4468 = vunpack.c.l.b16 %v3242
        %v4469 = vunpack.c.h.b16 %v3242
        %v4470 = vunpack.c.l.b16 %v3243
        %v4471 = vunpack.c.h.b16 %v3243
        %v4472 = vunpack.c.l.b16 %v3244
        %v4473 = vunpack.c.h.b16 %v3244
        %v4474 = vunpack.c.l.b16 %v3245
        %v4475 = vunpack.c.h.b16 %v3245
        %v4476 = vunpack.c.l.b16 %v3246
        %v4477 = vunpack.c.h.b16 %v3246
        %v4478 = vunpack.c.l.b16 %v3247
        %v4479 = vunpack.c.h.b16 %v3247
        %v4480 = vunpack.c.l.b16 %v3248
        %v4481 = vunpack.c.h.b16 %v3248
        %v4482 = vunpack.c.l.b16 %v3249
        %v4483 = vunpack.c.h.b16 %v3249
        %v4484 = vunpack.c.l.b16 %v3250
        %v4485 = vunpack.c.h.b16 %v3250
        %v4486 = vunpack.c.l.b16 %v3251
        %v4487 = vunpack.c.h.b16 %v3251
        %v4488 = vunpack.c.l.b16 %v3252
        %v4489 = vunpack.c.h.b16 %v3252
        %v4490 = vunpack.c.l.b16 %v3253
        %v4491 = vunpack.c.h.b16 %v3253
        %v4492 = vunpack.c.l.b16 %v3254
        %v4493 = vunpack.c.h.b16 %v3254
        %v4494 = vunpack.c.l.b16 %v3255
        %v4495 = vunpack.c.h.b16 %v3255
        %v4496 = vunpack.c.l.b16 %v3256
        %v4497 = vunpack.c.h.b16 %v3256
        %v4498 = vunpack.c.l.b16 %v3257
        %v4499 = vunpack.c.h.b16 %v3257
        %v4500 = vunpack.c.l.b16 %v3258
        %v4501 = vunpack.c.h.b16 %v3258
        %v4502 = vunpack.c.l.b16 %v3259
        %v4503 = vunpack.c.h.b16 %v3259
        %v4504 = vunpack.c.l.b16 %v3260
        %v4505 = vunpack.c.h.b16 %v3260
        %v4506 = vunpack.c.l.b16 %v3261
        %v4507 = vunpack.c.h.b16 %v3261
        %v4508 = vunpack.c.l.b16 %v3262
        %v4509 = vunpack.c.h.b16 %v3262
        %v4510 = vunpack.c.l.b16 %v3263
        %v4511 = vunpack.c.h.b16 %v3263
        %v4512 = vunpack.c.l.b16 %v3264
        %v4513 = vunpack.c.h.b16 %v3264
        %v4514 = vunpack.c.l.b16 %v3265
        %v4515 = vunpack.c.h.b16 %v3265
        %v4516 = vunpack.c.l.b16 %v3266
        %v4517 = vunpack.c.h.b16 %v3266
        %v4518 = vunpack.c.l.b16 %v3267
        %v4519 = vunpack.c.h.b16 %v3267
        %v4520 = vunpack.c.l.b16 %v3268
        %v4521 = vunpack.c.h.b16 %v3268
        %v4522 = vunpack.c.l.b16 %v3269
        %v4523 = vunpack.c.h.b16 %v3269
        %v4524 = vunpack.c.l.b16 %v3270
        %v4525 = vunpack.c.h.b16 %v3270
        %v4526 = vunpack.c.l.b16 %v3271
        %v4527 = vunpack.c.h.b16 %v3271
        %v4528 = vunpack.c.l.b16 %v3272
        %v4529 = vunpack.c.h.b16 %v3272
        %v4530 = vunpack.c.l.b16 %v3273
        %v4531 = vunpack.c.h.b16 %v3273
        %v4532 = vunpack.c.l.b16 %v3274
        %v4533 = vunpack.c.h.b16 %v3274
        %v4534 = vunpack.c.l.b16 %v3275
        %v4535 = vunpack.c.h.b16 %v3275
        %v4536 = vunpack.c.l.b16 %v3276
        %v4537 = vunpack.c.h.b16 %v3276
        %v4538 = vunpack.c.l.b16 %v3277
        %v4539 = vunpack.c.h.b16 %v3277
        %v4540 = vunpack.c.l.b16 %v3278
        %v4541 = vunpack.c.h.b16 %v3278
        %v4542 = vunpack.c.l.b16 %v3279
        %v4543 = vunpack.c.h.b16 %v3279
        %v4544 = vunpack.c.l.b16 %v3280
        %v4545 = vunpack.c.h.b16 %v3280
        %v4546 = vunpack.c.l.b16 %v3281
        %v4547 = vunpack.c.h.b16 %v3281
        %v4548 = vunpack.c.l.b16 %v3282
        %v4549 = vunpack.c.h.b16 %v3282
        %v4550 = vunpack.c.l.b16 %v3283
        %v4551 = vunpack.c.h.b16 %v3283
        %v4552 = vunpack.c.l.b16 %v3284
        %v4553 = vunpack.c.h.b16 %v3284
        %v4554 = vunpack.c.l.b16 %v3285
        %v4555 = vunpack.c.h.b16 %v3285
        %v4556 = vunpack.c.l.b16 %v3286
        %v4557 = vunpack.c.h.b16 %v3286
        %v4558 = vunpack.c.l.b16 %v3287
        %v4559 = vunpack.c.h.b16 %v3287
        %v4560 = vunpack.c.l.b16 %v3288
        %v4561 = vunpack.c.h.b16 %v3288
        %v4562 = vunpack.c.l.b16 %v3289
        %v4563 = vunpack.c.h.b16 %v3289
        %v4564 = vunpack.c.l.b16 %v3290
        %v4565 = vunpack.c.h.b16 %v3290
        %v4566 = vunpack.c.l.b16 %v3291
        %v4567 = vunpack.c.h.b16 %v3291
        %v4568 = vunpack.c.l.b16 %v3292
        %v4569 = vunpack.c.h.b16 %v3292
        %v4570 = vunpack.c.l.b16 %v3293
        %v4571 = vunpack.c.h.b16 %v3293
        %v4572 = vunpack.c.l.b16 %v3294
        %v4573 = vunpack.c.h.b16 %v3294
        %v4574 = vunpack.c.l.b16 %v3295
        %v4575 = vunpack.c.h.b16 %v3295
        %v4576 = vunpack.c.l.b16 %v3296
        %v4577 = vunpack.c.h.b16 %v3296
        %v4578 = vunpack.c.l.b16 %v3297
        %v4579 = vunpack.c.h.b16 %v3297
        %v4580 = vunpack.c.l.b16 %v3298
        %v4581 = vunpack.c.h.b16 %v3298
        %v4582 = vunpack.c.l.b16 %v3299
        %v4583 = vunpack.c.h.b16 %v3299
        %v4584 = vunpack.c.l.b16 %v3300
        %v4585 = vunpack.c.h.b16 %v3300
        %v4586 = vunpack.c.l.b16 %v3301
        %v4587 = vunpack.c.h.b16 %v3301
        %v4588 = vunpack.c.l.b16 %v3302
        %v4589 = vunpack.c.h.b16 %v3302
        %v4590 = vunpack.c.l.b16 %v3303
        %v4591 = vunpack.c.h.b16 %v3303
        %v4592 = vunpack.c.l.b16 %v3304
        %v4593 = vunpack.c.h.b16 %v3304
        %v4594 = vunpack.c.l.b16 %v3305
        %v4595 = vunpack.c.h.b16 %v3305
        %v4596 = vunpack.c.l.b16 %v3306
        %v4597 = vunpack.c.h.b16 %v3306
        %v4598 = vunpack.c.l.b16 %v3307
        %v4599 = vunpack.c.h.b16 %v3307
        %v4600 = vunpack.c.l.b16 %v3308
        %v4601 = vunpack.c.h.b16 %v3308
        %v4602 = vunpack.c.l.b16 %v3309
        %v4603 = vunpack.c.h.b16 %v3309
        %v4604 = vunpack.c.l.b16 %v3310
        %v4605 = vunpack.c.h.b16 %v3310
        %v4606 = vunpack.c.l.b16 %v3311
        %v4607 = vunpack.c.h.b16 %v3311
        %v4608 = vunpack.c.l.b16 %v3312
        %v4609 = vunpack.c.h.b16 %v3312
        %v4610 = vunpack.c.l.b16 %v3313
        %v4611 = vunpack.c.h.b16 %v3313
        %v4612 = vunpack.c.l.b16 %v3314
        %v4613 = vunpack.c.h.b16 %v3314
        %v4614 = vunpack.c.l.b16 %v3315
        %v4615 = vunpack.c.h.b16 %v3315
        %v4616 = vunpack.c.l.b16 %v3316
        %v4617 = vunpack.c.h.b16 %v3316
        %v4618 = vunpack.c.l.b16 %v3317
        %v4619 = vunpack.c.h.b16 %v3317
        %v4620 = vunpack.c.l.b16 %v3318
        %v4621 = vunpack.c.h.b16 %v3318
        %v4622 = vunpack.c.l.b16 %v3319
        %v4623 = vunpack.c.h.b16 %v3319
        %v4624 = vunpack.c.l.b16 %v3320
        %v4625 = vunpack.c.h.b16 %v3320
        %v4626 = vunpack.c.l.b16 %v3321
        %v4627 = vunpack.c.h.b16 %v3321
        %v4628 = vunpack.c.l.b16 %v3322
        %v4629 = vunpack.c.h.b16 %v3322
        %v4630 = vunpack.c.l.b16 %v3323
        %v4631 = vunpack.c.h.b16 %v3323
        %v4632 = vunpack.c.l.b16 %v3324
        %v4633 = vunpack.c.h.b16 %v3324
        %v4634 = vunpack.c.l.b16 %v3325
        %v4635 = vunpack.c.h.b16 %v3325
        %v4636 = vunpack.c.l.b16 %v3326
        %v4637 = vunpack.c.h.b16 %v3326
        %v4638 = vunpack.c.l.b16 %v3327
        %v4639 = vunpack.c.h.b16 %v3327
        %v4640 = vunpack.c.l.b16 %v3328
        %v4641 = vunpack.c.h.b16 %v3328
        %v4642 = vunpack.c.l.b16 %v3329
        %v4643 = vunpack.c.h.b16 %v3329
        %v4644 = vunpack.c.l.b16 %v3330
        %v4645 = vunpack.c.h.b16 %v3330
        %v4646 = vunpack.c.l.b16 %v3331
        %v4647 = vunpack.c.h.b16 %v3331
        %v4648 = vunpack.c.l.b16 %v3332
        %v4649 = vunpack.c.h.b16 %v3332
        %v4650 = vunpack.c.l.b16 %v3333
        %v4651 = vunpack.c.h.b16 %v3333
        %v4652 = vunpack.c.l.b16 %v3334
        %v4653 = vunpack.c.h.b16 %v3334
        %v4654 = vunpack.c.l.b16 %v3335
        %v4655 = vunpack.c.h.b16 %v3335
        %v4656 = vunpack.c.l.b16 %v3336
        %v4657 = vunpack.c.h.b16 %v3336
        %v4658 = vunpack.c.l.b16 %v3337
        %v4659 = vunpack.c.h.b16 %v3337
        %v4660 = vunpack.c.l.b16 %v3338
        %v4661 = vunpack.c.h.b16 %v3338
        %v4662 = vunpack.c.l.b16 %v3339
        %v4663 = vunpack.c.h.b16 %v3339
        %v4664 = vunpack.c.l.b16 %v3340
        %v4665 = vunpack.c.h.b16 %v3340
        %v4666 = vunpack.c.l.b16 %v3341
        %v4667 = vunpack.c.h.b16 %v3341
        %v4668 = vunpack.c.l.b16 %v3342
        %v4669 = vunpack.c.h.b16 %v3342
        %v4670 = vunpack.c.l.b16 %v3343
        %v4671 = vunpack.c.h.b16 %v3343
        %v4672 = vunpack.c.l.b16 %v3344
        %v4673 = vunpack.c.h.b16 %v3344
        %v4674 = vunpack.c.l.b16 %v3345
        %v4675 = vunpack.c.h.b16 %v3345
        %v4676 = vunpack.c.l.b16 %v3346
        %v4677 = vunpack.c.h.b16 %v3346
        %v4678 = vunpack.c.l.b16 %v3347
        %v4679 = vunpack.c.h.b16 %v3347
        %v4680 = vunpack.c.l.b16 %v3348
        %v4681 = vunpack.c.h.b16 %v3348
        %v4682 = vunpack.c.l.b16 %v3349
        %v4683 = vunpack.c.h.b16 %v3349
        %v4684 = vunpack.c.l.b16 %v3350
        %v4685 = vunpack.c.h.b16 %v3350
        %v4686 = vunpack.c.l.b16 %v3351
        %v4687 = vunpack.c.h.b16 %v3351
        %v4688 = vunpack.c.l.b16 %v3352
        %v4689 = vunpack.c.h.b16 %v3352
        %v4690 = vunpack.c.l.b16 %v3353
        %v4691 = vunpack.c.h.b16 %v3353
        %v4692 = vunpack.c.l.b16 %v3354
        %v4693 = vunpack.c.h.b16 %v3354
        %v4694 = vunpack.c.l.b16 %v3355
        %v4695 = vunpack.c.h.b16 %v3355
        %v4696 = vunpack.c.l.b16 %v3356
        %v4697 = vunpack.c.h.b16 %v3356
        %v4698 = vunpack.c.l.b16 %v3357
        %v4699 = vunpack.c.h.b16 %v3357
        %v4700 = vunpack.c.l.b16 %v3358
        %v4701 = vunpack.c.h.b16 %v3358
        %v4702 = vunpack.c.l.b16 %v3359
        %v4703 = vunpack.c.h.b16 %v3359
        %v4704 = vunpack.c.l.b16 %v3360
        %v4705 = vunpack.c.h.b16 %v3360
        %v4706 = vunpack.c.l.b16 %v3361
        %v4707 = vunpack.c.h.b16 %v3361
        %v4708 = vunpack.c.l.b16 %v3362
        %v4709 = vunpack.c.h.b16 %v3362
        %v4710 = vunpack.c.l.b16 %v3363
        %v4711 = vunpack.c.h.b16 %v3363
        %v4712 = vunpack.c.l.b16 %v3364
        %v4713 = vunpack.c.h.b16 %v3364
        %v4714 = vunpack.c.l.b16 %v3365
        %v4715 = vunpack.c.h.b16 %v3365
        %v4716 = vunpack.c.l.b16 %v3366
        %v4717 = vunpack.c.h.b16 %v3366
        %v4718 = vunpack.c.l.b16 %v3367
        %v4719 = vunpack.c.h.b16 %v3367
        %v4720 = vunpack.c.l.b16 %v3368
        %v4721 = vunpack.c.h.b16 %v3368
        %v4722 = vunpack.c.l.b16 %v3369
        %v4723 = vunpack.c.h.b16 %v3369
        %v4724 = vunpack.c.l.b16 %v3370
        %v4725 = vunpack.c.h.b16 %v3370
        %v4726 = vunpack.c.l.b16 %v3371
        %v4727 = vunpack.c.h.b16 %v3371
        %v4728 = vunpack.c.l.b16 %v3372
        %v4729 = vunpack.c.h.b16 %v3372
        %v4730 = vunpack.c.l.b16 %v3373
        %v4731 = vunpack.c.h.b16 %v3373
        %v4732 = vunpack.c.l.b16 %v3374
        %v4733 = vunpack.c.h.b16 %v3374
        %v4734 = vunpack.c.l.b16 %v3375
        %v4735 = vunpack.c.h.b16 %v3375
        %v4736 = vunpack.c.l.b16 %v3376
        %v4737 = vunpack.c.h.b16 %v3376
        %v4738 = vunpack.c.l.b16 %v3377
        %v4739 = vunpack.c.h.b16 %v3377
        %v4740 = vunpack.c.l.b16 %v3378
        %v4741 = vunpack.c.h.b16 %v3378
        %v4742 = vunpack.c.l.b16 %v3379
        %v4743 = vunpack.c.h.b16 %v3379
        %v4744 = vunpack.c.l.b16 %v3380
        %v4745 = vunpack.c.h.b16 %v3380
        %v4746 = vunpack.c.l.b16 %v3381
        %v4747 = vunpack.c.h.b16 %v3381
        %v4748 = vunpack.c.l.b16 %v3382
        %v4749 = vunpack.c.h.b16 %v3382
        %v4750 = vunpack.c.l.b16 %v3383
        %v4751 = vunpack.c.h.b16 %v3383
        %v4752 = vunpack.c.l.b16 %v3384
        %v4753 = vunpack.c.h.b16 %v3384
        %v4754 = vunpack.c.l.b16 %v3385
        %v4755 = vunpack.c.h.b16 %v3385
        %v4756 = vunpack.c.l.b16 %v3386
        %v4757 = vunpack.c.h.b16 %v3386
        %v4758 = vunpack.c.l.b16 %v3387
        %v4759 = vunpack.c.h.b16 %v3387
        %v4760 = vunpack.c.l.b16 %v3388
        %v4761 = vunpack.c.h.b16 %v3388
        %v4762 = vunpack.c.l.b16 %v3389
        %v4763 = vunpack.c.h.b16 %v3389
        %v4764 = vunpack.c.l.b16 %v3390
        %v4765 = vunpack.c.h.b16 %v3390
        %v4766 = vunpack.c.l.b16 %v3391
        %v4767 = vunpack.c.h.b16 %v3391
        %v4768 = vunpack.c.l.b16 %v3392
        %v4769 = vunpack.c.h.b16 %v3392
        %v4770 = vunpack.c.l.b16 %v3393
        %v4771 = vunpack.c.h.b16 %v3393
        %v4772 = vunpack.c.l.b16 %v3394
        %v4773 = vunpack.c.h.b16 %v3394
        %v4774 = vunpack.c.l.b16 %v3395
        %v4775 = vunpack.c.h.b16 %v3395
        %v4776 = vunpack.c.l.b16 %v3396
        %v4777 = vunpack.c.h.b16 %v3396
        %v4778 = vunpack.c.l.b16 %v3397
        %v4779 = vunpack.c.h.b16 %v3397
        %v4780 = vunpack.c.l.b16 %v3398
        %v4781 = vunpack.c.h.b16 %v3398
        %v4782 = vunpack.c.l.b16 %v3399
        %v4783 = vunpack.c.h.b16 %v3399
        %v4784 = vunpack.c.l.b16 %v3400
        %v4785 = vunpack.c.h.b16 %v3400
        %v4786 = vunpack.c.l.b16 %v3401
        %v4787 = vunpack.c.h.b16 %v3401
        %v4788 = vunpack.c.l.b16 %v3402
        %v4789 = vunpack.c.h.b16 %v3402
        %v4790 = vunpack.c.l.b16 %v3403
        %v4791 = vunpack.c.h.b16 %v3403
        %v4792 = vunpack.c.l.b16 %v3404
        %v4793 = vunpack.c.h.b16 %v3404
        %v4794 = vunpack.c.l.b16 %v3405
        %v4795 = vunpack.c.h.b16 %v3405
        %v4796 = vunpack.c.l.b16 %v3406
        %v4797 = vunpack.c.h.b16 %v3406
        %v4798 = vunpack.c.l.b16 %v3407
        %v4799 = vunpack.c.h.b16 %v3407
        %v4800 = vunpack.c.l.b16 %v3408
        %v4801 = vunpack.c.h.b16 %v3408
        %v4802 = vunpack.c.l.b16 %v3409
        %v4803 = vunpack.c.h.b16 %v3409
        %v4804 = vunpack.c.l.b16 %v3410
        %v4805 = vunpack.c.h.b16 %v3410
        %v4806 = vunpack.c.l.b16 %v3411
        %v4807 = vunpack.c.h.b16 %v3411
        %v4808 = vunpack.c.l.b16 %v3412
        %v4809 = vunpack.c.h.b16 %v3412
        %v4810 = vunpack.c.l.b16 %v3413
        %v4811 = vunpack.c.h.b16 %v3413
        %v4812 = vunpack.c.l.b16 %v3414
        %v4813 = vunpack.c.h.b16 %v3414
        %v4814 = vunpack.c.l.b16 %v3415
        %v4815 = vunpack.c.h.b16 %v3415
        %v4816 = vunpack.c.l.b16 %v3416
        %v4817 = vunpack.c.h.b16 %v3416
        %v4818 = vunpack.c.l.b16 %v3417
        %v4819 = vunpack.c.h.b16 %v3417
        %v4820 = vunpack.c.l.b16 %v3418
        %v4821 = vunpack.c.h.b16 %v3418
        %v4822 = vunpack.c.l.b16 %v3419
        %v4823 = vunpack.c.h.b16 %v3419
        %v4824 = vunpack.c.l.b16 %v3420
        %v4825 = vunpack.c.h.b16 %v3420
        %v4826 = vunpack.c.l.b16 %v3421
        %v4827 = vunpack.c.h.b16 %v3421
        %v4828 = vunpack.c.l.b16 %v3422
        %v4829 = vunpack.c.h.b16 %v3422
        %v4830 = vunpack.c.l.b16 %v3423
        %v4831 = vunpack.c.h.b16 %v3423
        %v4832 = vunpack.c.l.b16 %v3424
        %v4833 = vunpack.c.h.b16 %v3424
        %v4834 = vunpack.c.l.b16 %v3425
        %v4835 = vunpack.c.h.b16 %v3425
        %v4836 = vunpack.c.l.b16 %v3426
        %v4837 = vunpack.c.h.b16 %v3426
        %v4838 = vunpack.c.l.b16 %v3427
        %v4839 = vunpack.c.h.b16 %v3427
        %v4840 = vunpack.c.l.b16 %v3428
        %v4841 = vunpack.c.h.b16 %v3428
        %v4842 = vunpack.c.l.b16 %v3429
        %v4843 = vunpack.c.h.b16 %v3429
        %v4844 = vunpack.c.l.b16 %v3430
        %v4845 = vunpack.c.h.b16 %v3430
        %v4846 = vunpack.c.l.b16 %v3431
        %v4847 = vunpack.c.h.b16 %v3431
        %v4848 = vunpack.c.l.b16 %v3432
        %v4849 = vunpack.c.h.b16 %v3432
        %v4850 = vunpack.c.l.b16 %v3433
        %v4851 = vunpack.c.h.b16 %v3433
        %v4852 = vunpack.c.l.b16 %v3434
        %v4853 = vunpack.c.h.b16 %v3434
        %v4854 = vunpack.c.l.b16 %v3435
        %v4855 = vunpack.c.h.b16 %v3435
        %v4856 = vunpack.c.l.b16 %v3436
        %v4857 = vunpack.c.h.b16 %v3436
        %v4858 = vunpack.c.l.b16 %v3437
        %v4859 = vunpack.c.h.b16 %v3437
        %v4860 = vunpack.c.l.b16 %v3438
        %v4861 = vunpack.c.h.b16 %v3438
        %v4862 = vunpack.c.l.b16 %v3439
        %v4863 = vunpack.c.h.b16 %v3439
        %v4864 = vunpack.c.l.b16 %v3440
        %v4865 = vunpack.c.h.b16 %v3440
        %v4866 = vunpack.c.l.b16 %v3441
        %v4867 = vunpack.c.h.b16 %v3441
        %v4868 = vunpack.c.l.b16 %v3442
        %v4869 = vunpack.c.h.b16 %v3442
        %v4870 = vunpack.c.l.b16 %v3443
        %v4871 = vunpack.c.h.b16 %v3443
        %v4872 = vunpack.c.l.b16 %v3444
        %v4873 = vunpack.c.h.b16 %v3444
        %v4874 = vunpack.c.l.b16 %v3445
        %v4875 = vunpack.c.h.b16 %v3445
        %v4876 = vunpack.c.l.b16 %v3446
        %v4877 = vunpack.c.h.b16 %v3446
        %v4878 = vunpack.c.l.b16 %v3447
        %v4879 = vunpack.c.h.b16 %v3447
        %v4880 = vunpack.c.l.b16 %v3448
        %v4881 = vunpack.c.h.b16 %v3448
        %v4882 = vunpack.c.l.b16 %v3449
        %v4883 = vunpack.c.h.b16 %v3449
        %v4884 = vunpack.c.l.b16 %v3450
        %v4885 = vunpack.c.h.b16 %v3450
        %v4886 = vunpack.c.l.b16 %v3451
        %v4887 = vunpack.c.h.b16 %v3451
        %v4888 = vunpack.c.l.b16 %v3452
        %v4889 = vunpack.c.h.b16 %v3452
        %v4890 = vunpack.c.l.b16 %v3453
        %v4891 = vunpack.c.h.b16 %v3453
        %v4892 = vunpack.c.l.b16 %v3454
        %v4893 = vunpack.c.h.b16 %v3454
        %v4894 = vunpack.c.l.b16 %v3455
        %v4895 = vunpack.c.h.b16 %v3455
        %v4896 = vunpack.c.l.b16 %v3456
        %v4897 = vunpack.c.h.b16 %v3456
        %v4898 = vunpack.c.l.b16 %v3457
        %v4899 = vunpack.c.h.b16 %v3457
        %v4900 = vunpack.c.l.b16 %v3458
        %v4901 = vunpack.c.h.b16 %v3458
        %v4902 = vunpack.c.l.b16 %v3459
        %v4903 = vunpack.c.h.b16 %v3459
        %v4904 = vunpack.c.l.b16 %v3460
        %v4905 = vunpack.c.h.b16 %v3460
        %v4906 = vunpack.c.l.b16 %v3461
        %v4907 = vunpack.c.h.b16 %v3461
        %v4908 = vunpack.c.l.b16 %v3462
        %v4909 = vunpack.c.h.b16 %v3462
        %v4910 = vunpack.c.l.b16 %v3463
        %v4911 = vunpack.c.h.b16 %v3463
        %v4912 = vunpack.c.l.b16 %v3464
        %v4913 = vunpack.c.h.b16 %v3464
        %v4914 = vunpack.c.l.b16 %v3465
        %v4915 = vunpack.c.h.b16 %v3465
        %v4916 = vunpack.c.l.b16 %v3466
        %v4917 = vunpack.c.h.b16 %v3466
        %v4918 = vunpack.c.l.b16 %v3467
        %v4919 = vunpack.c.h.b16 %v3467
        %v4920 = vunpack.c.l.b16 %v3468
        %v4921 = vunpack.c.h.b16 %v3468
        %v4922 = vunpack.c.l.b16 %v3469
        %v4923 = vunpack.c.h.b16 %v3469
        %v4924 = vunpack.c.l.b16 %v3470
        %v4925 = vunpack.c.h.b16 %v3470
        %v4926 = vunpack.c.l.b16 %v3471
        %v4927 = vunpack.c.h.b16 %v3471
        %v4928 = vunpack.c.l.b16 %v3472
        %v4929 = vunpack.c.h.b16 %v3472
        %v4930 = vunpack.c.l.b16 %v3473
        %v4931 = vunpack.c.h.b16 %v3473
        %v4932 = vunpack.c.l.b16 %v3474
        %v4933 = vunpack.c.h.b16 %v3474
        %v4934 = vunpack.c.l.b16 %v3475
        %v4935 = vunpack.c.h.b16 %v3475
        %v4936 = vunpack.c.l.b16 %v3476
        %v4937 = vunpack.c.h.b16 %v3476
        %v4938 = vunpack.c.l.b16 %v3477
        %v4939 = vunpack.c.h.b16 %v3477
        %v4940 = vunpack.c.l.b16 %v3478
        %v4941 = vunpack.c.h.b16 %v3478
        %v4942 = vunpack.c.l.b16 %v3479
        %v4943 = vunpack.c.h.b16 %v3479
        %v4944 = vunpack.c.l.b16 %v3480
        %v4945 = vunpack.c.h.b16 %v3480
        %v4946 = vunpack.c.l.b16 %v3481
        %v4947 = vunpack.c.h.b16 %v3481
        %v4948 = vunpack.c.l.b16 %v3482
        %v4949 = vunpack.c.h.b16 %v3482
        %v4950 = vunpack.c.l.b16 %v3483
        %v4951 = vunpack.c.h.b16 %v3483
        %v4952 = vunpack.c.l.b16 %v3484
        %v4953 = vunpack.c.h.b16 %v3484
        %v4954 = vunpack.c.l.b16 %v3485
        %v4955 = vunpack.c.h.b16 %v3485
        %v4956 = vunpack.c.l.b16 %v3486
        %v4957 = vunpack.c.h.b16 %v3486
        %v4958 = vunpack.c.l.b16 %v3487
        %v4959 = vunpack.c.h.b16 %v3487
        %v4960 = vunpack.c.l.b16 %v3488
        %v4961 = vunpack.c.h.b16 %v3488
        %v4962 = vunpack.c.l.b16 %v3489
        %v4963 = vunpack.c.h.b16 %v3489
        %v4964 = vunpack.c.l.b16 %v3490
        %v4965 = vunpack.c.h.b16 %v3490
        %v4966 = vunpack.c.l.b16 %v3491
        %v4967 = vunpack.c.h.b16 %v3491
        %v4968 = vunpack.c.l.b16 %v3492
        %v4969 = vunpack.c.h.b16 %v3492
        %v4970 = vunpack.c.l.b16 %v3493
        %v4971 = vunpack.c.h.b16 %v3493
        %v4972 = vunpack.c.l.b16 %v3494
        %v4973 = vunpack.c.h.b16 %v3494
        %v4974 = vunpack.c.l.b16 %v3495
        %v4975 = vunpack.c.h.b16 %v3495
        %v4976 = vunpack.c.l.b16 %v3496
        %v4977 = vunpack.c.h.b16 %v3496
        %v4978 = vunpack.c.l.b16 %v3497
        %v4979 = vunpack.c.h.b16 %v3497
        %v4980 = vunpack.c.l.b16 %v3498
        %v4981 = vunpack.c.h.b16 %v3498
        %v4982 = vunpack.c.l.b16 %v3499
        %v4983 = vunpack.c.h.b16 %v3499
        %v4984 = vunpack.c.l.b16 %v3500
        %v4985 = vunpack.c.h.b16 %v3500
        %v4986 = vunpack.c.l.b16 %v3501
        %v4987 = vunpack.c.h.b16 %v3501
        %v4988 = vunpack.c.l.b16 %v3502
        %v4989 = vunpack.c.h.b16 %v3502
        %v4990 = vunpack.c.l.b16 %v3503
        %v4991 = vunpack.c.h.b16 %v3503
        %v4992 = vunpack.c.l.b16 %v3504
        %v4993 = vunpack.c.h.b16 %v3504
        %v4994 = vunpack.c.l.b16 %v3505
        %v4995 = vunpack.c.h.b16 %v3505
        %v4996 = vunpack.c.l.b16 %v3506
        %v4997 = vunpack.c.h.b16 %v3506
        %v4998 = vunpack.c.l.b16 %v3507
        %v4999 = vunpack.c.h.b16 %v3507
        %v5000 = vunpack.c.l.b16 %v3508
        %v5001 = vunpack.c.h.b16 %v3508
        %v5002 = vunpack.c.l.b16 %v3509
        %v5003 = vunpack.c.h.b16 %v3509
        %v5004 = vunpack.c.l.b16 %v3510
        %v5005 = vunpack.c.h.b16 %v3510
        %v5006 = vunpack.c.l.b16 %v3511
        %v5007 = vunpack.c.h.b16 %v3511
        %v5008 = vunpack.c.l.b16 %v3512
        %v5009 = vunpack.c.h.b16 %v3512
        %v5010 = vunpack.c.l.b16 %v3513
        %v5011 = vunpack.c.h.b16 %v3513
        %v5012 = vunpack.c.l.b16 %v3514
        %v5013 = vunpack.c.h.b16 %v3514
        %v5014 = vunpack.c.l.b16 %v3515
        %v5015 = vunpack.c.h.b16 %v3515
        %v5016 = vunpack.c.l.b16 %v3516
        %v5017 = vunpack.c.h.b16 %v3516
        %v5018 = vunpack.c.l.b16 %v3517
        %v5019 = vunpack.c.h.b16 %v3517
        %v5020 = vunpack.c.l.b16 %v3518
        %v5021 = vunpack.c.h.b16 %v3518
        %v5022 = vunpack.c.l.b16 %v3519
        %v5023 = vunpack.c.h.b16 %v3519
        %v5024 = vunpack.c.l.b16 %v3520
        %v5025 = vunpack.c.h.b16 %v3520
        %v5026 = vunpack.c.l.b16 %v3521
        %v5027 = vunpack.c.h.b16 %v3521
        %v5028 = vunpack.c.l.b16 %v3522
        %v5029 = vunpack.c.h.b16 %v3522
        %v5030 = vunpack.c.l.b16 %v3523
        %v5031 = vunpack.c.h.b16 %v3523
        %v5032 = vunpack.c.l.b16 %v3524
        %v5033 = vunpack.c.h.b16 %v3524
        %v5034 = vunpack.c.l.b16 %v3525
        %v5035 = vunpack.c.h.b16 %v3525
        %v5036 = vunpack.c.l.b16 %v3526
        %v5037 = vunpack.c.h.b16 %v3526
        %v5038 = vunpack.c.l.b16 %v3527
        %v5039 = vunpack.c.h.b16 %v3527
        %v5040 = vunpack.c.l.b16 %v3528
        %v5041 = vunpack.c.h.b16 %v3528
        %v5042 = vunpack.c.l.b16 %v3529
        %v5043 = vunpack.c.h.b16 %v3529
        %v5044 = vunpack.c.l.b16 %v3530
        %v5045 = vunpack.c.h.b16 %v3530
        %v5046 = vunpack.c.l.b16 %v3531
        %v5047 = vunpack.c.h.b16 %v3531
        %v5048 = vunpack.c.l.b16 %v3532
        %v5049 = vunpack.c.h.b16 %v3532
        %v5050 = vunpack.c.l.b16 %v3533
        %v5051 = vunpack.c.h.b16 %v3533
        %v5052 = vunpack.c.l.b16 %v3534
        %v5053 = vunpack.c.h.b16 %v3534
        %v5054 = vunpack.c.l.b16 %v3535
        %v5055 = vunpack.c.h.b16 %v3535
        %v5056 = vunpack.c.l.b16 %v3536
        %v5057 = vunpack.c.h.b16 %v3536
        %v5058 = vunpack.c.l.b16 %v3537
        %v5059 = vunpack.c.h.b16 %v3537
        %v5060 = vunpack.c.l.b16 %v3538
        %v5061 = vunpack.c.h.b16 %v3538
        %v5062 = vunpack.c.l.b16 %v3539
        %v5063 = vunpack.c.h.b16 %v3539
        %v5064 = vunpack.c.l.b16 %v3540
        %v5065 = vunpack.c.h.b16 %v3540
        %v5066 = vunpack.c.l.b16 %v3541
        %v5067 = vunpack.c.h.b16 %v3541
        %v5068 = vunpack.c.l.b16 %v3542
        %v5069 = vunpack.c.h.b16 %v3542
        %v5070 = vunpack.c.l.b16 %v3543
        %v5071 = vunpack.c.h.b16 %v3543
        %v5072 = vunpack.c.l.b16 %v3544
        %v5073 = vunpack.c.h.b16 %v3544
        %v5074 = vunpack.c.l.b16 %v3545
        %v5075 = vunpack.c.h.b16 %v3545
        %v5076 = vunpack.c.l.b16 %v3546
        %v5077 = vunpack.c.h.b16 %v3546
        %v5078 = vunpack.c.l.b16 %v3547
        %v5079 = vunpack.c.h.b16 %v3547
        %v5080 = vunpack.c.l.b16 %v3548
        %v5081 = vunpack.c.h.b16 %v3548
        %v5082 = vunpack.c.l.b16 %v3549
        %v5083 = vunpack.c.h.b16 %v3549
        %v5084 = vunpack.c.l.b16 %v3550
        %v5085 = vunpack.c.h.b16 %v3550
        %v5086 = vunpack.c.l.b16 %v3551
        %v5087 = vunpack.c.h.b16 %v3551
        %v5088 = vunpack.c.l.b16 %v3552
        %v5089 = vunpack.c.h.b16 %v3552
        %v5090 = vunpack.c.l.b16 %v3553
        %v5091 = vunpack.c.h.b16 %v3553
        %v5092 = vunpack.c.l.b16 %v3554
        %v5093 = vunpack.c.h.b16 %v3554
        %v5094 = vunpack.c.l.b16 %v3555
        %v5095 = vunpack.c.h.b16 %v3555
        %v5096 = vunpack.c.l.b16 %v3556
        %v5097 = vunpack.c.h.b16 %v3556
        %v5098 = vunpack.c.l.b16 %v3557
        %v5099 = vunpack.c.h.b16 %v3557
        %v5100 = vunpack.c.l.b16 %v3558
        %v5101 = vunpack.c.h.b16 %v3558
        %v5102 = vunpack.c.l.b16 %v3559
        %v5103 = vunpack.c.h.b16 %v3559
        %v5104 = vunpack.c.l.b16 %v3560
        %v5105 = vunpack.c.h.b16 %v3560
        %v5106 = vunpack.c.l.b16 %v3561
        %v5107 = vunpack.c.h.b16 %v3561
        %v5108 = vunpack.c.l.b16 %v3562
        %v5109 = vunpack.c.h.b16 %v3562
        %v5110 = vunpack.c.l.b16 %v3563
        %v5111 = vunpack.c.h.b16 %v3563
        %v5112 = vunpack.c.l.b16 %v3564
        %v5113 = vunpack.c.h.b16 %v3564
        %v5114 = vunpack.c.l.b16 %v3565
        %v5115 = vunpack.c.h.b16 %v3565
        %v5116 = vunpack.c.l.b16 %v3566
        %v5117 = vunpack.c.h.b16 %v3566
        %v5118 = vunpack.c.l.b16 %v3567
        %v5119 = vunpack.c.h.b16 %v3567
        %v5120 = vunpack.c.l.b16 %v3568
        %v5121 = vunpack.c.h.b16 %v3568
        %v5122 = vunpack.c.l.b16 %v3569
        %v5123 = vunpack.c.h.b16 %v3569
        %v5124 = vunpack.c.l.b16 %v3570
        %v5125 = vunpack.c.h.b16 %v3570
        %v5126 = vunpack.c.l.b16 %v3571
        %v5127 = vunpack.c.h.b16 %v3571
        %v5128 = vunpack.c.l.b16 %v3572
        %v5129 = vunpack.c.h.b16 %v3572
        %v5130 = vunpack.c.l.b16 %v3573
        %v5131 = vunpack.c.h.b16 %v3573
        %v5132 = vunpack.c.l.b16 %v3574
        %v5133 = vunpack.c.h.b16 %v3574
        %v5134 = vunpack.c.l.b16 %v3575
        %v5135 = vunpack.c.h.b16 %v3575
        %v5136 = vunpack.c.l.b16 %v3576
        %v5137 = vunpack.c.h.b16 %v3576
        %v5138 = vunpack.c.l.b16 %v3577
        %v5139 = vunpack.c.h.b16 %v3577
        %v5140 = vunpack.c.l.b16 %v3578
        %v5141 = vunpack.c.h.b16 %v3578
        %v5142 = vunpack.c.l.b16 %v3579
        %v5143 = vunpack.c.h.b16 %v3579
        %v5144 = vunpack.c.l.b16 %v3580
        %v5145 = vunpack.c.h.b16 %v3580
        %v5146 = vunpack.c.l.b16 %v3581
        %v5147 = vunpack.c.h.b16 %v3581
        %v5148 = vunpack.c.l.b16 %v3582
        %v5149 = vunpack.c.h.b16 %v3582
        %v5150 = vunpack.c.l.b16 %v3583
        %v5151 = vunpack.c.h.b16 %v3583
        %v5152 = vunpack.c.l.b16 %v3584
        %v5153 = vunpack.c.h.b16 %v3584
        %v5154 = vunpack.c.l.b16 %v3585
        %v5155 = vunpack.c.h.b16 %v3585
        %v5156 = vunpack.c.l.b16 %v3586
        %v5157 = vunpack.c.h.b16 %v3586
        %v5158 = vunpack.c.l.b16 %v3587
        %v5159 = vunpack.c.h.b16 %v3587
        %v5160 = vunpack.c.l.b16 %v3588
        %v5161 = vunpack.c.h.b16 %v3588
        %v5162 = vunpack.c.l.b16 %v3589
        %v5163 = vunpack.c.h.b16 %v3589
        %v5164 = vunpack.c.l.b16 %v3590
        %v5165 = vunpack.c.h.b16 %v3590
        %v5166 = vunpack.c.l.b16 %v3591
        %v5167 = vunpack.c.h.b16 %v3591
        %v5168 = vunpack.c.l.b16 %v3592
        %v5169 = vunpack.c.h.b16 %v3592
        %v5170 = vpack.c.b16 %v4154, %v4146
        %v5171 = vpack.c.b16 %v4155, %v4147
        %v5172 = vpack.c.b16 %v4156, %v4148
        %v5173 = vpack.c.b16 %v4157, %v4149
        %v5174 = vpack.c.b16 %v4158, %v4150
        %v5175 = vpack.c.b16 %v4159, %v4151
        %v5176 = vpack.c.b16 %v4160, %v4152
        %v5177 = vpack.c.b16 %v4161, %v4153
        %v5178 = vpack.c.b16 %v4170, %v4162
        %v5179 = vpack.c.b16 %v4171, %v4163
        %v5180 = vpack.c.b16 %v4172, %v4164
        %v5181 = vpack.c.b16 %v4173, %v4165
        %v5182 = vpack.c.b16 %v4174, %v4166
        %v5183 = vpack.c.b16 %v4175, %v4167
        %v5184 = vpack.c.b16 %v4176, %v4168
        %v5185 = vpack.c.b16 %v4177, %v4169
        %v5186 = vpack.c.b16 %v4186, %v4178
        %v5187 = vpack.c.b16 %v4187, %v4179
        %v5188 = vpack.c.b16 %v4188, %v4180
        %v5189 = vpack.c.b16 %v4189, %v4181
        %v5190 = vpack.c.b16 %v4190, %v4182
        %v5191 = vpack.c.b16 %v4191, %v4183
        %v5192 = vpack.c.b16 %v4192, %v4184
        %v5193 = vpack.c.b16 %v4193, %v4185
        %v5194 = vpack.c.b16 %v4202, %v4194
        %v5195 = vpack.c.b16 %v4203, %v4195
        %v5196 = vpack.c.b16 %v4204, %v4196
        %v5197 = vpack.c.b16 %v4205, %v4197
        %v5198 = vpack.c.b16 %v4206, %v4198
        %v5199 = vpack.c.b16 %v4207, %v4199
        %v5200 = vpack.c.b16 %v4208, %v4200
        %v5201 = vpack.c.b16 %v4209, %v4201
        %v5202 = vpack.c.b16 %v4218, %v4210
        %v5203 = vpack.c.b16 %v4219, %v4211
        %v5204 = vpack.c.b16 %v4220, %v4212
        %v5205 = vpack.c.b16 %v4221, %v4213
        %v5206 = vpack.c.b16 %v4222, %v4214
        %v5207 = vpack.c.b16 %v4223, %v4215
        %v5208 = vpack.c.b16 %v4224, %v4216
        %v5209 = vpack.c.b16 %v4225, %v4217
        %v5210 = vpack.c.b16 %v4234, %v4226
        %v5211 = vpack.c.b16 %v4235, %v4227
        %v5212 = vpack.c.b16 %v4236, %v4228
        %v5213 = vpack.c.b16 %v4237, %v4229
        %v5214 = vpack.c.b16 %v4238, %v4230
        %v5215 = vpack.c.b16 %v4239, %v4231
        %v5216 = vpack.c.b16 %v4240, %v4232
        %v5217 = vpack.c.b16 %v4241, %v4233
        %v5218 = vpack.c.b16 %v4250, %v4242
        %v5219 = vpack.c.b16 %v4251, %v4243
        %v5220 = vpack.c.b16 %v4252, %v4244
        %v5221 = vpack.c.b16 %v4253, %v4245
        %v5222 = vpack.c.b16 %v4254, %v4246
        %v5223 = vpack.c.b16 %v4255, %v4247
        %v5224 = vpack.c.b16 %v4256, %v4248
        %v5225 = vpack.c.b16 %v4257, %v4249
        %v5226 = vpack.c.b16 %v4266, %v4258
        %v5227 = vpack.c.b16 %v4267, %v4259
        %v5228 = vpack.c.b16 %v4268, %v4260
        %v5229 = vpack.c.b16 %v4269, %v4261
        %v5230 = vpack.c.b16 %v4270, %v4262
        %v5231 = vpack.c.b16 %v4271, %v4263
        %v5232 = vpack.c.b16 %v4272, %v4264
        %v5233 = vpack.c.b16 %v4273, %v4265
        %v5234 = vpack.c.b16 %v4282, %v4274
        %v5235 = vpack.c.b16 %v4283, %v4275
        %v5236 = vpack.c.b16 %v4284, %v4276
        %v5237 = vpack.c.b16 %v4285, %v4277
        %v5238 = vpack.c.b16 %v4286, %v4278
        %v5239 = vpack.c.b16 %v4287, %v4279
        %v5240 = vpack.c.b16 %v4288, %v4280
        %v5241 = vpack.c.b16 %v4289, %v4281
        %v5242 = vpack.c.b16 %v4298, %v4290
        %v5243 = vpack.c.b16 %v4299, %v4291
        %v5244 = vpack.c.b16 %v4300, %v4292
        %v5245 = vpack.c.b16 %v4301, %v4293
        %v5246 = vpack.c.b16 %v4302, %v4294
        %v5247 = vpack.c.b16 %v4303, %v4295
        %v5248 = vpack.c.b16 %v4304, %v4296
        %v5249 = vpack.c.b16 %v4305, %v4297
        %v5250 = vpack.c.b16 %v4314, %v4306
        %v5251 = vpack.c.b16 %v4315, %v4307
        %v5252 = vpack.c.b16 %v4316, %v4308
        %v5253 = vpack.c.b16 %v4317, %v4309
        %v5254 = vpack.c.b16 %v4318, %v4310
        %v5255 = vpack.c.b16 %v4319, %v4311
        %v5256 = vpack.c.b16 %v4320, %v4312
        %v5257 = vpack.c.b16 %v4321, %v4313
        %v5258 = vpack.c.b16 %v4330, %v4322
        %v5259 = vpack.c.b16 %v4331, %v4323
        %v5260 = vpack.c.b16 %v4332, %v4324
        %v5261 = vpack.c.b16 %v4333, %v4325
        %v5262 = vpack.c.b16 %v4334, %v4326
        %v5263 = vpack.c.b16 %v4335, %v4327
        %v5264 = vpack.c.b16 %v4336, %v4328
        %v5265 = vpack.c.b16 %v4337, %v4329
        %v5266 = vpack.c.b16 %v4346, %v4338
        %v5267 = vpack.c.b16 %v4347, %v4339
        %v5268 = vpack.c.b16 %v4348, %v4340
        %v5269 = vpack.c.b16 %v4349, %v4341
        %v5270 = vpack.c.b16 %v4350, %v4342
        %v5271 = vpack.c.b16 %v4351, %v4343
        %v5272 = vpack.c.b16 %v4352, %v4344
        %v5273 = vpack.c.b16 %v4353, %v4345
        %v5274 = vpack.c.b16 %v4362, %v4354
        %v5275 = vpack.c.b16 %v4363, %v4355
        %v5276 = vpack.c.b16 %v4364, %v4356
        %v5277 = vpack.c.b16 %v4365, %v4357
        %v5278 = vpack.c.b16 %v4366, %v4358
        %v5279 = vpack.c.b16 %v4367, %v4359
        %v5280 = vpack.c.b16 %v4368, %v4360
        %v5281 = vpack.c.b16 %v4369, %v4361
        %v5282 = vpack.c.b16 %v4378, %v4370
        %v5283 = vpack.c.b16 %v4379, %v4371
        %v5284 = vpack.c.b16 %v4380, %v4372
        %v5285 = vpack.c.b16 %v4381, %v4373
        %v5286 = vpack.c.b16 %v4382, %v4374
        %v5287 = vpack.c.b16 %v4383, %v4375
        %v5288 = vpack.c.b16 %v4384, %v4376
        %v5289 = vpack.c.b16 %v4385, %v4377
        %v5290 = vpack.c.b16 %v4394, %v4386
        %v5291 = vpack.c.b16 %v4395, %v4387
        %v5292 = vpack.c.b16 %v4396, %v4388
        %v5293 = vpack.c.b16 %v4397, %v4389
        %v5294 = vpack.c.b16 %v4398, %v4390
        %v5295 = vpack.c.b16 %v4399, %v4391
        %v5296 = vpack.c.b16 %v4400, %v4392
        %v5297 = vpack.c.b16 %v4401, %v4393
        %v5298 = vpack.c.b16 %v4410, %v4402
        %v5299 = vpack.c.b16 %v4411, %v4403
        %v5300 = vpack.c.b16 %v4412, %v4404
        %v5301 = vpack.c.b16 %v4413, %v4405
        %v5302 = vpack.c.b16 %v4414, %v4406
        %v5303 = vpack.c.b16 %v4415, %v4407
        %v5304 = vpack.c.b16 %v4416, %v4408
        %v5305 = vpack.c.b16 %v4417, %v4409
        %v5306 = vpack.c.b16 %v4426, %v4418
        %v5307 = vpack.c.b16 %v4427, %v4419
        %v5308 = vpack.c.b16 %v4428, %v4420
        %v5309 = vpack.c.b16 %v4429, %v4421
        %v5310 = vpack.c.b16 %v4430, %v4422
        %v5311 = vpack.c.b16 %v4431, %v4423
        %v5312 = vpack.c.b16 %v4432, %v4424
        %v5313 = vpack.c.b16 %v4433, %v4425
        %v5314 = vpack.c.b16 %v4442, %v4434
        %v5315 = vpack.c.b16 %v4443, %v4435
        %v5316 = vpack.c.b16 %v4444, %v4436
        %v5317 = vpack.c.b16 %v4445, %v4437
        %v5318 = vpack.c.b16 %v4446, %v4438
        %v5319 = vpack.c.b16 %v4447, %v4439
        %v5320 = vpack.c.b16 %v4448, %v4440
        %v5321 = vpack.c.b16 %v4449, %v4441
        %v5322 = vpack.c.b16 %v4458, %v4450
        %v5323 = vpack.c.b16 %v4459, %v4451
        %v5324 = vpack.c.b16 %v4460, %v4452
        %v5325 = vpack.c.b16 %v4461, %v4453
        %v5326 = vpack.c.b16 %v4462, %v4454
        %v5327 = vpack.c.b16 %v4463, %v4455
        %v5328 = vpack.c.b16 %v4464, %v4456
        %v5329 = vpack.c.b16 %v4465, %v4457
        %v5330 = vpack.c.b16 %v4474, %v4466
        %v5331 = vpack.c.b16 %v4475, %v4467
        %v5332 = vpack.c.b16 %v4476, %v4468
        %v5333 = vpack.c.b16 %v4477, %v4469
        %v5334 = vpack.c.b16 %v4478, %v4470
        %v5335 = vpack.c.b16 %v4479, %v4471
        %v5336 = vpack.c.b16 %v4480, %v4472
        %v5337 = vpack.c.b16 %v4481, %v4473
        %v5338 = vpack.c.b16 %v4490, %v4482
        %v5339 = vpack.c.b16 %v4491, %v4483
        %v5340 = vpack.c.b16 %v4492, %v4484
        %v5341 = vpack.c.b16 %v4493, %v4485
        %v5342 = vpack.c.b16 %v4494, %v4486
        %v5343 = vpack.c.b16 %v4495, %v4487
        %v5344 = vpack.c.b16 %v4496, %v4488
        %v5345 = vpack.c.b16 %v4497, %v4489
        %v5346 = vpack.c.b16 %v4506, %v4498
        %v5347 = vpack.c.b16 %v4507, %v4499
        %v5348 = vpack.c.b16 %v4508, %v4500
        %v5349 = vpack.c.b16 %v4509, %v4501
        %v5350 = vpack.c.b16 %v4510, %v4502
        %v5351 = vpack.c.b16 %v4511, %v4503
        %v5352 = vpack.c.b16 %v4512, %v4504
        %v5353 = vpack.c.b16 %v4513, %v4505
        %v5354 = vpack.c.b16 %v4522, %v4514
        %v5355 = vpack.c.b16 %v4523, %v4515
        %v5356 = vpack.c.b16 %v4524, %v4516
        %v5357 = vpack.c.b16 %v4525, %v4517
        %v5358 = vpack.c.b16 %v4526, %v4518
        %v5359 = vpack.c.b16 %v4527, %v4519
        %v5360 = vpack.c.b16 %v4528, %v4520
        %v5361 = vpack.c.b16 %v4529, %v4521
        %v5362 = vpack.c.b16 %v4538, %v4530
        %v5363 = vpack.c.b16 %v4539, %v4531
        %v5364 = vpack.c.b16 %v4540, %v4532
        %v5365 = vpack.c.b16 %v4541, %v4533
        %v5366 = vpack.c.b16 %v4542, %v4534
        %v5367 = vpack.c.b16 %v4543, %v4535
        %v5368 = vpack.c.b16 %v4544, %v4536
        %v5369 = vpack.c.b16 %v4545, %v4537
        %v5370 = vpack.c.b16 %v4554, %v4546
        %v5371 = vpack.c.b16 %v4555, %v4547
        %v5372 = vpack.c.b16 %v4556, %v4548
        %v5373 = vpack.c.b16 %v4557, %v4549
        %v5374 = vpack.c.b16 %v4558, %v4550
        %v5375 = vpack.c.b16 %v4559, %v4551
        %v5376 = vpack.c.b16 %v4560, %v4552
        %v5377 = vpack.c.b16 %v4561, %v4553
        %v5378 = vpack.c.b16 %v4570, %v4562
        %v5379 = vpack.c.b16 %v4571, %v4563
        %v5380 = vpack.c.b16 %v4572, %v4564
        %v5381 = vpack.c.b16 %v4573, %v4565
        %v5382 = vpack.c.b16 %v4574, %v4566
        %v5383 = vpack.c.b16 %v4575, %v4567
        %v5384 = vpack.c.b16 %v4576, %v4568
        %v5385 = vpack.c.b16 %v4577, %v4569
        %v5386 = vpack.c.b16 %v4586, %v4578
        %v5387 = vpack.c.b16 %v4587, %v4579
        %v5388 = vpack.c.b16 %v4588, %v4580
        %v5389 = vpack.c.b16 %v4589, %v4581
        %v5390 = vpack.c.b16 %v4590, %v4582
        %v5391 = vpack.c.b16 %v4591, %v4583
        %v5392 = vpack.c.b16 %v4592, %v4584
        %v5393 = vpack.c.b16 %v4593, %v4585
        %v5394 = vpack.c.b16 %v4602, %v4594
        %v5395 = vpack.c.b16 %v4603, %v4595
        %v5396 = vpack.c.b16 %v4604, %v4596
        %v5397 = vpack.c.b16 %v4605, %v4597
        %v5398 = vpack.c.b16 %v4606, %v4598
        %v5399 = vpack.c.b16 %v4607, %v4599
        %v5400 = vpack.c.b16 %v4608, %v4600
        %v5401 = vpack.c.b16 %v4609, %v4601
        %v5402 = vpack.c.b16 %v4618, %v4610
        %v5403 = vpack.c.b16 %v4619, %v4611
        %v5404 = vpack.c.b16 %v4620, %v4612
        %v5405 = vpack.c.b16 %v4621, %v4613
        %v5406 = vpack.c.b16 %v4622, %v4614
        %v5407 = vpack.c.b16 %v4623, %v4615
        %v5408 = vpack.c.b16 %v4624, %v4616
        %v5409 = vpack.c.b16 %v4625, %v4617
        %v5410 = vpack.c.b16 %v4634, %v4626
        %v5411 = vpack.c.b16 %v4635, %v4627
        %v5412 = vpack.c.b16 %v4636, %v4628
        %v5413 = vpack.c.b16 %v4637, %v4629
        %v5414 = vpack.c.b16 %v4638, %v4630
        %v5415 = vpack.c.b16 %v4639, %v4631
        %v5416 = vpack.c.b16 %v4640, %v4632
        %v5417 = vpack.c.b16 %v4641, %v4633
        %v5418 = vpack.c.b16 %v4650, %v4642
        %v5419 = vpack.c.b16 %v4651, %v4643
        %v5420 = vpack.c.b16 %v4652, %v4644
        %v5421 = vpack.c.b16 %v4653, %v4645
        %v5422 = vpack.c.b16 %v4654, %v4646
        %v5423 = vpack.c.b16 %v4655, %v4647
        %v5424 = vpack.c.b16 %v4656, %v4648
        %v5425 = vpack.c.b16 %v4657, %v4649
        %v5426 = vpack.c.b16 %v4666, %v4658
        %v5427 = vpack.c.b16 %v4667, %v4659
        %v5428 = vpack.c.b16 %v4668, %v4660
        %v5429 = vpack.c.b16 %v4669, %v4661
        %v5430 = vpack.c.b16 %v4670, %v4662
        %v5431 = vpack.c.b16 %v4671, %v4663
        %v5432 = vpack.c.b16 %v4672, %v4664
        %v5433 = vpack.c.b16 %v4673, %v4665
        %v5434 = vpack.c.b16 %v4682, %v4674
        %v5435 = vpack.c.b16 %v4683, %v4675
        %v5436 = vpack.c.b16 %v4684, %v4676
        %v5437 = vpack.c.b16 %v4685, %v4677
        %v5438 = vpack.c.b16 %v4686, %v4678
        %v5439 = vpack.c.b16 %v4687, %v4679
        %v5440 = vpack.c.b16 %v4688, %v4680
        %v5441 = vpack.c.b16 %v4689, %v4681
        %v5442 = vpack.c.b16 %v4698, %v4690
        %v5443 = vpack.c.b16 %v4699, %v4691
        %v5444 = vpack.c.b16 %v4700, %v4692
        %v5445 = vpack.c.b16 %v4701, %v4693
        %v5446 = vpack.c.b16 %v4702, %v4694
        %v5447 = vpack.c.b16 %v4703, %v4695
        %v5448 = vpack.c.b16 %v4704, %v4696
        %v5449 = vpack.c.b16 %v4705, %v4697
        %v5450 = vpack.c.b16 %v4714, %v4706
        %v5451 = vpack.c.b16 %v4715, %v4707
        %v5452 = vpack.c.b16 %v4716, %v4708
        %v5453 = vpack.c.b16 %v4717, %v4709
        %v5454 = vpack.c.b16 %v4718, %v4710
        %v5455 = vpack.c.b16 %v4719, %v4711
        %v5456 = vpack.c.b16 %v4720, %v4712
        %v5457 = vpack.c.b16 %v4721, %v4713
        %v5458 = vpack.c.b16 %v4730, %v4722
        %v5459 = vpack.c.b16 %v4731, %v4723
        %v5460 = vpack.c.b16 %v4732, %v4724
        %v5461 = vpack.c.b16 %v4733, %v4725
        %v5462 = vpack.c.b16 %v4734, %v4726
        %v5463 = vpack.c.b16 %v4735, %v4727
        %v5464 = vpack.c.b16 %v4736, %v4728
        %v5465 = vpack.c.b16 %v4737, %v4729
        %v5466 = vpack.c.b16 %v4746, %v4738
        %v5467 = vpack.c.b16 %v4747, %v4739
        %v5468 = vpack.c.b16 %v4748, %v4740
        %v5469 = vpack.c.b16 %v4749, %v4741
        %v5470 = vpack.c.b16 %v4750, %v4742
        %v5471 = vpack.c.b16 %v4751, %v4743
        %v5472 = vpack.c.b16 %v4752, %v4744
        %v5473 = vpack.c.b16 %v4753, %v4745
        %v5474 = vpack.c.b16 %v4762, %v4754
        %v5475 = vpack.c.b16 %v4763, %v4755
        %v5476 = vpack.c.b16 %v4764, %v4756
        %v5477 = vpack.c.b16 %v4765, %v4757
        %v5478 = vpack.c.b16 %v4766, %v4758
        %v5479 = vpack.c.b16 %v4767, %v4759
        %v5480 = vpack.c.b16 %v4768, %v4760
        %v5481 = vpack.c.b16 %v4769, %v4761
        %v5482 = vpack.c.b16 %v4778, %v4770
        %v5483 = vpack.c.b16 %v4779, %v4771
        %v5484 = vpack.c.b16 %v4780, %v4772
        %v5485 = vpack.c.b16 %v4781, %v4773
        %v5486 = vpack.c.b16 %v4782, %v4774
        %v5487 = vpack.c.b16 %v4783, %v4775
        %v5488 = vpack.c.b16 %v4784, %v4776
        %v5489 = vpack.c.b16 %v4785, %v4777
        %v5490 = vpack.c.b16 %v4794, %v4786
        %v5491 = vpack.c.b16 %v4795, %v4787
        %v5492 = vpack.c.b16 %v4796, %v4788
        %v5493 = vpack.c.b16 %v4797, %v4789
        %v5494 = vpack.c.b16 %v4798, %v4790
        %v5495 = vpack.c.b16 %v4799, %v4791
        %v5496 = vpack.c.b16 %v4800, %v4792
        %v5497 = vpack.c.b16 %v4801, %v4793
        %v5498 = vpack.c.b16 %v4810, %v4802
        %v5499 = vpack.c.b16 %v4811, %v4803
        %v5500 = vpack.c.b16 %v4812, %v4804
        %v5501 = vpack.c.b16 %v4813, %v4805
        %v5502 = vpack.c.b16 %v4814, %v4806
        %v5503 = vpack.c.b16 %v4815, %v4807
        %v5504 = vpack.c.b16 %v4816, %v4808
        %v5505 = vpack.c.b16 %v4817, %v4809
        %v5506 = vpack.c.b16 %v4826, %v4818
        %v5507 = vpack.c.b16 %v4827, %v4819
        %v5508 = vpack.c.b16 %v4828, %v4820
        %v5509 = vpack.c.b16 %v4829, %v4821
        %v5510 = vpack.c.b16 %v4830, %v4822
        %v5511 = vpack.c.b16 %v4831, %v4823
        %v5512 = vpack.c.b16 %v4832, %v4824
        %v5513 = vpack.c.b16 %v4833, %v4825
        %v5514 = vpack.c.b16 %v4842, %v4834
        %v5515 = vpack.c.b16 %v4843, %v4835
        %v5516 = vpack.c.b16 %v4844, %v4836
        %v5517 = vpack.c.b16 %v4845, %v4837
        %v5518 = vpack.c.b16 %v4846, %v4838
        %v5519 = vpack.c.b16 %v4847, %v4839
        %v5520 = vpack.c.b16 %v4848, %v4840
        %v5521 = vpack.c.b16 %v4849, %v4841
        %v5522 = vpack.c.b16 %v4858, %v4850
        %v5523 = vpack.c.b16 %v4859, %v4851
        %v5524 = vpack.c.b16 %v4860, %v4852
        %v5525 = vpack.c.b16 %v4861, %v4853
        %v5526 = vpack.c.b16 %v4862, %v4854
        %v5527 = vpack.c.b16 %v4863, %v4855
        %v5528 = vpack.c.b16 %v4864, %v4856
        %v5529 = vpack.c.b16 %v4865, %v4857
        %v5530 = vpack.c.b16 %v4874, %v4866
        %v5531 = vpack.c.b16 %v4875, %v4867
        %v5532 = vpack.c.b16 %v4876, %v4868
        %v5533 = vpack.c.b16 %v4877, %v4869
        %v5534 = vpack.c.b16 %v4878, %v4870
        %v5535 = vpack.c.b16 %v4879, %v4871
        %v5536 = vpack.c.b16 %v4880, %v4872
        %v5537 = vpack.c.b16 %v4881, %v4873
        %v5538 = vpack.c.b16 %v4890, %v4882
        %v5539 = vpack.c.b16 %v4891, %v4883
        %v5540 = vpack.c.b16 %v4892, %v4884
        %v5541 = vpack.c.b16 %v4893, %v4885
        %v5542 = vpack.c.b16 %v4894, %v4886
        %v5543 = vpack.c.b16 %v4895, %v4887
        %v5544 = vpack.c.b16 %v4896, %v4888
        %v5545 = vpack.c.b16 %v4897, %v4889
        %v5546 = vpack.c.b16 %v4906, %v4898
        %v5547 = vpack.c.b16 %v4907, %v4899
        %v5548 = vpack.c.b16 %v4908, %v4900
        %v5549 = vpack.c.b16 %v4909, %v4901
        %v5550 = vpack.c.b16 %v4910, %v4902
        %v5551 = vpack.c.b16 %v4911, %v4903
        %v5552 = vpack.c.b16 %v4912, %v4904
        %v5553 = vpack.c.b16 %v4913, %v4905
        %v5554 = vpack.c.b16 %v4922, %v4914
        %v5555 = vpack.c.b16 %v4923, %v4915
        %v5556 = vpack.c.b16 %v4924, %v4916
        %v5557 = vpack.c.b16 %v4925, %v4917
        %v5558 = vpack.c.b16 %v4926, %v4918
        %v5559 = vpack.c.b16 %v4927, %v4919
        %v5560 = vpack.c.b16 %v4928, %v4920
        %v5561 = vpack.c.b16 %v4929, %v4921
        %v5562 = vpack.c.b16 %v4938, %v4930
        %v5563 = vpack.c.b16 %v4939, %v4931
        %v5564 = vpack.c.b16 %v4940, %v4932
        %v5565 = vpack.c.b16 %v4941, %v4933
        %v5566 = vpack.c.b16 %v4942, %v4934
        %v5567 = vpack.c.b16 %v4943, %v4935
        %v5568 = vpack.c.b16 %v4944, %v4936
        %v5569 = vpack.c.b16 %v4945, %v4937
        %v5570 = vpack.c.b16 %v4954, %v4946
        %v5571 = vpack.c.b16 %v4955, %v4947
        %v5572 = vpack.c.b16 %v4956, %v4948
        %v5573 = vpack.c.b16 %v4957, %v4949
        %v5574 = vpack.c.b16 %v4958, %v4950
        %v5575 = vpack.c.b16 %v4959, %v4951
        %v5576 = vpack.c.b16 %v4960, %v4952
        %v5577 = vpack.c.b16 %v4961, %v4953
        %v5578 = vpack.c.b16 %v4970, %v4962
        %v5579 = vpack.c.b16 %v4971, %v4963
        %v5580 = vpack.c.b16 %v4972, %v4964
        %v5581 = vpack.c.b16 %v4973, %v4965
        %v5582 = vpack.c.b16 %v4974, %v4966
        %v5583 = vpack.c.b16 %v4975, %v4967
        %v5584 = vpack.c.b16 %v4976, %v4968
        %v5585 = vpack.c.b16 %v4977, %v4969
        %v5586 = vpack.c.b16 %v4986, %v4978
        %v5587 = vpack.c.b16 %v4987, %v4979
        %v5588 = vpack.c.b16 %v4988, %v4980
        %v5589 = vpack.c.b16 %v4989, %v4981
        %v5590 = vpack.c.b16 %v4990, %v4982
        %v5591 = vpack.c.b16 %v4991, %v4983
        %v5592 = vpack.c.b16 %v4992, %v4984
        %v5593 = vpack.c.b16 %v4993, %v4985
        %v5594 = vpack.c.b16 %v5002, %v4994
        %v5595 = vpack.c.b16 %v5003, %v4995
        %v5596 = vpack.c.b16 %v5004, %v4996
        %v5597 = vpack.c.b16 %v5005, %v4997
        %v5598 = vpack.c.b16 %v5006, %v4998
        %v5599 = vpack.c.b16 %v5007, %v4999
        %v5600 = vpack.c.b16 %v5008, %v5000
        %v5601 = vpack.c.b16 %v5009, %v5001
        %v5602 = vpack.c.b16 %v5018, %v5010
        %v5603 = vpack.c.b16 %v5019, %v5011
        %v5604 = vpack.c.b16 %v5020, %v5012
        %v5605 = vpack.c.b16 %v5021, %v5013
        %v5606 = vpack.c.b16 %v5022, %v5014
        %v5607 = vpack.c.b16 %v5023, %v5015
        %v5608 = vpack.c.b16 %v5024, %v5016
        %v5609 = vpack.c.b16 %v5025, %v5017
        %v5610 = vpack.c.b16 %v5034, %v5026
        %v5611 = vpack.c.b16 %v5035, %v5027
        %v5612 = vpack.c.b16 %v5036, %v5028
        %v5613 = vpack.c.b16 %v5037, %v5029
        %v5614 = vpack.c.b16 %v5038, %v5030
        %v5615 = vpack.c.b16 %v5039, %v5031
        %v5616 = vpack.c.b16 %v5040, %v5032
        %v5617 = vpack.c.b16 %v5041, %v5033
        %v5618 = vpack.c.b16 %v5050, %v5042
        %v5619 = vpack.c.b16 %v5051, %v5043
        %v5620 = vpack.c.b16 %v5052, %v5044
        %v5621 = vpack.c.b16 %v5053, %v5045
        %v5622 = vpack.c.b16 %v5054, %v5046
        %v5623 = vpack.c.b16 %v5055, %v5047
        %v5624 = vpack.c.b16 %v5056, %v5048
        %v5625 = vpack.c.b16 %v5057, %v5049
        %v5626 = vpack.c.b16 %v5066, %v5058
        %v5627 = vpack.c.b16 %v5067, %v5059
        %v5628 = vpack.c.b16 %v5068, %v5060
        %v5629 = vpack.c.b16 %v5069, %v5061
        %v5630 = vpack.c.b16 %v5070, %v5062
        %v5631 = vpack.c.b16 %v5071, %v5063
        %v5632 = vpack.c.b16 %v5072, %v5064
        %v5633 = vpack.c.b16 %v5073, %v5065
        %v5634 = vpack.c.b16 %v5082, %v5074
        %v5635 = vpack.c.b16 %v5083, %v5075
        %v5636 = vpack.c.b16 %v5084, %v5076
        %v5637 = vpack.c.b16 %v5085, %v5077
        %v5638 = vpack.c.b16 %v5086, %v5078
        %v5639 = vpack.c.b16 %v5087, %v5079
        %v5640 = vpack.c.b16 %v5088, %v5080
        %v5641 = vpack.c.b16 %v5089, %v5081
        %v5642 = vpack.c.b16 %v5098, %v5090
        %v5643 = vpack.c.b16 %v5099, %v5091
        %v5644 = vpack.c.b16 %v5100, %v5092
        %v5645 = vpack.c.b16 %v5101, %v5093
        %v5646 = vpack.c.b16 %v5102, %v5094
        %v5647 = vpack.c.b16 %v5103, %v5095
        %v5648 = vpack.c.b16 %v5104, %v5096
        %v5649 = vpack.c.b16 %v5105, %v5097
        %v5650 = vpack.c.b16 %v5114, %v5106
        %v5651 = vpack.c.b16 %v5115, %v5107
        %v5652 = vpack.c.b16 %v5116, %v5108
        %v5653 = vpack.c.b16 %v5117, %v5109
        %v5654 = vpack.c.b16 %v5118, %v5110
        %v5655 = vpack.c.b16 %v5119, %v5111
        %v5656 = vpack.c.b16 %v5120, %v5112
        %v5657 = vpack.c.b16 %v5121, %v5113
        %v5658 = vpack.c.b16 %v5130, %v5122
        %v5659 = vpack.c.b16 %v5131, %v5123
        %v5660 = vpack.c.b16 %v5132, %v5124
        %v5661 = vpack.c.b16 %v5133, %v5125
        %v5662 = vpack.c.b16 %v5134, %v5126
        %v5663 = vpack.c.b16 %v5135, %v5127
        %v5664 = vpack.c.b16 %v5136, %v5128
        %v5665 = vpack.c.b16 %v5137, %v5129
        %v5666 = vpack.c.b16 %v5146, %v5138
        %v5667 = vpack.c.b16 %v5147, %v5139
        %v5668 = vpack.c.b16 %v5148, %v5140
        %v5669 = vpack.c.b16 %v5149, %v5141
        %v5670 = vpack.c.b16 %v5150, %v5142
        %v5671 = vpack.c.b16 %v5151, %v5143
        %v5672 = vpack.c.b16 %v5152, %v5144
        %v5673 = vpack.c.b16 %v5153, %v5145
        %v5674 = vpack.c.b16 %v5162, %v5154
        %v5675 = vpack.c.b16 %v5163, %v5155
        %v5676 = vpack.c.b16 %v5164, %v5156
        %v5677 = vpack.c.b16 %v5165, %v5157
        %v5678 = vpack.c.b16 %v5166, %v5158
        %v5679 = vpack.c.b16 %v5167, %v5159
        %v5680 = vpack.c.b16 %v5168, %v5160
        %v5681 = vpack.c.b16 %v5169, %v5161
        %6194 = vmatprep.subr.bf16.mxu0 %v5227
        %6195 = vmatpush1.bf16.msra.mxu0 %v5226
        %6196 = vmatprep.subr.bf16.mxu0 %v5219
        %6197 = vmatpush1.bf16.msra.mxu0 %v5218
        %6198 = vmatprep.subr.bf16.mxu0 %v5211
        %6199 = vmatpush1.bf16.msra.mxu0 %v5210
        %6200 = vmatprep.subr.bf16.mxu0 %v5203
        %6201 = vmatpush1.bf16.msra.mxu0 %v5202
        %6202 = vmatprep.subr.bf16.mxu0 %v5195
        %6203 = vmatpush1.bf16.msra.mxu0 %v5194
        %6204 = vmatprep.subr.bf16.mxu0 %v5187
        %6205 = vmatpush1.bf16.msra.mxu0 %v5186
        %6206 = vmatprep.subr.bf16.mxu0 %v5179
        %6207 = vmatpush1.bf16.msra.mxu0 %v5178
        %6208 = vmatprep.subr.bf16.mxu0 %v5171
        %6209 = vmatpush1.bf16.msra.mxu0 %v5170
        %6210 = vmatprep.subr.bf16.mxu0 %v5291
        %6211 = vmatpush2.bf16.msra.mxu0 %v5290
        %6212 = vmatprep.subr.bf16.mxu0 %v5283
        %6213 = vmatpush2.bf16.msra.mxu0 %v5282
        %6214 = vmatprep.subr.bf16.mxu0 %v5275
        %6215 = vmatpush2.bf16.msra.mxu0 %v5274
        %6216 = vmatprep.subr.bf16.mxu0 %v5267
        %6217 = vmatpush2.bf16.msra.mxu0 %v5266
        %6218 = vmatprep.subr.bf16.mxu0 %v5259
        %6219 = vmatpush2.bf16.msra.mxu0 %v5258
        %6220 = vmatprep.subr.bf16.mxu0 %v5251
        %6221 = vmatpush2.bf16.msra.mxu0 %v5250
        %6222 = vmatprep.subr.bf16.mxu0 %v5243
        %6223 = vmatpush2.bf16.msra.mxu0 %v5242
        %6224 = vmatprep.subr.bf16.mxu0 %v5235
        %6225 = vmatpush2.bf16.msra.mxu0 %v5234
        %6226 = vmatprep.mubr.bf16.mxu0 %v3066
        %6227 = vmatmul.mubr.bf16.gmra.mxu0 %v3065
        %v6228 = vpop.f32.mrf.mxu0
        %v6229 = vadd.f32 %v3597, %v6228
        %v6230 = vpop.f32.mrf.mxu0
        %v6231 = vadd.f32 %v3601, %v6230
        %v6232 = vpop.f32.mrf.mxu0
        %v6233 = vadd.f32 %v3597, %v6232
        %v6234 = vpop.f32.mrf.mxu0
        %v6235 = vadd.f32 %v3601, %v6234
        %6236 = vmatprep.mubr.bf16.mxu0 %v3074
        %6237 = vmatmul.mubr.bf16.gmra.mxu0 %v3073
        %v6238 = vpop.f32.mrf.mxu0
        %v6239 = vadd.f32 %v3597, %v6238
        %v6240 = vpop.f32.mrf.mxu0
        %v6241 = vadd.f32 %v3601, %v6240
        %v6242 = vpop.f32.mrf.mxu0
        %v6243 = vadd.f32 %v3597, %v6242
        %v6244 = vpop.f32.mrf.mxu0
        %v6245 = vadd.f32 %v3601, %v6244
        %6246 = vdwg.mxu0
        %6247 = vmatprep.subr.bf16.mxu0 %v5355
        %6248 = vmatpush1.bf16.msra.mxu0 %v5354
        %6249 = vmatprep.subr.bf16.mxu0 %v5347
        %6250 = vmatpush1.bf16.msra.mxu0 %v5346
        %6251 = vmatprep.subr.bf16.mxu0 %v5339
        %6252 = vmatpush1.bf16.msra.mxu0 %v5338
        %6253 = vmatprep.subr.bf16.mxu0 %v5331
        %6254 = vmatpush1.bf16.msra.mxu0 %v5330
        %6255 = vmatprep.subr.bf16.mxu0 %v5323
        %6256 = vmatpush1.bf16.msra.mxu0 %v5322
        %6257 = vmatprep.subr.bf16.mxu0 %v5315
        %6258 = vmatpush1.bf16.msra.mxu0 %v5314
        %6259 = vmatprep.subr.bf16.mxu0 %v5307
        %6260 = vmatpush1.bf16.msra.mxu0 %v5306
        %6261 = vmatprep.subr.bf16.mxu0 %v5299
        %6262 = vmatpush1.bf16.msra.mxu0 %v5298
        %6263 = vmatprep.subr.bf16.mxu0 %v5419
        %6264 = vmatpush2.bf16.msra.mxu0 %v5418
        %6265 = vmatprep.subr.bf16.mxu0 %v5411
        %6266 = vmatpush2.bf16.msra.mxu0 %v5410
        %6267 = vmatprep.subr.bf16.mxu0 %v5403
        %6268 = vmatpush2.bf16.msra.mxu0 %v5402
        %6269 = vmatprep.subr.bf16.mxu0 %v5395
        %6270 = vmatpush2.bf16.msra.mxu0 %v5394
        %6271 = vmatprep.subr.bf16.mxu0 %v5387
        %6272 = vmatpush2.bf16.msra.mxu0 %v5386
        %6273 = vmatprep.subr.bf16.mxu0 %v5379
        %6274 = vmatpush2.bf16.msra.mxu0 %v5378
        %6275 = vmatprep.subr.bf16.mxu0 %v5371
        %6276 = vmatpush2.bf16.msra.mxu0 %v5370
        %6277 = vmatprep.subr.bf16.mxu0 %v5363
        %6278 = vmatpush2.bf16.msra.mxu0 %v5362
        %6279 = vmatprep.mubr.bf16.mxu0 %v3068
        %6280 = vmatmul.mubr.bf16.gmra.mxu0 %v3067
        %v6281 = vpop.f32.mrf.mxu0
        %v6282 = vadd.f32 %v6229, %v6281
        %v6283 = vpop.f32.mrf.mxu0
        %v6284 = vadd.f32 %v6231, %v6283
        %v6285 = vpop.f32.mrf.mxu0
        %v6286 = vadd.f32 %v6233, %v6285
        %v6287 = vpop.f32.mrf.mxu0
        %v6288 = vadd.f32 %v6235, %v6287
        %6289 = vmatprep.mubr.bf16.mxu0 %v3076
        %6290 = vmatmul.mubr.bf16.gmra.mxu0 %v3075
        %v6291 = vpop.f32.mrf.mxu0
        %v6292 = vadd.f32 %v6239, %v6291
        %v6293 = vpop.f32.mrf.mxu0
        %v6294 = vadd.f32 %v6241, %v6293
        %v6295 = vpop.f32.mrf.mxu0
        %v6296 = vadd.f32 %v6243, %v6295
        %v6297 = vpop.f32.mrf.mxu0
        %v6298 = vadd.f32 %v6245, %v6297
        %6299 = vdwg.mxu0
        %6300 = vmatprep.subr.bf16.mxu0 %v5483
        %6301 = vmatpush1.bf16.msra.mxu0 %v5482
        %6302 = vmatprep.subr.bf16.mxu0 %v5475
        %6303 = vmatpush1.bf16.msra.mxu0 %v5474
        %6304 = vmatprep.subr.bf16.mxu0 %v5467
        %6305 = vmatpush1.bf16.msra.mxu0 %v5466
        %6306 = vmatprep.subr.bf16.mxu0 %v5459
        %6307 = vmatpush1.bf16.msra.mxu0 %v5458
        %6308 = vmatprep.subr.bf16.mxu0 %v5451
        %6309 = vmatpush1.bf16.msra.mxu0 %v5450
        %6310 = vmatprep.subr.bf16.mxu0 %v5443
        %6311 = vmatpush1.bf16.msra.mxu0 %v5442
        %6312 = vmatprep.subr.bf16.mxu0 %v5435
        %6313 = vmatpush1.bf16.msra.mxu0 %v5434
        %6314 = vmatprep.subr.bf16.mxu0 %v5427
        %6315 = vmatpush1.bf16.msra.mxu0 %v5426
        %6316 = vmatprep.subr.bf16.mxu0 %v5547
        %6317 = vmatpush2.bf16.msra.mxu0 %v5546
        %6318 = vmatprep.subr.bf16.mxu0 %v5539
        %6319 = vmatpush2.bf16.msra.mxu0 %v5538
        %6320 = vmatprep.subr.bf16.mxu0 %v5531
        %6321 = vmatpush2.bf16.msra.mxu0 %v5530
        %6322 = vmatprep.subr.bf16.mxu0 %v5523
        %6323 = vmatpush2.bf16.msra.mxu0 %v5522
        %6324 = vmatprep.subr.bf16.mxu0 %v5515
        %6325 = vmatpush2.bf16.msra.mxu0 %v5514
        %6326 = vmatprep.subr.bf16.mxu0 %v5507
        %6327 = vmatpush2.bf16.msra.mxu0 %v5506
        %6328 = vmatprep.subr.bf16.mxu0 %v5499
        %6329 = vmatpush2.bf16.msra.mxu0 %v5498
        %6330 = vmatprep.subr.bf16.mxu0 %v5491
        %6331 = vmatpush2.bf16.msra.mxu0 %v5490
        %6332 = vmatprep.mubr.bf16.mxu0 %v3070
        %6333 = vmatmul.mubr.bf16.gmra.mxu0 %v3069
        %v6334 = vpop.f32.mrf.mxu0
        %v6335 = vadd.f32 %v6282, %v6334
        %v6336 = vpop.f32.mrf.mxu0
        %v6337 = vadd.f32 %v6284, %v6336
        %v6338 = vpop.f32.mrf.mxu0
        %v6339 = vadd.f32 %v6286, %v6338
        %v6340 = vpop.f32.mrf.mxu0
        %v6341 = vadd.f32 %v6288, %v6340
        %6342 = vmatprep.mubr.bf16.mxu0 %v3078
        %6343 = vmatmul.mubr.bf16.gmra.mxu0 %v3077
        %v6344 = vpop.f32.mrf.mxu0
        %v6345 = vadd.f32 %v6292, %v6344
        %v6346 = vpop.f32.mrf.mxu0
        %v6347 = vadd.f32 %v6294, %v6346
        %v6348 = vpop.f32.mrf.mxu0
        %v6349 = vadd.f32 %v6296, %v6348
        %v6350 = vpop.f32.mrf.mxu0
        %v6351 = vadd.f32 %v6298, %v6350
        %6352 = vdwg.mxu0
        %6353 = vmatprep.subr.bf16.mxu0 %v5611
        %6354 = vmatpush1.bf16.msra.mxu0 %v5610
        %6355 = vmatprep.subr.bf16.mxu0 %v5603
        %6356 = vmatpush1.bf16.msra.mxu0 %v5602
        %6357 = vmatprep.subr.bf16.mxu0 %v5595
        %6358 = vmatpush1.bf16.msra.mxu0 %v5594
        %6359 = vmatprep.subr.bf16.mxu0 %v5587
        %6360 = vmatpush1.bf16.msra.mxu0 %v5586
        %6361 = vmatprep.subr.bf16.mxu0 %v5579
        %6362 = vmatpush1.bf16.msra.mxu0 %v5578
        %6363 = vmatprep.subr.bf16.mxu0 %v5571
        %6364 = vmatpush1.bf16.msra.mxu0 %v5570
        %6365 = vmatprep.subr.bf16.mxu0 %v5563
        %6366 = vmatpush1.bf16.msra.mxu0 %v5562
        %6367 = vmatprep.subr.bf16.mxu0 %v5555
        %6368 = vmatpush1.bf16.msra.mxu0 %v5554
        %6369 = vmatprep.subr.bf16.mxu0 %v5675
        %6370 = vmatpush2.bf16.msra.mxu0 %v5674
        %6371 = vmatprep.subr.bf16.mxu0 %v5667
        %6372 = vmatpush2.bf16.msra.mxu0 %v5666
        %6373 = vmatprep.subr.bf16.mxu0 %v5659
        %6374 = vmatpush2.bf16.msra.mxu0 %v5658
        %6375 = vmatprep.subr.bf16.mxu0 %v5651
        %6376 = vmatpush2.bf16.msra.mxu0 %v5650
        %6377 = vmatprep.subr.bf16.mxu0 %v5643
        %6378 = vmatpush2.bf16.msra.mxu0 %v5642
        %6379 = vmatprep.subr.bf16.mxu0 %v5635
        %6380 = vmatpush2.bf16.msra.mxu0 %v5634
        %6381 = vmatprep.subr.bf16.mxu0 %v5627
        %6382 = vmatpush2.bf16.msra.mxu0 %v5626
        %6383 = vmatprep.subr.bf16.mxu0 %v5619
        %6384 = vmatpush2.bf16.msra.mxu0 %v5618
        %6385 = vmatprep.mubr.bf16.mxu0 %v3072
        %6386 = vmatmul.mubr.bf16.gmra.mxu0 %v3071
        %v6387 = vpop.f32.mrf.mxu0
        %v6388 = vadd.f32 %v6335, %v6387
        %v6389 = vpop.f32.mrf.mxu0
        %v6390 = vadd.f32 %v6337, %v6389
        %v6391 = vpop.f32.mrf.mxu0
        %v6392 = vadd.f32 %v6339, %v6391
        %v6393 = vpop.f32.mrf.mxu0
        %v6394 = vadd.f32 %v6341, %v6393
        %6395 = vmatprep.mubr.bf16.mxu0 %v3080
        %6396 = vmatmul.mubr.bf16.gmra.mxu0 %v3079
        %v6397 = vpop.f32.mrf.mxu0
        %v6398 = vadd.f32 %v6345, %v6397
        %v6399 = vpop.f32.mrf.mxu0
        %v6400 = vadd.f32 %v6347, %v6399
        %v6401 = vpop.f32.mrf.mxu0
        %v6402 = vadd.f32 %v6349, %v6401
        %v6403 = vpop.f32.mrf.mxu0
        %v6404 = vadd.f32 %v6351, %v6403
        %6405 = vdwg.mxu0
        %6406 = vmatprep.subr.bf16.mxu0 %v5229
        %6407 = vmatpush1.bf16.msra.mxu0 %v5228
        %6408 = vmatprep.subr.bf16.mxu0 %v5221
        %6409 = vmatpush1.bf16.msra.mxu0 %v5220
        %6410 = vmatprep.subr.bf16.mxu0 %v5213
        %6411 = vmatpush1.bf16.msra.mxu0 %v5212
        %6412 = vmatprep.subr.bf16.mxu0 %v5205
        %6413 = vmatpush1.bf16.msra.mxu0 %v5204
        %6414 = vmatprep.subr.bf16.mxu0 %v5197
        %6415 = vmatpush1.bf16.msra.mxu0 %v5196
        %6416 = vmatprep.subr.bf16.mxu0 %v5189
        %6417 = vmatpush1.bf16.msra.mxu0 %v5188
        %6418 = vmatprep.subr.bf16.mxu0 %v5181
        %6419 = vmatpush1.bf16.msra.mxu0 %v5180
        %6420 = vmatprep.subr.bf16.mxu0 %v5173
        %6421 = vmatpush1.bf16.msra.mxu0 %v5172
        %6422 = vmatprep.subr.bf16.mxu0 %v5293
        %6423 = vmatpush2.bf16.msra.mxu0 %v5292
        %6424 = vmatprep.subr.bf16.mxu0 %v5285
        %6425 = vmatpush2.bf16.msra.mxu0 %v5284
        %6426 = vmatprep.subr.bf16.mxu0 %v5277
        %6427 = vmatpush2.bf16.msra.mxu0 %v5276
        %6428 = vmatprep.subr.bf16.mxu0 %v5269
        %6429 = vmatpush2.bf16.msra.mxu0 %v5268
        %6430 = vmatprep.subr.bf16.mxu0 %v5261
        %6431 = vmatpush2.bf16.msra.mxu0 %v5260
        %6432 = vmatprep.subr.bf16.mxu0 %v5253
        %6433 = vmatpush2.bf16.msra.mxu0 %v5252
        %6434 = vmatprep.subr.bf16.mxu0 %v5245
        %6435 = vmatpush2.bf16.msra.mxu0 %v5244
        %6436 = vmatprep.subr.bf16.mxu0 %v5237
        %6437 = vmatpush2.bf16.msra.mxu0 %v5236
        %6438 = vmatprep.mubr.bf16.mxu0 %v3066
        %6439 = vmatmul.mubr.bf16.gmra.mxu0 %v3065
        %v6440 = vpop.f32.mrf.mxu0
        %v6441 = vadd.f32 %v3605, %v6440
        %v6442 = vpop.f32.mrf.mxu0
        %v6443 = vadd.f32 %v3609, %v6442
        %v6444 = vpop.f32.mrf.mxu0
        %v6445 = vadd.f32 %v3605, %v6444
        %v6446 = vpop.f32.mrf.mxu0
        %v6447 = vadd.f32 %v3609, %v6446
        %6448 = vmatprep.mubr.bf16.mxu0 %v3074
        %6449 = vmatmul.mubr.bf16.gmra.mxu0 %v3073
        %v6450 = vpop.f32.mrf.mxu0
        %v6451 = vadd.f32 %v3605, %v6450
        %v6452 = vpop.f32.mrf.mxu0
        %v6453 = vadd.f32 %v3609, %v6452
        %v6454 = vpop.f32.mrf.mxu0
        %v6455 = vadd.f32 %v3605, %v6454
        %v6456 = vpop.f32.mrf.mxu0
        %v6457 = vadd.f32 %v3609, %v6456
        %6458 = vdwg.mxu0
        %6459 = vmatprep.subr.bf16.mxu0 %v5357
        %6460 = vmatpush1.bf16.msra.mxu0 %v5356
        %6461 = vmatprep.subr.bf16.mxu0 %v5349
        %6462 = vmatpush1.bf16.msra.mxu0 %v5348
        %6463 = vmatprep.subr.bf16.mxu0 %v5341
        %6464 = vmatpush1.bf16.msra.mxu0 %v5340
        %6465 = vmatprep.subr.bf16.mxu0 %v5333
        %6466 = vmatpush1.bf16.msra.mxu0 %v5332
        %6467 = vmatprep.subr.bf16.mxu0 %v5325
        %6468 = vmatpush1.bf16.msra.mxu0 %v5324
        %6469 = vmatprep.subr.bf16.mxu0 %v5317
        %6470 = vmatpush1.bf16.msra.mxu0 %v5316
        %6471 = vmatprep.subr.bf16.mxu0 %v5309
        %6472 = vmatpush1.bf16.msra.mxu0 %v5308
        %6473 = vmatprep.subr.bf16.mxu0 %v5301
        %6474 = vmatpush1.bf16.msra.mxu0 %v5300
        %6475 = vmatprep.subr.bf16.mxu0 %v5421
        %6476 = vmatpush2.bf16.msra.mxu0 %v5420
        %6477 = vmatprep.subr.bf16.mxu0 %v5413
        %6478 = vmatpush2.bf16.msra.mxu0 %v5412
        %6479 = vmatprep.subr.bf16.mxu0 %v5405
        %6480 = vmatpush2.bf16.msra.mxu0 %v5404
        %6481 = vmatprep.subr.bf16.mxu0 %v5397
        %6482 = vmatpush2.bf16.msra.mxu0 %v5396
        %6483 = vmatprep.subr.bf16.mxu0 %v5389
        %6484 = vmatpush2.bf16.msra.mxu0 %v5388
        %6485 = vmatprep.subr.bf16.mxu0 %v5381
        %6486 = vmatpush2.bf16.msra.mxu0 %v5380
        %6487 = vmatprep.subr.bf16.mxu0 %v5373
        %6488 = vmatpush2.bf16.msra.mxu0 %v5372
        %6489 = vmatprep.subr.bf16.mxu0 %v5365
        %6490 = vmatpush2.bf16.msra.mxu0 %v5364
        %6491 = vmatprep.mubr.bf16.mxu0 %v3068
        %6492 = vmatmul.mubr.bf16.gmra.mxu0 %v3067
        %v6493 = vpop.f32.mrf.mxu0
        %v6494 = vadd.f32 %v6441, %v6493
        %v6495 = vpop.f32.mrf.mxu0
        %v6496 = vadd.f32 %v6443, %v6495
        %v6497 = vpop.f32.mrf.mxu0
        %v6498 = vadd.f32 %v6445, %v6497
        %v6499 = vpop.f32.mrf.mxu0
        %v6500 = vadd.f32 %v6447, %v6499
        %6501 = vmatprep.mubr.bf16.mxu0 %v3076
        %6502 = vmatmul.mubr.bf16.gmra.mxu0 %v3075
        %v6503 = vpop.f32.mrf.mxu0
        %v6504 = vadd.f32 %v6451, %v6503
        %v6505 = vpop.f32.mrf.mxu0
        %v6506 = vadd.f32 %v6453, %v6505
        %v6507 = vpop.f32.mrf.mxu0
        %v6508 = vadd.f32 %v6455, %v6507
        %v6509 = vpop.f32.mrf.mxu0
        %v6510 = vadd.f32 %v6457, %v6509
        %6511 = vdwg.mxu0
        %6512 = vmatprep.subr.bf16.mxu0 %v5485
        %6513 = vmatpush1.bf16.msra.mxu0 %v5484
        %6514 = vmatprep.subr.bf16.mxu0 %v5477
        %6515 = vmatpush1.bf16.msra.mxu0 %v5476
        %6516 = vmatprep.subr.bf16.mxu0 %v5469
        %6517 = vmatpush1.bf16.msra.mxu0 %v5468
        %6518 = vmatprep.subr.bf16.mxu0 %v5461
        %6519 = vmatpush1.bf16.msra.mxu0 %v5460
        %6520 = vmatprep.subr.bf16.mxu0 %v5453
        %6521 = vmatpush1.bf16.msra.mxu0 %v5452
        %6522 = vmatprep.subr.bf16.mxu0 %v5445
        %6523 = vmatpush1.bf16.msra.mxu0 %v5444
        %6524 = vmatprep.subr.bf16.mxu0 %v5437
        %6525 = vmatpush1.bf16.msra.mxu0 %v5436
        %6526 = vmatprep.subr.bf16.mxu0 %v5429
        %6527 = vmatpush1.bf16.msra.mxu0 %v5428
        %6528 = vmatprep.subr.bf16.mxu0 %v5549
        %6529 = vmatpush2.bf16.msra.mxu0 %v5548
        %6530 = vmatprep.subr.bf16.mxu0 %v5541
        %6531 = vmatpush2.bf16.msra.mxu0 %v5540
        %6532 = vmatprep.subr.bf16.mxu0 %v5533
        %6533 = vmatpush2.bf16.msra.mxu0 %v5532
        %6534 = vmatprep.subr.bf16.mxu0 %v5525
        %6535 = vmatpush2.bf16.msra.mxu0 %v5524
        %6536 = vmatprep.subr.bf16.mxu0 %v5517
        %6537 = vmatpush2.bf16.msra.mxu0 %v5516
        %6538 = vmatprep.subr.bf16.mxu0 %v5509
        %6539 = vmatpush2.bf16.msra.mxu0 %v5508
        %6540 = vmatprep.subr.bf16.mxu0 %v5501
        %6541 = vmatpush2.bf16.msra.mxu0 %v5500
        %6542 = vmatprep.subr.bf16.mxu0 %v5493
        %6543 = vmatpush2.bf16.msra.mxu0 %v5492
        %6544 = vmatprep.mubr.bf16.mxu0 %v3070
        %6545 = vmatmul.mubr.bf16.gmra.mxu0 %v3069
        %v6546 = vpop.f32.mrf.mxu0
        %v6547 = vadd.f32 %v6494, %v6546
        %v6548 = vpop.f32.mrf.mxu0
        %v6549 = vadd.f32 %v6496, %v6548
        %v6550 = vpop.f32.mrf.mxu0
        %v6551 = vadd.f32 %v6498, %v6550
        %v6552 = vpop.f32.mrf.mxu0
        %v6553 = vadd.f32 %v6500, %v6552
        %6554 = vmatprep.mubr.bf16.mxu0 %v3078
        %6555 = vmatmul.mubr.bf16.gmra.mxu0 %v3077
        %v6556 = vpop.f32.mrf.mxu0
        %v6557 = vadd.f32 %v6504, %v6556
        %v6558 = vpop.f32.mrf.mxu0
        %v6559 = vadd.f32 %v6506, %v6558
        %v6560 = vpop.f32.mrf.mxu0
        %v6561 = vadd.f32 %v6508, %v6560
        %v6562 = vpop.f32.mrf.mxu0
        %v6563 = vadd.f32 %v6510, %v6562
        %6564 = vdwg.mxu0
        %6565 = vmatprep.subr.bf16.mxu0 %v5613
        %6566 = vmatpush1.bf16.msra.mxu0 %v5612
        %6567 = vmatprep.subr.bf16.mxu0 %v5605
        %6568 = vmatpush1.bf16.msra.mxu0 %v5604
        %6569 = vmatprep.subr.bf16.mxu0 %v5597
        %6570 = vmatpush1.bf16.msra.mxu0 %v5596
        %6571 = vmatprep.subr.bf16.mxu0 %v5589
        %6572 = vmatpush1.bf16.msra.mxu0 %v5588
        %6573 = vmatprep.subr.bf16.mxu0 %v5581
        %6574 = vmatpush1.bf16.msra.mxu0 %v5580
        %6575 = vmatprep.subr.bf16.mxu0 %v5573
        %6576 = vmatpush1.bf16.msra.mxu0 %v5572
        %6577 = vmatprep.subr.bf16.mxu0 %v5565
        %6578 = vmatpush1.bf16.msra.mxu0 %v5564
        %6579 = vmatprep.subr.bf16.mxu0 %v5557
        %6580 = vmatpush1.bf16.msra.mxu0 %v5556
        %6581 = vmatprep.subr.bf16.mxu0 %v5677
        %6582 = vmatpush2.bf16.msra.mxu0 %v5676
        %6583 = vmatprep.subr.bf16.mxu0 %v5669
        %6584 = vmatpush2.bf16.msra.mxu0 %v5668
        %6585 = vmatprep.subr.bf16.mxu0 %v5661
        %6586 = vmatpush2.bf16.msra.mxu0 %v5660
        %6587 = vmatprep.subr.bf16.mxu0 %v5653
        %6588 = vmatpush2.bf16.msra.mxu0 %v5652
        %6589 = vmatprep.subr.bf16.mxu0 %v5645
        %6590 = vmatpush2.bf16.msra.mxu0 %v5644
        %6591 = vmatprep.subr.bf16.mxu0 %v5637
        %6592 = vmatpush2.bf16.msra.mxu0 %v5636
        %6593 = vmatprep.subr.bf16.mxu0 %v5629
        %6594 = vmatpush2.bf16.msra.mxu0 %v5628
        %6595 = vmatprep.subr.bf16.mxu0 %v5621
        %6596 = vmatpush2.bf16.msra.mxu0 %v5620
        %6597 = vmatprep.mubr.bf16.mxu0 %v3072
        %6598 = vmatmul.mubr.bf16.gmra.mxu0 %v3071
        %v6599 = vpop.f32.mrf.mxu0
        %v6600 = vadd.f32 %v6547, %v6599
        %v6601 = vpop.f32.mrf.mxu0
        %v6602 = vadd.f32 %v6549, %v6601
        %v6603 = vpop.f32.mrf.mxu0
        %v6604 = vadd.f32 %v6551, %v6603
        %v6605 = vpop.f32.mrf.mxu0
        %v6606 = vadd.f32 %v6553, %v6605
        %6607 = vmatprep.mubr.bf16.mxu0 %v3080
        %6608 = vmatmul.mubr.bf16.gmra.mxu0 %v3079
        %v6609 = vpop.f32.mrf.mxu0
        %v6610 = vadd.f32 %v6557, %v6609
        %v6611 = vpop.f32.mrf.mxu0
        %v6612 = vadd.f32 %v6559, %v6611
        %v6613 = vpop.f32.mrf.mxu0
        %v6614 = vadd.f32 %v6561, %v6613
        %v6615 = vpop.f32.mrf.mxu0
        %v6616 = vadd.f32 %v6563, %v6615
        %6617 = vdwg.mxu0
        %6618 = vmatprep.subr.bf16.mxu0 %v5231
        %6619 = vmatpush1.bf16.msra.mxu0 %v5230
        %6620 = vmatprep.subr.bf16.mxu0 %v5223
        %6621 = vmatpush1.bf16.msra.mxu0 %v5222
        %6622 = vmatprep.subr.bf16.mxu0 %v5215
        %6623 = vmatpush1.bf16.msra.mxu0 %v5214
        %6624 = vmatprep.subr.bf16.mxu0 %v5207
        %6625 = vmatpush1.bf16.msra.mxu0 %v5206
        %6626 = vmatprep.subr.bf16.mxu0 %v5199
        %6627 = vmatpush1.bf16.msra.mxu0 %v5198
        %6628 = vmatprep.subr.bf16.mxu0 %v5191
        %6629 = vmatpush1.bf16.msra.mxu0 %v5190
        %6630 = vmatprep.subr.bf16.mxu0 %v5183
        %6631 = vmatpush1.bf16.msra.mxu0 %v5182
        %6632 = vmatprep.subr.bf16.mxu0 %v5175
        %6633 = vmatpush1.bf16.msra.mxu0 %v5174
        %6634 = vmatprep.subr.bf16.mxu0 %v5295
        %6635 = vmatpush2.bf16.msra.mxu0 %v5294
        %6636 = vmatprep.subr.bf16.mxu0 %v5287
        %6637 = vmatpush2.bf16.msra.mxu0 %v5286
        %6638 = vmatprep.subr.bf16.mxu0 %v5279
        %6639 = vmatpush2.bf16.msra.mxu0 %v5278
        %6640 = vmatprep.subr.bf16.mxu0 %v5271
        %6641 = vmatpush2.bf16.msra.mxu0 %v5270
        %6642 = vmatprep.subr.bf16.mxu0 %v5263
        %6643 = vmatpush2.bf16.msra.mxu0 %v5262
        %6644 = vmatprep.subr.bf16.mxu0 %v5255
        %6645 = vmatpush2.bf16.msra.mxu0 %v5254
        %6646 = vmatprep.subr.bf16.mxu0 %v5247
        %6647 = vmatpush2.bf16.msra.mxu0 %v5246
        %6648 = vmatprep.subr.bf16.mxu0 %v5239
        %6649 = vmatpush2.bf16.msra.mxu0 %v5238
        %6650 = vmatprep.mubr.bf16.mxu0 %v3066
        %6651 = vmatmul.mubr.bf16.gmra.mxu0 %v3065
        %v6652 = vpop.f32.mrf.mxu0
        %v6653 = vadd.f32 %v3613, %v6652
        %v6654 = vpop.f32.mrf.mxu0
        %v6655 = vadd.f32 %v3617, %v6654
        %v6656 = vpop.f32.mrf.mxu0
        %v6657 = vadd.f32 %v3613, %v6656
        %v6658 = vpop.f32.mrf.mxu0
        %v6659 = vadd.f32 %v3617, %v6658
        %6660 = vmatprep.mubr.bf16.mxu0 %v3074
        %6661 = vmatmul.mubr.bf16.gmra.mxu0 %v3073
        %v6662 = vpop.f32.mrf.mxu0
        %v6663 = vadd.f32 %v3613, %v6662
        %v6664 = vpop.f32.mrf.mxu0
        %v6665 = vadd.f32 %v3617, %v6664
        %v6666 = vpop.f32.mrf.mxu0
        %v6667 = vadd.f32 %v3613, %v6666
        %v6668 = vpop.f32.mrf.mxu0
        %v6669 = vadd.f32 %v3617, %v6668
        %6670 = vdwg.mxu0
        %6671 = vmatprep.subr.bf16.mxu0 %v5359
        %6672 = vmatpush1.bf16.msra.mxu0 %v5358
        %6673 = vmatprep.subr.bf16.mxu0 %v5351
        %6674 = vmatpush1.bf16.msra.mxu0 %v5350
        %6675 = vmatprep.subr.bf16.mxu0 %v5343
        %6676 = vmatpush1.bf16.msra.mxu0 %v5342
        %6677 = vmatprep.subr.bf16.mxu0 %v5335
        %6678 = vmatpush1.bf16.msra.mxu0 %v5334
        %6679 = vmatprep.subr.bf16.mxu0 %v5327
        %6680 = vmatpush1.bf16.msra.mxu0 %v5326
        %6681 = vmatprep.subr.bf16.mxu0 %v5319
        %6682 = vmatpush1.bf16.msra.mxu0 %v5318
        %6683 = vmatprep.subr.bf16.mxu0 %v5311
        %6684 = vmatpush1.bf16.msra.mxu0 %v5310
        %6685 = vmatprep.subr.bf16.mxu0 %v5303
        %6686 = vmatpush1.bf16.msra.mxu0 %v5302
        %6687 = vmatprep.subr.bf16.mxu0 %v5423
        %6688 = vmatpush2.bf16.msra.mxu0 %v5422
        %6689 = vmatprep.subr.bf16.mxu0 %v5415
        %6690 = vmatpush2.bf16.msra.mxu0 %v5414
        %6691 = vmatprep.subr.bf16.mxu0 %v5407
        %6692 = vmatpush2.bf16.msra.mxu0 %v5406
        %6693 = vmatprep.subr.bf16.mxu0 %v5399
        %6694 = vmatpush2.bf16.msra.mxu0 %v5398
        %6695 = vmatprep.subr.bf16.mxu0 %v5391
        %6696 = vmatpush2.bf16.msra.mxu0 %v5390
        %6697 = vmatprep.subr.bf16.mxu0 %v5383
        %6698 = vmatpush2.bf16.msra.mxu0 %v5382
        %6699 = vmatprep.subr.bf16.mxu0 %v5375
        %6700 = vmatpush2.bf16.msra.mxu0 %v5374
        %6701 = vmatprep.subr.bf16.mxu0 %v5367
        %6702 = vmatpush2.bf16.msra.mxu0 %v5366
        %6703 = vmatprep.mubr.bf16.mxu0 %v3068
        %6704 = vmatmul.mubr.bf16.gmra.mxu0 %v3067
        %v6705 = vpop.f32.mrf.mxu0
        %v6706 = vadd.f32 %v6653, %v6705
        %v6707 = vpop.f32.mrf.mxu0
        %v6708 = vadd.f32 %v6655, %v6707
        %v6709 = vpop.f32.mrf.mxu0
        %v6710 = vadd.f32 %v6657, %v6709
        %v6711 = vpop.f32.mrf.mxu0
        %v6712 = vadd.f32 %v6659, %v6711
        %6713 = vmatprep.mubr.bf16.mxu0 %v3076
        %6714 = vmatmul.mubr.bf16.gmra.mxu0 %v3075
        %v6715 = vpop.f32.mrf.mxu0
        %v6716 = vadd.f32 %v6663, %v6715
        %v6717 = vpop.f32.mrf.mxu0
        %v6718 = vadd.f32 %v6665, %v6717
        %v6719 = vpop.f32.mrf.mxu0
        %v6720 = vadd.f32 %v6667, %v6719
        %v6721 = vpop.f32.mrf.mxu0
        %v6722 = vadd.f32 %v6669, %v6721
        %6723 = vdwg.mxu0
        %6724 = vmatprep.subr.bf16.mxu0 %v5487
        %6725 = vmatpush1.bf16.msra.mxu0 %v5486
        %6726 = vmatprep.subr.bf16.mxu0 %v5479
        %6727 = vmatpush1.bf16.msra.mxu0 %v5478
        %6728 = vmatprep.subr.bf16.mxu0 %v5471
        %6729 = vmatpush1.bf16.msra.mxu0 %v5470
        %6730 = vmatprep.subr.bf16.mxu0 %v5463
        %6731 = vmatpush1.bf16.msra.mxu0 %v5462
        %6732 = vmatprep.subr.bf16.mxu0 %v5455
        %6733 = vmatpush1.bf16.msra.mxu0 %v5454
        %6734 = vmatprep.subr.bf16.mxu0 %v5447
        %6735 = vmatpush1.bf16.msra.mxu0 %v5446
        %6736 = vmatprep.subr.bf16.mxu0 %v5439
        %6737 = vmatpush1.bf16.msra.mxu0 %v5438
        %6738 = vmatprep.subr.bf16.mxu0 %v5431
        %6739 = vmatpush1.bf16.msra.mxu0 %v5430
        %6740 = vmatprep.subr.bf16.mxu0 %v5551
        %6741 = vmatpush2.bf16.msra.mxu0 %v5550
        %6742 = vmatprep.subr.bf16.mxu0 %v5543
        %6743 = vmatpush2.bf16.msra.mxu0 %v5542
        %6744 = vmatprep.subr.bf16.mxu0 %v5535
        %6745 = vmatpush2.bf16.msra.mxu0 %v5534
        %6746 = vmatprep.subr.bf16.mxu0 %v5527
        %6747 = vmatpush2.bf16.msra.mxu0 %v5526
        %6748 = vmatprep.subr.bf16.mxu0 %v5519
        %6749 = vmatpush2.bf16.msra.mxu0 %v5518
        %6750 = vmatprep.subr.bf16.mxu0 %v5511
        %6751 = vmatpush2.bf16.msra.mxu0 %v5510
        %6752 = vmatprep.subr.bf16.mxu0 %v5503
        %6753 = vmatpush2.bf16.msra.mxu0 %v5502
        %6754 = vmatprep.subr.bf16.mxu0 %v5495
        %6755 = vmatpush2.bf16.msra.mxu0 %v5494
        %6756 = vmatprep.mubr.bf16.mxu0 %v3070
        %6757 = vmatmul.mubr.bf16.gmra.mxu0 %v3069
        %v6758 = vpop.f32.mrf.mxu0
        %v6759 = vadd.f32 %v6706, %v6758
        %v6760 = vpop.f32.mrf.mxu0
        %v6761 = vadd.f32 %v6708, %v6760
        %v6762 = vpop.f32.mrf.mxu0
        %v6763 = vadd.f32 %v6710, %v6762
        %v6764 = vpop.f32.mrf.mxu0
        %v6765 = vadd.f32 %v6712, %v6764
        %6766 = vmatprep.mubr.bf16.mxu0 %v3078
        %6767 = vmatmul.mubr.bf16.gmra.mxu0 %v3077
        %v6768 = vpop.f32.mrf.mxu0
        %v6769 = vadd.f32 %v6716, %v6768
        %v6770 = vpop.f32.mrf.mxu0
        %v6771 = vadd.f32 %v6718, %v6770
        %v6772 = vpop.f32.mrf.mxu0
        %v6773 = vadd.f32 %v6720, %v6772
        %v6774 = vpop.f32.mrf.mxu0
        %v6775 = vadd.f32 %v6722, %v6774
        %6776 = vdwg.mxu0
        %6777 = vmatprep.subr.bf16.mxu0 %v5615
        %6778 = vmatpush1.bf16.msra.mxu0 %v5614
        %6779 = vmatprep.subr.bf16.mxu0 %v5607
        %6780 = vmatpush1.bf16.msra.mxu0 %v5606
        %6781 = vmatprep.subr.bf16.mxu0 %v5599
        %6782 = vmatpush1.bf16.msra.mxu0 %v5598
        %6783 = vmatprep.subr.bf16.mxu0 %v5591
        %6784 = vmatpush1.bf16.msra.mxu0 %v5590
        %6785 = vmatprep.subr.bf16.mxu0 %v5583
        %6786 = vmatpush1.bf16.msra.mxu0 %v5582
        %6787 = vmatprep.subr.bf16.mxu0 %v5575
        %6788 = vmatpush1.bf16.msra.mxu0 %v5574
        %6789 = vmatprep.subr.bf16.mxu0 %v5567
        %6790 = vmatpush1.bf16.msra.mxu0 %v5566
        %6791 = vmatprep.subr.bf16.mxu0 %v5559
        %6792 = vmatpush1.bf16.msra.mxu0 %v5558
        %6793 = vmatprep.subr.bf16.mxu0 %v5679
        %6794 = vmatpush2.bf16.msra.mxu0 %v5678
        %6795 = vmatprep.subr.bf16.mxu0 %v5671
        %6796 = vmatpush2.bf16.msra.mxu0 %v5670
        %6797 = vmatprep.subr.bf16.mxu0 %v5663
        %6798 = vmatpush2.bf16.msra.mxu0 %v5662
        %6799 = vmatprep.subr.bf16.mxu0 %v5655
        %6800 = vmatpush2.bf16.msra.mxu0 %v5654
        %6801 = vmatprep.subr.bf16.mxu0 %v5647
        %6802 = vmatpush2.bf16.msra.mxu0 %v5646
        %6803 = vmatprep.subr.bf16.mxu0 %v5639
        %6804 = vmatpush2.bf16.msra.mxu0 %v5638
        %6805 = vmatprep.subr.bf16.mxu0 %v5631
        %6806 = vmatpush2.bf16.msra.mxu0 %v5630
        %6807 = vmatprep.subr.bf16.mxu0 %v5623
        %6808 = vmatpush2.bf16.msra.mxu0 %v5622
        %6809 = vmatprep.mubr.bf16.mxu0 %v3072
        %6810 = vmatmul.mubr.bf16.gmra.mxu0 %v3071
        %v6811 = vpop.f32.mrf.mxu0
        %v6812 = vadd.f32 %v6759, %v6811
        %v6813 = vpop.f32.mrf.mxu0
        %v6814 = vadd.f32 %v6761, %v6813
        %v6815 = vpop.f32.mrf.mxu0
        %v6816 = vadd.f32 %v6763, %v6815
        %v6817 = vpop.f32.mrf.mxu0
        %v6818 = vadd.f32 %v6765, %v6817
        %6819 = vmatprep.mubr.bf16.mxu0 %v3080
        %6820 = vmatmul.mubr.bf16.gmra.mxu0 %v3079
        %v6821 = vpop.f32.mrf.mxu0
        %v6822 = vadd.f32 %v6769, %v6821
        %v6823 = vpop.f32.mrf.mxu0
        %v6824 = vadd.f32 %v6771, %v6823
        %v6825 = vpop.f32.mrf.mxu0
        %v6826 = vadd.f32 %v6773, %v6825
        %v6827 = vpop.f32.mrf.mxu0
        %v6828 = vadd.f32 %v6775, %v6827
        %6829 = vdwg.mxu0
        %6830 = vmatprep.subr.bf16.mxu0 %v5233
        %6831 = vmatpush1.bf16.msra.mxu0 %v5232
        %6832 = vmatprep.subr.bf16.mxu0 %v5225
        %6833 = vmatpush1.bf16.msra.mxu0 %v5224
        %6834 = vmatprep.subr.bf16.mxu0 %v5217
        %6835 = vmatpush1.bf16.msra.mxu0 %v5216
        %6836 = vmatprep.subr.bf16.mxu0 %v5209
        %6837 = vmatpush1.bf16.msra.mxu0 %v5208
        %6838 = vmatprep.subr.bf16.mxu0 %v5201
        %6839 = vmatpush1.bf16.msra.mxu0 %v5200
        %6840 = vmatprep.subr.bf16.mxu0 %v5193
        %6841 = vmatpush1.bf16.msra.mxu0 %v5192
        %6842 = vmatprep.subr.bf16.mxu0 %v5185
        %6843 = vmatpush1.bf16.msra.mxu0 %v5184
        %6844 = vmatprep.subr.bf16.mxu0 %v5177
        %6845 = vmatpush1.bf16.msra.mxu0 %v5176
        %6846 = vmatprep.subr.bf16.mxu0 %v5297
        %6847 = vmatpush2.bf16.msra.mxu0 %v5296
        %6848 = vmatprep.subr.bf16.mxu0 %v5289
        %6849 = vmatpush2.bf16.msra.mxu0 %v5288
        %6850 = vmatprep.subr.bf16.mxu0 %v5281
        %6851 = vmatpush2.bf16.msra.mxu0 %v5280
        %6852 = vmatprep.subr.bf16.mxu0 %v5273
        %6853 = vmatpush2.bf16.msra.mxu0 %v5272
        %6854 = vmatprep.subr.bf16.mxu0 %v5265
        %6855 = vmatpush2.bf16.msra.mxu0 %v5264
        %6856 = vmatprep.subr.bf16.mxu0 %v5257
        %6857 = vmatpush2.bf16.msra.mxu0 %v5256
        %6858 = vmatprep.subr.bf16.mxu0 %v5249
        %6859 = vmatpush2.bf16.msra.mxu0 %v5248
        %6860 = vmatprep.subr.bf16.mxu0 %v5241
        %6861 = vmatpush2.bf16.msra.mxu0 %v5240
        %6862 = vmatprep.mubr.bf16.mxu0 %v3066
        %6863 = vmatmul.mubr.bf16.gmra.mxu0 %v3065
        %v6864 = vpop.f32.mrf.mxu0
        %v6865 = vadd.f32 %v3621, %v6864
        %v6866 = vpop.f32.mrf.mxu0
        %v6867 = vadd.f32 %v3625, %v6866
        %v6868 = vpop.f32.mrf.mxu0
        %v6869 = vadd.f32 %v3621, %v6868
        %v6870 = vpop.f32.mrf.mxu0
        %v6871 = vadd.f32 %v3625, %v6870
        %6872 = vmatprep.mubr.bf16.mxu0 %v3074
        %6873 = vmatmul.mubr.bf16.gmra.mxu0 %v3073
        %v6874 = vpop.f32.mrf.mxu0
        %v6875 = vadd.f32 %v3621, %v6874
        %v6876 = vpop.f32.mrf.mxu0
        %v6877 = vadd.f32 %v3625, %v6876
        %v6878 = vpop.f32.mrf.mxu0
        %v6879 = vadd.f32 %v3621, %v6878
        %v6880 = vpop.f32.mrf.mxu0
        %v6881 = vadd.f32 %v3625, %v6880
        %6882 = vdwg.mxu0
        %6883 = vmatprep.subr.bf16.mxu0 %v5361
        %6884 = vmatpush1.bf16.msra.mxu0 %v5360
        %6885 = vmatprep.subr.bf16.mxu0 %v5353
        %6886 = vmatpush1.bf16.msra.mxu0 %v5352
        %6887 = vmatprep.subr.bf16.mxu0 %v5345
        %6888 = vmatpush1.bf16.msra.mxu0 %v5344
        %6889 = vmatprep.subr.bf16.mxu0 %v5337
        %6890 = vmatpush1.bf16.msra.mxu0 %v5336
        %6891 = vmatprep.subr.bf16.mxu0 %v5329
        %6892 = vmatpush1.bf16.msra.mxu0 %v5328
        %6893 = vmatprep.subr.bf16.mxu0 %v5321
        %6894 = vmatpush1.bf16.msra.mxu0 %v5320
        %6895 = vmatprep.subr.bf16.mxu0 %v5313
        %6896 = vmatpush1.bf16.msra.mxu0 %v5312
        %6897 = vmatprep.subr.bf16.mxu0 %v5305
        %6898 = vmatpush1.bf16.msra.mxu0 %v5304
        %6899 = vmatprep.subr.bf16.mxu0 %v5425
        %6900 = vmatpush2.bf16.msra.mxu0 %v5424
        %6901 = vmatprep.subr.bf16.mxu0 %v5417
        %6902 = vmatpush2.bf16.msra.mxu0 %v5416
        %6903 = vmatprep.subr.bf16.mxu0 %v5409
        %6904 = vmatpush2.bf16.msra.mxu0 %v5408
        %6905 = vmatprep.subr.bf16.mxu0 %v5401
        %6906 = vmatpush2.bf16.msra.mxu0 %v5400
        %6907 = vmatprep.subr.bf16.mxu0 %v5393
        %6908 = vmatpush2.bf16.msra.mxu0 %v5392
        %6909 = vmatprep.subr.bf16.mxu0 %v5385
        %6910 = vmatpush2.bf16.msra.mxu0 %v5384
        %6911 = vmatprep.subr.bf16.mxu0 %v5377
        %6912 = vmatpush2.bf16.msra.mxu0 %v5376
        %6913 = vmatprep.subr.bf16.mxu0 %v5369
        %6914 = vmatpush2.bf16.msra.mxu0 %v5368
        %6915 = vmatprep.mubr.bf16.mxu0 %v3068
        %6916 = vmatmul.mubr.bf16.gmra.mxu0 %v3067
        %v6917 = vpop.f32.mrf.mxu0
        %v6918 = vadd.f32 %v6865, %v6917
        %v6919 = vpop.f32.mrf.mxu0
        %v6920 = vadd.f32 %v6867, %v6919
        %v6921 = vpop.f32.mrf.mxu0
        %v6922 = vadd.f32 %v6869, %v6921
        %v6923 = vpop.f32.mrf.mxu0
        %v6924 = vadd.f32 %v6871, %v6923
        %6925 = vmatprep.mubr.bf16.mxu0 %v3076
        %6926 = vmatmul.mubr.bf16.gmra.mxu0 %v3075
        %v6927 = vpop.f32.mrf.mxu0
        %v6928 = vadd.f32 %v6875, %v6927
        %v6929 = vpop.f32.mrf.mxu0
        %v6930 = vadd.f32 %v6877, %v6929
        %v6931 = vpop.f32.mrf.mxu0
        %v6932 = vadd.f32 %v6879, %v6931
        %v6933 = vpop.f32.mrf.mxu0
        %v6934 = vadd.f32 %v6881, %v6933
        %6935 = vdwg.mxu0
        %6936 = vmatprep.subr.bf16.mxu0 %v5489
        %6937 = vmatpush1.bf16.msra.mxu0 %v5488
        %6938 = vmatprep.subr.bf16.mxu0 %v5481
        %6939 = vmatpush1.bf16.msra.mxu0 %v5480
        %6940 = vmatprep.subr.bf16.mxu0 %v5473
        %6941 = vmatpush1.bf16.msra.mxu0 %v5472
        %6942 = vmatprep.subr.bf16.mxu0 %v5465
        %6943 = vmatpush1.bf16.msra.mxu0 %v5464
        %6944 = vmatprep.subr.bf16.mxu0 %v5457
        %6945 = vmatpush1.bf16.msra.mxu0 %v5456
        %6946 = vmatprep.subr.bf16.mxu0 %v5449
        %6947 = vmatpush1.bf16.msra.mxu0 %v5448
        %6948 = vmatprep.subr.bf16.mxu0 %v5441
        %6949 = vmatpush1.bf16.msra.mxu0 %v5440
        %6950 = vmatprep.subr.bf16.mxu0 %v5433
        %6951 = vmatpush1.bf16.msra.mxu0 %v5432
        %6952 = vmatprep.subr.bf16.mxu0 %v5553
        %6953 = vmatpush2.bf16.msra.mxu0 %v5552
        %6954 = vmatprep.subr.bf16.mxu0 %v5545
        %6955 = vmatpush2.bf16.msra.mxu0 %v5544
        %6956 = vmatprep.subr.bf16.mxu0 %v5537
        %6957 = vmatpush2.bf16.msra.mxu0 %v5536
        %6958 = vmatprep.subr.bf16.mxu0 %v5529
        %6959 = vmatpush2.bf16.msra.mxu0 %v5528
        %6960 = vmatprep.subr.bf16.mxu0 %v5521
        %6961 = vmatpush2.bf16.msra.mxu0 %v5520
        %6962 = vmatprep.subr.bf16.mxu0 %v5513
        %6963 = vmatpush2.bf16.msra.mxu0 %v5512
        %6964 = vmatprep.subr.bf16.mxu0 %v5505
        %6965 = vmatpush2.bf16.msra.mxu0 %v5504
        %6966 = vmatprep.subr.bf16.mxu0 %v5497
        %6967 = vmatpush2.bf16.msra.mxu0 %v5496
        %6968 = vmatprep.mubr.bf16.mxu0 %v3070
        %6969 = vmatmul.mubr.bf16.gmra.mxu0 %v3069
        %v6970 = vpop.f32.mrf.mxu0
        %v6971 = vadd.f32 %v6918, %v6970
        %v6972 = vpop.f32.mrf.mxu0
        %v6973 = vadd.f32 %v6920, %v6972
        %v6974 = vpop.f32.mrf.mxu0
        %v6975 = vadd.f32 %v6922, %v6974
        %v6976 = vpop.f32.mrf.mxu0
        %v6977 = vadd.f32 %v6924, %v6976
        %6978 = vmatprep.mubr.bf16.mxu0 %v3078
        %6979 = vmatmul.mubr.bf16.gmra.mxu0 %v3077
        %v6980 = vpop.f32.mrf.mxu0
        %v6981 = vadd.f32 %v6928, %v6980
        %v6982 = vpop.f32.mrf.mxu0
        %v6983 = vadd.f32 %v6930, %v6982
        %v6984 = vpop.f32.mrf.mxu0
        %v6985 = vadd.f32 %v6932, %v6984
        %v6986 = vpop.f32.mrf.mxu0
        %v6987 = vadd.f32 %v6934, %v6986
        %6988 = vdwg.mxu0
        %6989 = vmatprep.subr.bf16.mxu0 %v5617
        %6990 = vmatpush1.bf16.msra.mxu0 %v5616
        %6991 = vmatprep.subr.bf16.mxu0 %v5609
        %6992 = vmatpush1.bf16.msra.mxu0 %v5608
        %6993 = vmatprep.subr.bf16.mxu0 %v5601
        %6994 = vmatpush1.bf16.msra.mxu0 %v5600
        %6995 = vmatprep.subr.bf16.mxu0 %v5593
        %6996 = vmatpush1.bf16.msra.mxu0 %v5592
        %6997 = vmatprep.subr.bf16.mxu0 %v5585
        %6998 = vmatpush1.bf16.msra.mxu0 %v5584
        %6999 = vmatprep.subr.bf16.mxu0 %v5577
        %7000 = vmatpush1.bf16.msra.mxu0 %v5576
        %7001 = vmatprep.subr.bf16.mxu0 %v5569
        %7002 = vmatpush1.bf16.msra.mxu0 %v5568
        %7003 = vmatprep.subr.bf16.mxu0 %v5561
        %7004 = vmatpush1.bf16.msra.mxu0 %v5560
        %7005 = vmatprep.subr.bf16.mxu0 %v5681
        %7006 = vmatpush2.bf16.msra.mxu0 %v5680
        %7007 = vmatprep.subr.bf16.mxu0 %v5673
        %7008 = vmatpush2.bf16.msra.mxu0 %v5672
        %7009 = vmatprep.subr.bf16.mxu0 %v5665
        %7010 = vmatpush2.bf16.msra.mxu0 %v5664
        %7011 = vmatprep.subr.bf16.mxu0 %v5657
        %7012 = vmatpush2.bf16.msra.mxu0 %v5656
        %7013 = vmatprep.subr.bf16.mxu0 %v5649
        %7014 = vmatpush2.bf16.msra.mxu0 %v5648
        %7015 = vmatprep.subr.bf16.mxu0 %v5641
        %7016 = vmatpush2.bf16.msra.mxu0 %v5640
        %7017 = vmatprep.subr.bf16.mxu0 %v5633
        %7018 = vmatpush2.bf16.msra.mxu0 %v5632
        %7019 = vmatprep.subr.bf16.mxu0 %v5625
        %7020 = vmatpush2.bf16.msra.mxu0 %v5624
        %7021 = vmatprep.mubr.bf16.mxu0 %v3072
        %7022 = vmatmul.mubr.bf16.gmra.mxu0 %v3071
        %v7023 = vpop.f32.mrf.mxu0
        %v7024 = vadd.f32 %v6971, %v7023
        %v7025 = vpop.f32.mrf.mxu0
        %v7026 = vadd.f32 %v6973, %v7025
        %v7027 = vpop.f32.mrf.mxu0
        %v7028 = vadd.f32 %v6975, %v7027
        %v7029 = vpop.f32.mrf.mxu0
        %v7030 = vadd.f32 %v6977, %v7029
        %7031 = vmatprep.mubr.bf16.mxu0 %v3080
        %7032 = vmatmul.mubr.bf16.gmra.mxu0 %v3079
        %v7033 = vpop.f32.mrf.mxu0
        %v7034 = vadd.f32 %v6981, %v7033
        %v7035 = vpop.f32.mrf.mxu0
        %v7036 = vadd.f32 %v6983, %v7035
        %v7037 = vpop.f32.mrf.mxu0
        %v7038 = vadd.f32 %v6985, %v7037
        %v7039 = vpop.f32.mrf.mxu0
        %v7040 = vadd.f32 %v6987, %v7039
        %7041 = vdwg.mxu0
        %v7042 = vmul.f32 %v6388, 1.442695
        %v7043 = vpow.pop %v7042
        %v7044 = vmul.f32 %v6390, 1.442695
        %v7045 = vpow.pop %v7044
        %v7046 = vmul.f32 %v6600, 1.442695
        %v7047 = vpow.pop %v7046
        %v7048 = vmul.f32 %v6602, 1.442695
        %v7049 = vpow.pop %v7048
        %v7050 = vmul.f32 %v6812, 1.442695
        %v7051 = vpow.pop %v7050
        %v7052 = vmul.f32 %v6814, 1.442695
        %v7053 = vpow.pop %v7052
        %v7054 = vmul.f32 %v7024, 1.442695
        %v7055 = vpow.pop %v7054
        %v7056 = vmul.f32 %v7026, 1.442695
        %v7057 = vpow.pop %v7056
        %v7058 = vmul.f32 %v6392, 1.442695
        %v7059 = vpow.pop %v7058
        %v7060 = vmul.f32 %v6394, 1.442695
        %v7061 = vpow.pop %v7060
        %v7062 = vmul.f32 %v6604, 1.442695
        %v7063 = vpow.pop %v7062
        %v7064 = vmul.f32 %v6606, 1.442695
        %v7065 = vpow.pop %v7064
        %v7066 = vmul.f32 %v6816, 1.442695
        %v7067 = vpow.pop %v7066
        %v7068 = vmul.f32 %v6818, 1.442695
        %v7069 = vpow.pop %v7068
        %v7070 = vmul.f32 %v7028, 1.442695
        %v7071 = vpow.pop %v7070
        %v7072 = vmul.f32 %v7030, 1.442695
        %v7073 = vpow.pop %v7072
        %v7074 = vmul.f32 %v6398, 1.442695
        %v7075 = vpow.pop %v7074
        %v7076 = vmul.f32 %v6400, 1.442695
        %v7077 = vpow.pop %v7076
        %v7078 = vmul.f32 %v6610, 1.442695
        %v7079 = vpow.pop %v7078
        %v7080 = vmul.f32 %v6612, 1.442695
        %v7081 = vpow.pop %v7080
        %v7082 = vmul.f32 %v6822, 1.442695
        %v7083 = vpow.pop %v7082
        %v7084 = vmul.f32 %v6824, 1.442695
        %v7085 = vpow.pop %v7084
        %v7086 = vmul.f32 %v7034, 1.442695
        %v7087 = vpow.pop %v7086
        %v7088 = vmul.f32 %v7036, 1.442695
        %v7089 = vpow.pop %v7088
        %v7090 = vmul.f32 %v6402, 1.442695
        %v7091 = vpow.pop %v7090
        %v7092 = vmul.f32 %v6404, 1.442695
        %v7093 = vpow.pop %v7092
        %v7094 = vmul.f32 %v6614, 1.442695
        %v7095 = vpow.pop %v7094
        %v7096 = vmul.f32 %v6616, 1.442695
        %v7097 = vpow.pop %v7096
        %v7098 = vmul.f32 %v6826, 1.442695
        %v7099 = vpow.pop %v7098
        %v7100 = vmul.f32 %v6828, 1.442695
        %v7101 = vpow.pop %v7100
        %v7102 = vmul.f32 %v7038, 1.442695
        %v7103 = vpow.pop %v7102
        %v7104 = vmul.f32 %v7040, 1.442695
        %v7105 = vpow.pop %v7104
        %v7106 = vadd.f32 %v7043, 1.0
        %v7107 = vadd.f32 %v7045, 1.0
        %v7108 = vadd.f32 %v7047, 1.0
        %v7109 = vadd.f32 %v7049, 1.0
        %v7110 = vadd.f32 %v7051, 1.0
        %v7111 = vadd.f32 %v7053, 1.0
        %v7112 = vadd.f32 %v7055, 1.0
        %v7113 = vadd.f32 %v7057, 1.0
        %v7114 = vadd.f32 %v7059, 1.0
        %v7115 = vadd.f32 %v7061, 1.0
        %v7116 = vadd.f32 %v7063, 1.0
        %v7117 = vadd.f32 %v7065, 1.0
        %v7118 = vadd.f32 %v7067, 1.0
        %v7119 = vadd.f32 %v7069, 1.0
        %v7120 = vadd.f32 %v7071, 1.0
        %v7121 = vadd.f32 %v7073, 1.0
        %v7122 = vadd.f32 %v7075, 1.0
        %v7123 = vadd.f32 %v7077, 1.0
        %v7124 = vadd.f32 %v7079, 1.0
        %v7125 = vadd.f32 %v7081, 1.0
        %v7126 = vadd.f32 %v7083, 1.0
        %v7127 = vadd.f32 %v7085, 1.0
        %v7128 = vadd.f32 %v7087, 1.0
        %v7129 = vadd.f32 %v7089, 1.0
        %v7130 = vadd.f32 %v7091, 1.0
        %v7131 = vadd.f32 %v7093, 1.0
        %v7132 = vadd.f32 %v7095, 1.0
        %v7133 = vadd.f32 %v7097, 1.0
        %v7134 = vadd.f32 %v7099, 1.0
        %v7135 = vadd.f32 %v7101, 1.0
        %v7136 = vadd.f32 %v7103, 1.0
        %v7137 = vadd.f32 %v7105, 1.0
        %v7138 = vmul.f32 %v7106, %v7106
        %v7139 = vmul.f32 %v7107, %v7107
        %v7140 = vmul.f32 %v7108, %v7108
        %v7141 = vmul.f32 %v7109, %v7109
        %v7142 = vmul.f32 %v7110, %v7110
        %v7143 = vmul.f32 %v7111, %v7111
        %v7144 = vmul.f32 %v7112, %v7112
        %v7145 = vmul.f32 %v7113, %v7113
        %v7146 = vmul.f32 %v7114, %v7114
        %v7147 = vmul.f32 %v7115, %v7115
        %v7148 = vmul.f32 %v7116, %v7116
        %v7149 = vmul.f32 %v7117, %v7117
        %v7150 = vmul.f32 %v7118, %v7118
        %v7151 = vmul.f32 %v7119, %v7119
        %v7152 = vmul.f32 %v7120, %v7120
        %v7153 = vmul.f32 %v7121, %v7121
        %v7154 = vmul.f32 %v7122, %v7122
        %v7155 = vmul.f32 %v7123, %v7123
        %v7156 = vmul.f32 %v7124, %v7124
        %v7157 = vmul.f32 %v7125, %v7125
        %v7158 = vmul.f32 %v7126, %v7126
        %v7159 = vmul.f32 %v7127, %v7127
        %v7160 = vmul.f32 %v7128, %v7128
        %v7161 = vmul.f32 %v7129, %v7129
        %v7162 = vmul.f32 %v7130, %v7130
        %v7163 = vmul.f32 %v7131, %v7131
        %v7164 = vmul.f32 %v7132, %v7132
        %v7165 = vmul.f32 %v7133, %v7133
        %v7166 = vmul.f32 %v7134, %v7134
        %v7167 = vmul.f32 %v7135, %v7135
        %v7168 = vmul.f32 %v7136, %v7136
        %v7169 = vmul.f32 %v7137, %v7137
        %v7170 = vadd.f32 %v7138, 1.0
        %v7171 = vadd.f32 %v7139, 1.0
        %v7172 = vadd.f32 %v7140, 1.0
        %v7173 = vadd.f32 %v7141, 1.0
        %v7174 = vadd.f32 %v7142, 1.0
        %v7175 = vadd.f32 %v7143, 1.0
        %v7176 = vadd.f32 %v7144, 1.0
        %v7177 = vadd.f32 %v7145, 1.0
        %v7178 = vadd.f32 %v7146, 1.0
        %v7179 = vadd.f32 %v7147, 1.0
        %v7180 = vadd.f32 %v7148, 1.0
        %v7181 = vadd.f32 %v7149, 1.0
        %v7182 = vadd.f32 %v7150, 1.0
        %v7183 = vadd.f32 %v7151, 1.0
        %v7184 = vadd.f32 %v7152, 1.0
        %v7185 = vadd.f32 %v7153, 1.0
        %v7186 = vadd.f32 %v7154, 1.0
        %v7187 = vadd.f32 %v7155, 1.0
        %v7188 = vadd.f32 %v7156, 1.0
        %v7189 = vadd.f32 %v7157, 1.0
        %v7190 = vadd.f32 %v7158, 1.0
        %v7191 = vadd.f32 %v7159, 1.0
        %v7192 = vadd.f32 %v7160, 1.0
        %v7193 = vadd.f32 %v7161, 1.0
        %v7194 = vadd.f32 %v7162, 1.0
        %v7195 = vadd.f32 %v7163, 1.0
        %v7196 = vadd.f32 %v7164, 1.0
        %v7197 = vadd.f32 %v7165, 1.0
        %v7198 = vadd.f32 %v7166, 1.0
        %v7199 = vadd.f32 %v7167, 1.0
        %v7200 = vadd.f32 %v7168, 1.0
        %v7201 = vadd.f32 %v7169, 1.0
        %v7202 = vrcp.pop %v7170
        %v7203 = vrcp.pop %v7171
        %v7204 = vrcp.pop %v7172
        %v7205 = vrcp.pop %v7173
        %v7206 = vrcp.pop %v7174
        %v7207 = vrcp.pop %v7175
        %v7208 = vrcp.pop %v7176
        %v7209 = vrcp.pop %v7177
        %v7210 = vrcp.pop %v7178
        %v7211 = vrcp.pop %v7179
        %v7212 = vrcp.pop %v7180
        %v7213 = vrcp.pop %v7181
        %v7214 = vrcp.pop %v7182
        %v7215 = vrcp.pop %v7183
        %v7216 = vrcp.pop %v7184
        %v7217 = vrcp.pop %v7185
        %v7218 = vrcp.pop %v7186
        %v7219 = vrcp.pop %v7187
        %v7220 = vrcp.pop %v7188
        %v7221 = vrcp.pop %v7189
        %v7222 = vrcp.pop %v7190
        %v7223 = vrcp.pop %v7191
        %v7224 = vrcp.pop %v7192
        %v7225 = vrcp.pop %v7193
        %v7226 = vrcp.pop %v7194
        %v7227 = vrcp.pop %v7195
        %v7228 = vrcp.pop %v7196
        %v7229 = vrcp.pop %v7197
        %v7230 = vrcp.pop %v7198
        %v7231 = vrcp.pop %v7199
        %v7232 = vrcp.pop %v7200
        %v7233 = vrcp.pop %v7201
        %v7234 = vmul.f32 %v7202, 2.0
        %v7235 = vmul.f32 %v7203, 2.0
        %v7236 = vmul.f32 %v7204, 2.0
        %v7237 = vmul.f32 %v7205, 2.0
        %v7238 = vmul.f32 %v7206, 2.0
        %v7239 = vmul.f32 %v7207, 2.0
        %v7240 = vmul.f32 %v7208, 2.0
        %v7241 = vmul.f32 %v7209, 2.0
        %v7242 = vmul.f32 %v7210, 2.0
        %v7243 = vmul.f32 %v7211, 2.0
        %v7244 = vmul.f32 %v7212, 2.0
        %v7245 = vmul.f32 %v7213, 2.0
        %v7246 = vmul.f32 %v7214, 2.0
        %v7247 = vmul.f32 %v7215, 2.0
        %v7248 = vmul.f32 %v7216, 2.0
        %v7249 = vmul.f32 %v7217, 2.0
        %v7250 = vmul.f32 %v7218, 2.0
        %v7251 = vmul.f32 %v7219, 2.0
        %v7252 = vmul.f32 %v7220, 2.0
        %v7253 = vmul.f32 %v7221, 2.0
        %v7254 = vmul.f32 %v7222, 2.0
        %v7255 = vmul.f32 %v7223, 2.0
        %v7256 = vmul.f32 %v7224, 2.0
        %v7257 = vmul.f32 %v7225, 2.0
        %v7258 = vmul.f32 %v7226, 2.0
        %v7259 = vmul.f32 %v7227, 2.0
        %v7260 = vmul.f32 %v7228, 2.0
        %v7261 = vmul.f32 %v7229, 2.0
        %v7262 = vmul.f32 %v7230, 2.0
        %v7263 = vmul.f32 %v7231, 2.0
        %v7264 = vmul.f32 %v7232, 2.0
        %v7265 = vmul.f32 %v7233, 2.0
        %v7266 = vsub.f32 1.0, %v7234
        %v7267 = vsub.f32 1.0, %v7235
        %v7268 = vsub.f32 1.0, %v7236
        %v7269 = vsub.f32 1.0, %v7237
        %v7270 = vsub.f32 1.0, %v7238
        %v7271 = vsub.f32 1.0, %v7239
        %v7272 = vsub.f32 1.0, %v7240
        %v7273 = vsub.f32 1.0, %v7241
        %v7274 = vsub.f32 1.0, %v7242
        %v7275 = vsub.f32 1.0, %v7243
        %v7276 = vsub.f32 1.0, %v7244
        %v7277 = vsub.f32 1.0, %v7245
        %v7278 = vsub.f32 1.0, %v7246
        %v7279 = vsub.f32 1.0, %v7247
        %v7280 = vsub.f32 1.0, %v7248
        %v7281 = vsub.f32 1.0, %v7249
        %v7282 = vsub.f32 1.0, %v7250
        %v7283 = vsub.f32 1.0, %v7251
        %v7284 = vsub.f32 1.0, %v7252
        %v7285 = vsub.f32 1.0, %v7253
        %v7286 = vsub.f32 1.0, %v7254
        %v7287 = vsub.f32 1.0, %v7255
        %v7288 = vsub.f32 1.0, %v7256
        %v7289 = vsub.f32 1.0, %v7257
        %v7290 = vsub.f32 1.0, %v7258
        %v7291 = vsub.f32 1.0, %v7259
        %v7292 = vsub.f32 1.0, %v7260
        %v7293 = vsub.f32 1.0, %v7261
        %v7294 = vsub.f32 1.0, %v7262
        %v7295 = vsub.f32 1.0, %v7263
        %v7296 = vsub.f32 1.0, %v7264
        %v7297 = vsub.f32 1.0, %v7265
        %v7298 = vmul.f32 %v6388, %v7266
        %v7299 = vmul.f32 %v6390, %v7267
        %v7300 = vmul.f32 %v6600, %v7268
        %v7301 = vmul.f32 %v6602, %v7269
        %v7302 = vmul.f32 %v6812, %v7270
        %v7303 = vmul.f32 %v6814, %v7271
        %v7304 = vmul.f32 %v7024, %v7272
        %v7305 = vmul.f32 %v7026, %v7273
        %v7306 = vmul.f32 %v6392, %v7274
        %v7307 = vmul.f32 %v6394, %v7275
        %v7308 = vmul.f32 %v6604, %v7276
        %v7309 = vmul.f32 %v6606, %v7277
        %v7310 = vmul.f32 %v6816, %v7278
        %v7311 = vmul.f32 %v6818, %v7279
        %v7312 = vmul.f32 %v7028, %v7280
        %v7313 = vmul.f32 %v7030, %v7281
        %v7314 = vmul.f32 %v6398, %v7282
        %v7315 = vmul.f32 %v6400, %v7283
        %v7316 = vmul.f32 %v6610, %v7284
        %v7317 = vmul.f32 %v6612, %v7285
        %v7318 = vmul.f32 %v6822, %v7286
        %v7319 = vmul.f32 %v6824, %v7287
        %v7320 = vmul.f32 %v7034, %v7288
        %v7321 = vmul.f32 %v7036, %v7289
        %v7322 = vmul.f32 %v6402, %v7290
        %v7323 = vmul.f32 %v6404, %v7291
        %v7324 = vmul.f32 %v6614, %v7292
        %v7325 = vmul.f32 %v6616, %v7293
        %v7326 = vmul.f32 %v6826, %v7294
        %v7327 = vmul.f32 %v6828, %v7295
        %v7328 = vmul.f32 %v7038, %v7296
        %v7329 = vmul.f32 %v7040, %v7297
        %v7331 = vlaneseq
        %v7332 = vshrl.u32 %v7331, 7
        %v7333 = vsub.s32 0, %v7332
        %v7334 = vrot.slane %v308, %v7333
        %v7335 = vlaneseq
        %v7336 = vshrl.u32 %v7335, 7
        %v7337 = vsub.s32 1, %v7336
        %v7338 = vrot.slane %v308, %v7337
        %v7339 = vlaneseq
        %v7340 = vshrl.u32 %v7339, 7
        %v7341 = vsub.s32 2, %v7340
        %v7342 = vrot.slane %v308, %v7341
        %v7343 = vlaneseq
        %v7344 = vshrl.u32 %v7343, 7
        %v7345 = vsub.s32 3, %v7344
        %v7346 = vrot.slane %v308, %v7345
        %v7347 = vlaneseq
        %v7348 = vshrl.u32 %v7347, 7
        %v7349 = vsub.s32 4, %v7348
        %v7350 = vrot.slane %v308, %v7349
        %v7351 = vlaneseq
        %v7352 = vshrl.u32 %v7351, 7
        %v7353 = vsub.s32 5, %v7352
        %v7354 = vrot.slane %v308, %v7353
        %v7355 = vlaneseq
        %v7356 = vshrl.u32 %v7355, 7
        %v7357 = vsub.s32 6, %v7356
        %v7358 = vrot.slane %v308, %v7357
        %v7359 = vlaneseq
        %v7360 = vshrl.u32 %v7359, 7
        %v7361 = vsub.s32 7, %v7360
        %v7362 = vrot.slane %v308, %v7361
        %v7371 = vmul.f32 %v7298, %v7334
        %v7372 = vmul.f32 %v7299, %v7338
        %v7373 = vmul.f32 %v7300, %v7342
        %v7374 = vmul.f32 %v7301, %v7346
        %v7375 = vmul.f32 %v7302, %v7350
        %v7376 = vmul.f32 %v7303, %v7354
        %v7377 = vmul.f32 %v7304, %v7358
        %v7378 = vmul.f32 %v7305, %v7362
        %v7379 = vmul.f32 %v7306, %v7334
        %v7380 = vmul.f32 %v7307, %v7338
        %v7381 = vmul.f32 %v7308, %v7342
        %v7382 = vmul.f32 %v7309, %v7346
        %v7383 = vmul.f32 %v7310, %v7350
        %v7384 = vmul.f32 %v7311, %v7354
        %v7385 = vmul.f32 %v7312, %v7358
        %v7386 = vmul.f32 %v7313, %v7362
        %v7387 = vmul.f32 %v7314, %v7334
        %v7388 = vmul.f32 %v7315, %v7338
        %v7389 = vmul.f32 %v7316, %v7342
        %v7390 = vmul.f32 %v7317, %v7346
        %v7391 = vmul.f32 %v7318, %v7350
        %v7392 = vmul.f32 %v7319, %v7354
        %v7393 = vmul.f32 %v7320, %v7358
        %v7394 = vmul.f32 %v7321, %v7362
        %v7395 = vmul.f32 %v7322, %v7334
        %v7396 = vmul.f32 %v7323, %v7338
        %v7397 = vmul.f32 %v7324, %v7342
        %v7398 = vmul.f32 %v7325, %v7346
        %v7399 = vmul.f32 %v7326, %v7350
        %v7400 = vmul.f32 %v7327, %v7354
        %v7401 = vmul.f32 %v7328, %v7358
        %v7402 = vmul.f32 %v7329, %v7362
        %v7403 = vadd.f32 %v7371, %v7372
        %v7404 = vadd.f32 %v7403, %v7373
        %v7405 = vadd.f32 %v7404, %v7374
        %v7406 = vadd.f32 %v7405, %v7375
        %v7407 = vadd.f32 %v7406, %v7376
        %v7408 = vadd.f32 %v7407, %v7377
        %v7409 = vadd.f32 %v7408, %v7378
        %7410 = vadd.xlane.f32.xlu0 %v7409
        %v7411 = vpop.xlane.xlu0 %7410
        %v7412 = vadd.f32 %v7379, %v7380
        %v7413 = vadd.f32 %v7412, %v7381
        %v7414 = vadd.f32 %v7413, %v7382
        %v7415 = vadd.f32 %v7414, %v7383
        %v7416 = vadd.f32 %v7415, %v7384
        %v7417 = vadd.f32 %v7416, %v7385
        %v7418 = vadd.f32 %v7417, %v7386
        %7419 = vadd.xlane.f32.xlu0 %v7418
        %v7420 = vpop.xlane.xlu0 %7419
        %v7421 = vadd.f32 %v7387, %v7388
        %v7422 = vadd.f32 %v7421, %v7389
        %v7423 = vadd.f32 %v7422, %v7390
        %v7424 = vadd.f32 %v7423, %v7391
        %v7425 = vadd.f32 %v7424, %v7392
        %v7426 = vadd.f32 %v7425, %v7393
        %v7427 = vadd.f32 %v7426, %v7394
        %7428 = vadd.xlane.f32.xlu0 %v7427
        %v7429 = vpop.xlane.xlu0 %7428
        %v7430 = vadd.f32 %v7395, %v7396
        %v7431 = vadd.f32 %v7430, %v7397
        %v7432 = vadd.f32 %v7431, %v7398
        %v7433 = vadd.f32 %v7432, %v7399
        %v7434 = vadd.f32 %v7433, %v7400
        %v7435 = vadd.f32 %v7434, %v7401
        %v7436 = vadd.f32 %v7435, %v7402
        %7437 = vadd.xlane.f32.xlu0 %v7436
        %v7438 = vpop.xlane.xlu0 %7437
        %v7439 = vlaneseq
        %v7440 = vshrl.u32 %v7439, 7
        %v7441 = vsub.s32 0, %v7440
        %v7442 = vrot.slane %v309, %v7441
        %v7443 = vadd.f32 %v7411, %v7442
        %v7444 = vadd.f32 %v7420, %v7442
        %v7445 = vadd.f32 %v7429, %v7442
        %v7446 = vadd.f32 %v7438, %v7442
        %vm7447 = vcmask 7168
        %7448 = vst.msk [vmem:[%s301] sm:$0xff] %vm7447, %v7443
        %7449 = vst.msk [vmem:[%s301 + $0x8] sm:$0xff] %vm7447, %v7444
        %7450 = vst.msk [vmem:[%s301 + $0x10] sm:$0xff] %vm7447, %v7445
        %7451 = vst.msk [vmem:[%s301 + $0x18] sm:$0xff] %vm7447, %v7446
        %s7452 = smul.u32 4, %s21
        %p7453 = scmp.lt.s32.totalorder %s7452, 7
        %s7454 = scalar_select %p7453, %s7452, 7
        %s7455 = smul.addr %s7454, 8
        %s7456 = scalar_lea.vmem %s5, %s7455
        // Predicated region
        $region61: #{tpu_custom_call.1} parent=39 // pred_check
          %p7457 = pneg %p149
        $region62: #{tpu_custom_call.1} parent=39 // pred_check_branch
          %7459 = sbr.rel (%p7457) target = $region64
        $region63: #{tpu_custom_call.1} parent=39 // pred_region
          %s7460 = smul.u32 4, %s21
        $region64: #{tpu_custom_call.1} parent=39 // pred_fallthru
          _
      $region40: #{tpu_custom_call.1} parent=5 // pred_fallthru
        _
      %p7461 = scmp.le.s32.totalorder 2, %s16
      // Predicated region
      $region65: #{tpu_custom_call.1} parent=5 // pred_check
        %p7462 = pneg %p7461
      $region66: #{tpu_custom_call.1} parent=5 // pred_check_branch
        %7464 = sbr.rel (%p7462) target = $region68
      $region67: #{tpu_custom_call.1} parent=5 // pred_region
        %s7465 = ssub.s32 %s16, 2
        // Predicated region
        $region69: #{tpu_custom_call.1} parent=67 // pred_check
          %p7466 = pneg %p155
        $region70: #{tpu_custom_call.1} parent=67 // pred_check_branch
          %7468 = sbr.rel (%p7466) target = $region72
        $region71: #{tpu_custom_call.1} parent=67 // pred_region
          %s7469 = smul.u32 4, %s22
          %p7470 = scmp.lt.s32.totalorder %s7469, 7
          %s7471 = scalar_select %p7470, %s7469, 7
          %s7472 = smul.addr %s7471, 8
          %s7473 = scalar_lea.vmem %s5, %s7472
        $region72: #{tpu_custom_call.1} parent=67 // pred_fallthru
          _
      $region68: #{tpu_custom_call.1} parent=5 // pred_fallthru
        _
    $region6: #{tpu_custom_call.1} parent=1 // loop_footer
      %s20 = sadd.s32 1, %s16
    $region7: #{tpu_custom_call.1} parent=1 // loop_footer_branch
      %15 = sbr.rel target = $region3
    $region8: #{tpu_custom_call.1} parent=1 // loop_exit
      _
    %7474 = vsyncpa [#allocation3], 1
    %s7475 = scalar_lea.sflag [#allocation3], 1
    %7476 = vsyncpa %s7475, 1
    %7477 = vsyncpa [#allocation5], 1
    %7478 = vsyncpa [#allocation8], 1

</llo_original>
